<compile_context>
chip_gen: v5e
topology: v5e:2x2
jax: 0.10.0
libtpu: 0.0.40
codegen_flags: <defaults>
</compile_context>

<pallas_src>
import jax
import jax.numpy as jnp
import numpy as np
from jax import lax
from jax.experimental import pallas as pl
from jax.experimental.pallas import tpu as pltpu

POOL_PATCHES = 3            # self.pool_patches = 3
D_HIDDEN = 512              # projector hidden width

_VMEM_LIMIT_BYTES = 64 << 20   # explicit scoped-VMEM limit (<= v7x physical 64 MiB)
_TILE_VMEM_BUDGET = 24 << 20   # budget for the streamed (double-buffered) per-row blocks


def _compiler_params():
    # batch axis is embarrassingly parallel -> shard across TensorCores on v7x.
    return pltpu.CompilerParams(
        dimension_semantics=("parallel",),
        vmem_limit_bytes=_VMEM_LIMIT_BYTES,
    )


def _pick_batch_tile(n, bytes_per_row, vmem_budget=_TILE_VMEM_BUDGET, max_tile=256):
    """Largest multiple-of-8 divisor of N, capped by a VMEM budget and max_tile,
    keeping the grid length >= 2 so ("parallel",) actually uses both TCs on v7x."""
    if n % 8:
        # TODO(synk): pad the batch to a multiple of 8 in a real deployment.
        return n
    cap = min(max_tile, max(8, vmem_budget // max(bytes_per_row, 1)))
    cap -= cap % 8
    best = 8
    for t in range(8, min(n, cap) + 1, 8):
        if n % t == 0 and n // t >= 2:
            best = t
    return best


# ---------------------------------------------------------------------------
# Fused kernel: saliency 1x1 conv + top-3 pooling  AND  avg-pool + projector
#   pooled_ref: (P, TN, S) f32      feats_ref: (TN, nf, S) bf16
#   sal_w (SMEM): (C, P) f32        sal_b (SMEM): (C,) f32
#   w1: (nf, 512) bf16  b1: (1, 512) f32   w2: (512, feat_dim) bf16  b2: (1, feat_dim) f32
#   outputs: sal (TN, C, S) f32, inst (TN, C) f32, proj (TN, feat_dim) f32
# ---------------------------------------------------------------------------
def _fused_kernel(pooled_ref, feats_ref, sal_w_ref, sal_b_ref,
                  w1_ref, b1_ref, w2_ref, b2_ref,
                  sal_ref, inst_ref, proj_ref):
    p, tn, s = pooled_ref.shape
    c_out = sal_ref.shape[1]

    # ---- saliency 1x1 conv (VPU scalar FMAs): pi outer, each slab loaded once ----
    accs = [jnp.zeros((tn, s), jnp.float32) for _ in range(c_out)]
    for pi in range(p):                                # static: P is small (e.g. 16)
        xp = pooled_ref[pi]                            # (TN, S) leading-axis index, no strided load
        for c in range(c_out):                         # static: num_classes is small
            accs[c] = accs[c] + sal_w_ref[c, pi] * xp

    # ---- per channel: add bias, stream store, top-3 mean over the lane axis S ----
    iota = lax.broadcasted_iota(jnp.int32, (tn, s), 1)
    inst_cols = []
    for c in range(c_out):
        acc = accs[c] + sal_b_ref[c]
        sal_ref[:, c, :] = acc                         # per-channel store, no stack relayout
        # iterative argmax == torch.topk for finite inputs (duplicates kept).
        # TODO(synk): NaN inputs would break the v==m mask; assumed finite encoder outputs.
        v = acc
        tot = jnp.zeros((tn, 1), jnp.float32)
        for _ in range(POOL_PATCHES):
            m = jnp.max(v, axis=1, keepdims=True)
            idx = jnp.min(jnp.where(v == m, iota, s), axis=1, keepdims=True)
            tot = tot + m
            v = jnp.where(iota == idx, -jnp.inf, v)
        inst_cols.append(tot * (1.0 / POOL_PATCHES))
    inst_ref[...] = jnp.concatenate(inst_cols, axis=1)

    # ---- fused adaptive_avg_pool + projector (MXU, bf16 operands, f32 accumulation) ----
    x = feats_ref[...].astype(jnp.float32)             # upcast: v5e VPU has no bf16
    feats = (jnp.sum(x, axis=2) * (1.0 / s)).astype(jnp.bfloat16)        # (TN, nf)
    z = jnp.dot(feats, w1_ref[...], preferred_element_type=jnp.float32) + b1_ref[...]
    z = jnp.maximum(z, 0.0).astype(jnp.bfloat16)
    # TODO(synk): nn.Dropout(0.2) is identity in eval mode; training-time RNG dropout omitted.
    proj = jnp.dot(z, w2_ref[...], preferred_element_type=jnp.float32) + b2_ref[...]
    nsq = jnp.sum(proj * proj, axis=1, keepdims=True)
    proj_ref[...] = proj * lax.rsqrt(jnp.maximum(nsq, 1e-24))            # F.normalize(dim=1)


def fused_post_encoder(pooled_pns, feats_nfs, kp):
    p, n, s = pooled_pns.shape
    nf = feats_nfs.shape[1]
    c = kp['sal_w'].shape[0]
    d_hidden = kp['p_w1_t'].shape[1]
    feat_dim = kp['p_w2_t'].shape[1]

    bytes_per_row = 2 * (nf * s * feats_nfs.dtype.itemsize          # feats stream (x2 buffers)
                         + p * s * 4                                # pooled stream
                         + c * s * 4 + c * 4 + feat_dim * 4)        # outputs
    tn = _pick_batch_tile(n, bytes_per_row)

    weight_specs = [
        # Resident weights: index_map -> block 0 every step, DMA'd once.
        # TODO(synk): pipeline_mode=pl.Buffered(1) would drop their duplicate buffer under
        #             v7x's 64 MiB VMEM once the real (large) weights are used.
        pl.BlockSpec((nf, d_hidden), lambda i: (0, 0)),
        pl.BlockSpec((1, d_hidden), lambda i: (0, 0)),
        pl.BlockSpec((d_hidden, feat_dim), lambda i: (0, 0)),
        pl.BlockSpec((1, feat_dim), lambda i: (0, 0)),
    ]

    sal, inst, proj = pl.pallas_call(
        _fused_kernel,
        out_shape=(jax.ShapeDtypeStruct((n, c, s), jnp.float32),
                   jax.ShapeDtypeStruct((n, c), jnp.float32),
                   jax.ShapeDtypeStruct((n, feat_dim), jnp.float32)),
        grid=(n // tn,),
        in_specs=[
            pl.BlockSpec((p, tn, s), lambda i: (0, i, 0)),               # pooled_feat (P,N,S)
            pl.BlockSpec((tn, nf, s), lambda i: (i, 0, 0)),              # feats_map (N,nf,S) bf16
            pl.BlockSpec(memory_space=pltpu.MemorySpace.SMEM),           # sal_w (C,P)
            pl.BlockSpec(memory_space=pltpu.MemorySpace.SMEM),           # sal_b (C,)
            *weight_specs,
        ],
        out_specs=(pl.BlockSpec((tn, c, s), lambda i: (i, 0, 0)),
                   pl.BlockSpec((tn, c), lambda i: (i, 0)),
                   pl.BlockSpec((tn, feat_dim), lambda i: (i, 0))),
        compiler_params=_compiler_params(),
    )(pooled_pns, feats_nfs, kp['sal_w'], kp['sal_b'],
      kp['p_w1_t'], kp['p_b1_r'], kp['p_w2_t'], kp['p_b2_r'])
    return sal, inst, proj


# ---------------------------------------------------------------------------
# Parameter preparation (once, outside jit): pre-transpose / pre-reshape / bf16-cast.
# ---------------------------------------------------------------------------
def prepare_params(p):
    q = dict(p)
    q['p_w1_t'] = jnp.asarray(p['p_w1'].T, jnp.bfloat16)     # (nf, 512)
    q['p_b1_r'] = jnp.asarray(p['p_b1'].reshape(1, -1), jnp.float32)
    q['p_w2_t'] = jnp.asarray(p['p_w2'].T, jnp.bfloat16)     # (512, feat_dim)
    q['p_b2_r'] = jnp.asarray(p['p_b2'].reshape(1, -1), jnp.float32)
    return q


# ---------------------------------------------------------------------------
# Forward pass (projector=True, pred_on=False path)
# ---------------------------------------------------------------------------
def forward(params, images):
    n, cin, h, w = images.shape
    ph, pw = h // 4, w // 4
    s = ph * pw

    # --- stand-in encoder (plain JAX glue) ---------------------------------
    # TODO(synk): real encoder is an external pretrained ResNet/EfficientNet; replaced by
    #             4x4 average pooling + deterministic 1x1 convolutions.
    pooled_img = images.reshape(n, cin, ph, 4, pw, 4).mean(axis=(3, 5))          # (N,Cin,ph,pw)
    # feats_map streamed to the kernel in bf16 (halves the dominant HBM read; the cast fuses
    # into the einsum epilogue — a real encoder would emit bf16 directly).
    feats_nfs = jnp.einsum('fc,nchw->nfhw', params['enc_w_feat'],
                           pooled_img).reshape(n, -1, s).astype(jnp.bfloat16)     # (N,nf,S)
    # pooled_feat emitted directly in (P, N, S): the kernel's per-pi access becomes a cheap
    # leading-axis index (free change — it's just the einsum output order).
    pooled_pns = jnp.einsum('pc,nchw->pnhw', params['enc_w_pool'],
                            pooled_img).reshape(params['enc_w_pool'].shape[0], n, s)

    sal_flat, inst, proj = fused_post_encoder(pooled_pns, feats_nfs, params)

    sal_maps = sal_flat.reshape(n, -1, ph, pw)                 # (N, C, ph, pw), contiguous
    instance_predictions = jnp.squeeze(inst)                   # matches torch .squeeze()
    # TODO(synk): bag_pred (Attention_Prediction_Aggregator, pred_on=True) not reproduced.
    return instance_predictions, proj, sal_maps


# ---------------------------------------------------------------------------
def _reference(params, images):
    """Pure-JAX f32 reference for correctness check."""
    n, cin, h, w = images.shape
    ph, pw = h // 4, w // 4
    pooled_img = images.reshape(n, cin, ph, 4, pw, 4).mean(axis=(3, 5))
    feats_map = jnp.einsum('fc,nchw->nfhw', params['enc_w_feat'], pooled_img)
    pooled_feat = jnp.einsum('pc,nchw->nphw', params['enc_w_pool'], pooled_img)

    feats = feats_map.mean(axis=(2, 3))
    sal = jnp.einsum('cp,nphw->nchw', params['sal_w'], pooled_feat) \
        + params['sal_b'][None, :, None, None]
    flat = sal.reshape(sal.shape[0], sal.shape[1], -1)
    top3 = jax.lax.top_k(flat, POOL_PATCHES)[0]
    inst = top3.mean(axis=2).squeeze()

    z = jnp.maximum(feats @ params['p_w1'].T + params['p_b1'], 0.0)
    p = z @ params['p_w2'].T + params['p_b2']
    p = p / jnp.maximum(jnp.linalg.norm(p, axis=1, keepdims=True), 1e-12)
    return inst, p, sal


if __name__ == "__main__":
    key = jax.random.PRNGKey(0)
    ks = jax.random.split(key, 6)

    # small shapes consistent with the module; N=64 -> TN=32, grid of 2 (>=2 for megacore)
    N, Cin, H, W = 64, 3, 32, 32
    nf, pooled_size, num_classes, feat_dim = 32, 16, 1, 128

    images = jax.random.normal(ks[0], (N, Cin, H, W), jnp.float32)
    raw = {
        'enc_w_feat': 0.1 * jax.random.normal(ks[1], (nf, Cin), jnp.float32),
        'enc_w_pool': 0.1 * jax.random.normal(ks[2], (pooled_size, Cin), jnp.float32),
        'sal_w':      0.1 * jax.random.normal(ks[3], (num_classes, pooled_size), jnp.float32),
        'sal_b':      jnp.full((num_classes,), 0.01, jnp.float32),
        'p_w1':       0.05 * jax.random.normal(ks[4], (D_HIDDEN, nf), jnp.float32),
        'p_b1':       jnp.full((D_HIDDEN,), 0.01, jnp.float32),
        'p_w2':       0.05 * jax.random.normal(ks[5], (feat_dim, D_HIDDEN), jnp.float32),
        'p_b2':       jnp.full((feat_dim,), 0.01, jnp.float32),
    }
    params = prepare_params(raw)

    inst, proj, sal = jax.jit(forward)(params, images)
    jax.block_until_ready((inst, proj, sal))

    inst_ref, proj_ref, sal_ref = _reference(raw, images)
    # saliency / instance path stays f32 -> tight tolerance
    np.testing.assert_allclose(np.asarray(inst), np.asarray(inst_ref), atol=1e-4, rtol=1e-4)
    np.testing.assert_allclose(np.asarray(sal), np.asarray(sal_ref), atol=1e-4, rtol=1e-4)
    # projector runs its matmuls with bf16 operands (f32 accumulation) -> looser tolerance
    np.testing.assert_allclose(np.asarray(proj), np.asarray(proj_ref), atol=2e-2, rtol=2e-2)

    print("KERNEL_OK")
</pallas_src>

<mosaic_0001>
module attributes {stable_mosaic.version = 11 : i64} {
  func.func @_fused_kernel(%arg0: i32, %arg1: memref<16x32x64xf32, #tpu.memory_space<vmem>>, %arg2: memref<32x32x64xbf16, #tpu.memory_space<vmem>>, %arg3: memref<1x16xf32, #tpu.memory_space<smem>>, %arg4: memref<1xf32, #tpu.memory_space<smem>>, %arg5: memref<32x512xbf16, #tpu.memory_space<vmem>>, %arg6: memref<1x512xf32, #tpu.memory_space<vmem>>, %arg7: memref<512x128xbf16, #tpu.memory_space<vmem>>, %arg8: memref<1x128xf32, #tpu.memory_space<vmem>>, %arg9: memref<32x1x64xf32, #tpu.memory_space<vmem>>, %arg10: memref<32x1xf32, #tpu.memory_space<vmem>>, %arg11: memref<32x128xf32, #tpu.memory_space<vmem>>) attributes {dimension_semantics = [#tpu.dimension_semantics<parallel>], iteration_bounds = array<i64: 2>, scalar_prefetch = 0 : i64, scratch_operands = 0 : i64, tpu.core_type = #tpu.core_type<tc>, window_params = [{transform_indices = @transform_0, window_bounds = array<i64: 16, 32, 64>}, {transform_indices = @transform_1, window_bounds = array<i64: 32, 32, 64>}, {transform_indices = @transform_2, window_bounds = array<i64: 1, 16>}, {transform_indices = @transform_3, window_bounds = array<i64: 1>}, {pipeline_mode = #tpu.pipeline_mode<synchronous>, transform_indices = @transform_4, window_bounds = array<i64: 32, 512>}, {pipeline_mode = #tpu.pipeline_mode<synchronous>, transform_indices = @transform_5, window_bounds = array<i64: 1, 512>}, {pipeline_mode = #tpu.pipeline_mode<synchronous>, transform_indices = @transform_6, window_bounds = array<i64: 512, 128>}, {pipeline_mode = #tpu.pipeline_mode<synchronous>, transform_indices = @transform_7, window_bounds = array<i64: 1, 128>}, {transform_indices = @transform_8, window_bounds = array<i64: 32, 1, 64>}, {transform_indices = @transform_9, window_bounds = array<i64: 32, 1>}, {transform_indices = @transform_10, window_bounds = array<i64: 32, 128>}]} {
    %cst = arith.constant 0.000000e+00 : f32
    %0 = vector.broadcast %cst : f32 to vector<32x64xf32>
    %c0 = arith.constant 0 : index
    %c0_0 = arith.constant 0 : index
    %c0_1 = arith.constant 0 : index
    %1 = vector.load %arg1[%c0, %c0_0, %c0_1] : memref<16x32x64xf32, #tpu.memory_space<vmem>>, vector<1x32x64xf32>
    %2 = vector.shape_cast %1 : vector<1x32x64xf32> to vector<32x64xf32>
    %c0_2 = arith.constant 0 : index
    %c0_3 = arith.constant 0 : index
    %3 = memref.load %arg3[%c0_2, %c0_3] : memref<1x16xf32, #tpu.memory_space<smem>>
    %4 = vector.broadcast %3 : f32 to vector<32x64xf32>
    %5 = arith.mulf %4, %2 : vector<32x64xf32>
    %6 = arith.addf %0, %5 : vector<32x64xf32>
    %c1 = arith.constant 1 : index
    %c0_4 = arith.constant 0 : index
    %c0_5 = arith.constant 0 : index
    %7 = vector.load %arg1[%c1, %c0_4, %c0_5] : memref<16x32x64xf32, #tpu.memory_space<vmem>>, vector<1x32x64xf32>
    %8 = vector.shape_cast %7 : vector<1x32x64xf32> to vector<32x64xf32>
    %c0_6 = arith.constant 0 : index
    %c1_7 = arith.constant 1 : index
    %9 = memref.load %arg3[%c0_6, %c1_7] : memref<1x16xf32, #tpu.memory_space<smem>>
    %10 = vector.broadcast %9 : f32 to vector<32x64xf32>
    %11 = arith.mulf %10, %8 : vector<32x64xf32>
    %12 = arith.addf %6, %11 : vector<32x64xf32>
    %c2 = arith.constant 2 : index
    %c0_8 = arith.constant 0 : index
    %c0_9 = arith.constant 0 : index
    %13 = vector.load %arg1[%c2, %c0_8, %c0_9] : memref<16x32x64xf32, #tpu.memory_space<vmem>>, vector<1x32x64xf32>
    %14 = vector.shape_cast %13 : vector<1x32x64xf32> to vector<32x64xf32>
    %c0_10 = arith.constant 0 : index
    %c2_11 = arith.constant 2 : index
    %15 = memref.load %arg3[%c0_10, %c2_11] : memref<1x16xf32, #tpu.memory_space<smem>>
    %16 = vector.broadcast %15 : f32 to vector<32x64xf32>
    %17 = arith.mulf %16, %14 : vector<32x64xf32>
    %18 = arith.addf %12, %17 : vector<32x64xf32>
    %c3 = arith.constant 3 : index
    %c0_12 = arith.constant 0 : index
    %c0_13 = arith.constant 0 : index
    %19 = vector.load %arg1[%c3, %c0_12, %c0_13] : memref<16x32x64xf32, #tpu.memory_space<vmem>>, vector<1x32x64xf32>
    %20 = vector.shape_cast %19 : vector<1x32x64xf32> to vector<32x64xf32>
    %c0_14 = arith.constant 0 : index
    %c3_15 = arith.constant 3 : index
    %21 = memref.load %arg3[%c0_14, %c3_15] : memref<1x16xf32, #tpu.memory_space<smem>>
    %22 = vector.broadcast %21 : f32 to vector<32x64xf32>
    %23 = arith.mulf %22, %20 : vector<32x64xf32>
    %24 = arith.addf %18, %23 : vector<32x64xf32>
    %c4 = arith.constant 4 : index
    %c0_16 = arith.constant 0 : index
    %c0_17 = arith.constant 0 : index
    %25 = vector.load %arg1[%c4, %c0_16, %c0_17] : memref<16x32x64xf32, #tpu.memory_space<vmem>>, vector<1x32x64xf32>
    %26 = vector.shape_cast %25 : vector<1x32x64xf32> to vector<32x64xf32>
    %c0_18 = arith.constant 0 : index
    %c4_19 = arith.constant 4 : index
    %27 = memref.load %arg3[%c0_18, %c4_19] : memref<1x16xf32, #tpu.memory_space<smem>>
    %28 = vector.broadcast %27 : f32 to vector<32x64xf32>
    %29 = arith.mulf %28, %26 : vector<32x64xf32>
    %30 = arith.addf %24, %29 : vector<32x64xf32>
    %c5 = arith.constant 5 : index
    %c0_20 = arith.constant 0 : index
    %c0_21 = arith.constant 0 : index
    %31 = vector.load %arg1[%c5, %c0_20, %c0_21] : memref<16x32x64xf32, #tpu.memory_space<vmem>>, vector<1x32x64xf32>
    %32 = vector.shape_cast %31 : vector<1x32x64xf32> to vector<32x64xf32>
    %c0_22 = arith.constant 0 : index
    %c5_23 = arith.constant 5 : index
    %33 = memref.load %arg3[%c0_22, %c5_23] : memref<1x16xf32, #tpu.memory_space<smem>>
    %34 = vector.broadcast %33 : f32 to vector<32x64xf32>
    %35 = arith.mulf %34, %32 : vector<32x64xf32>
    %36 = arith.addf %30, %35 : vector<32x64xf32>
    %c6 = arith.constant 6 : index
    %c0_24 = arith.constant 0 : index
    %c0_25 = arith.constant 0 : index
    %37 = vector.load %arg1[%c6, %c0_24, %c0_25] : memref<16x32x64xf32, #tpu.memory_space<vmem>>, vector<1x32x64xf32>
    %38 = vector.shape_cast %37 : vector<1x32x64xf32> to vector<32x64xf32>
    %c0_26 = arith.constant 0 : index
    %c6_27 = arith.constant 6 : index
    %39 = memref.load %arg3[%c0_26, %c6_27] : memref<1x16xf32, #tpu.memory_space<smem>>
    %40 = vector.broadcast %39 : f32 to vector<32x64xf32>
    %41 = arith.mulf %40, %38 : vector<32x64xf32>
    %42 = arith.addf %36, %41 : vector<32x64xf32>
    %c7 = arith.constant 7 : index
    %c0_28 = arith.constant 0 : index
    %c0_29 = arith.constant 0 : index
    %43 = vector.load %arg1[%c7, %c0_28, %c0_29] : memref<16x32x64xf32, #tpu.memory_space<vmem>>, vector<1x32x64xf32>
    %44 = vector.shape_cast %43 : vector<1x32x64xf32> to vector<32x64xf32>
    %c0_30 = arith.constant 0 : index
    %c7_31 = arith.constant 7 : index
    %45 = memref.load %arg3[%c0_30, %c7_31] : memref<1x16xf32, #tpu.memory_space<smem>>
    %46 = vector.broadcast %45 : f32 to vector<32x64xf32>
    %47 = arith.mulf %46, %44 : vector<32x64xf32>
    %48 = arith.addf %42, %47 : vector<32x64xf32>
    %c8 = arith.constant 8 : index
    %c0_32 = arith.constant 0 : index
    %c0_33 = arith.constant 0 : index
    %49 = vector.load %arg1[%c8, %c0_32, %c0_33] : memref<16x32x64xf32, #tpu.memory_space<vmem>>, vector<1x32x64xf32>
    %50 = vector.shape_cast %49 : vector<1x32x64xf32> to vector<32x64xf32>
    %c0_34 = arith.constant 0 : index
    %c8_35 = arith.constant 8 : index
    %51 = memref.load %arg3[%c0_34, %c8_35] : memref<1x16xf32, #tpu.memory_space<smem>>
    %52 = vector.broadcast %51 : f32 to vector<32x64xf32>
    %53 = arith.mulf %52, %50 : vector<32x64xf32>
    %54 = arith.addf %48, %53 : vector<32x64xf32>
    %c9 = arith.constant 9 : index
    %c0_36 = arith.constant 0 : index
    %c0_37 = arith.constant 0 : index
    %55 = vector.load %arg1[%c9, %c0_36, %c0_37] : memref<16x32x64xf32, #tpu.memory_space<vmem>>, vector<1x32x64xf32>
    %56 = vector.shape_cast %55 : vector<1x32x64xf32> to vector<32x64xf32>
    %c0_38 = arith.constant 0 : index
    %c9_39 = arith.constant 9 : index
    %57 = memref.load %arg3[%c0_38, %c9_39] : memref<1x16xf32, #tpu.memory_space<smem>>
    %58 = vector.broadcast %57 : f32 to vector<32x64xf32>
    %59 = arith.mulf %58, %56 : vector<32x64xf32>
    %60 = arith.addf %54, %59 : vector<32x64xf32>
    %c10 = arith.constant 10 : index
    %c0_40 = arith.constant 0 : index
    %c0_41 = arith.constant 0 : index
    %61 = vector.load %arg1[%c10, %c0_40, %c0_41] : memref<16x32x64xf32, #tpu.memory_space<vmem>>, vector<1x32x64xf32>
    %62 = vector.shape_cast %61 : vector<1x32x64xf32> to vector<32x64xf32>
    %c0_42 = arith.constant 0 : index
    %c10_43 = arith.constant 10 : index
    %63 = memref.load %arg3[%c0_42, %c10_43] : memref<1x16xf32, #tpu.memory_space<smem>>
    %64 = vector.broadcast %63 : f32 to vector<32x64xf32>
    %65 = arith.mulf %64, %62 : vector<32x64xf32>
    %66 = arith.addf %60, %65 : vector<32x64xf32>
    %c11 = arith.constant 11 : index
    %c0_44 = arith.constant 0 : index
    %c0_45 = arith.constant 0 : index
    %67 = vector.load %arg1[%c11, %c0_44, %c0_45] : memref<16x32x64xf32, #tpu.memory_space<vmem>>, vector<1x32x64xf32>
    %68 = vector.shape_cast %67 : vector<1x32x64xf32> to vector<32x64xf32>
    %c0_46 = arith.constant 0 : index
    %c11_47 = arith.constant 11 : index
    %69 = memref.load %arg3[%c0_46, %c11_47] : memref<1x16xf32, #tpu.memory_space<smem>>
    %70 = vector.broadcast %69 : f32 to vector<32x64xf32>
    %71 = arith.mulf %70, %68 : vector<32x64xf32>
    %72 = arith.addf %66, %71 : vector<32x64xf32>
    %c12 = arith.constant 12 : index
    %c0_48 = arith.constant 0 : index
    %c0_49 = arith.constant 0 : index
    %73 = vector.load %arg1[%c12, %c0_48, %c0_49] : memref<16x32x64xf32, #tpu.memory_space<vmem>>, vector<1x32x64xf32>
    %74 = vector.shape_cast %73 : vector<1x32x64xf32> to vector<32x64xf32>
    %c0_50 = arith.constant 0 : index
    %c12_51 = arith.constant 12 : index
    %75 = memref.load %arg3[%c0_50, %c12_51] : memref<1x16xf32, #tpu.memory_space<smem>>
    %76 = vector.broadcast %75 : f32 to vector<32x64xf32>
    %77 = arith.mulf %76, %74 : vector<32x64xf32>
    %78 = arith.addf %72, %77 : vector<32x64xf32>
    %c13 = arith.constant 13 : index
    %c0_52 = arith.constant 0 : index
    %c0_53 = arith.constant 0 : index
    %79 = vector.load %arg1[%c13, %c0_52, %c0_53] : memref<16x32x64xf32, #tpu.memory_space<vmem>>, vector<1x32x64xf32>
    %80 = vector.shape_cast %79 : vector<1x32x64xf32> to vector<32x64xf32>
    %c0_54 = arith.constant 0 : index
    %c13_55 = arith.constant 13 : index
    %81 = memref.load %arg3[%c0_54, %c13_55] : memref<1x16xf32, #tpu.memory_space<smem>>
    %82 = vector.broadcast %81 : f32 to vector<32x64xf32>
    %83 = arith.mulf %82, %80 : vector<32x64xf32>
    %84 = arith.addf %78, %83 : vector<32x64xf32>
    %c14 = arith.constant 14 : index
    %c0_56 = arith.constant 0 : index
    %c0_57 = arith.constant 0 : index
    %85 = vector.load %arg1[%c14, %c0_56, %c0_57] : memref<16x32x64xf32, #tpu.memory_space<vmem>>, vector<1x32x64xf32>
    %86 = vector.shape_cast %85 : vector<1x32x64xf32> to vector<32x64xf32>
    %c0_58 = arith.constant 0 : index
    %c14_59 = arith.constant 14 : index
    %87 = memref.load %arg3[%c0_58, %c14_59] : memref<1x16xf32, #tpu.memory_space<smem>>
    %88 = vector.broadcast %87 : f32 to vector<32x64xf32>
    %89 = arith.mulf %88, %86 : vector<32x64xf32>
    %90 = arith.addf %84, %89 : vector<32x64xf32>
    %c15 = arith.constant 15 : index
    %c0_60 = arith.constant 0 : index
    %c0_61 = arith.constant 0 : index
    %91 = vector.load %arg1[%c15, %c0_60, %c0_61] : memref<16x32x64xf32, #tpu.memory_space<vmem>>, vector<1x32x64xf32>
    %92 = vector.shape_cast %91 : vector<1x32x64xf32> to vector<32x64xf32>
    %c0_62 = arith.constant 0 : index
    %c15_63 = arith.constant 15 : index
    %93 = memref.load %arg3[%c0_62, %c15_63] : memref<1x16xf32, #tpu.memory_space<smem>>
    %94 = vector.broadcast %93 : f32 to vector<32x64xf32>
    %95 = arith.mulf %94, %92 : vector<32x64xf32>
    %96 = arith.addf %90, %95 : vector<32x64xf32>
    %97 = tpu.iota {dimensions = array<i32: 1>} : vector<32x64xi32>
    %c0_64 = arith.constant 0 : index
    %98 = memref.load %arg4[%c0_64] : memref<1xf32, #tpu.memory_space<smem>>
    %99 = vector.broadcast %98 : f32 to vector<32x64xf32>
    %100 = arith.addf %96, %99 : vector<32x64xf32>
    %c0_65 = arith.constant 0 : index
    %c0_66 = arith.constant 0 : index
    %c0_67 = arith.constant 0 : index
    %101 = vector.load %arg9[%c0_65, %c0_66, %c0_67] : memref<32x1x64xf32, #tpu.memory_space<vmem>>, vector<32x1x64xf32>
    %102 = vector.shape_cast %101 : vector<32x1x64xf32> to vector<32x64xf32>
    %103 = vector.shape_cast %100 : vector<32x64xf32> to vector<32x1x64xf32>
    tpu.vector_store %arg9[%c0_65, %c0_66, %c0_67], %103 {strides = array<i32>} : memref<32x1x64xf32, #tpu.memory_space<vmem>>, vector<32x1x64xf32>,
    %cst_68 = arith.constant 0.000000e+00 : f32
    %104 = vector.broadcast %cst_68 : f32 to vector<32x1xf32>
    %cst_69 = arith.constant dense<0xFF800000> : vector<32xf32>
    %105 = vector.multi_reduction <maximumf>, %100, %cst_69 [1] : vector<32x64xf32> to vector<32xf32>
    %106 = vector.shape_cast %105 : vector<32xf32> to vector<32x1xf32>
    %107 = vector.broadcast %106 : vector<32x1xf32> to vector<32x64xf32>
    %108 = arith.cmpf oeq, %100, %107 : vector<32x64xf32>
    %c64_i32 = arith.constant 64 : i32
    %109 = vector.broadcast %c64_i32 : i32 to vector<32x64xi32>
    %110 = arith.select %108, %97, %109 : vector<32x64xi1>, vector<32x64xi32>
    %cst_70 = arith.constant dense<2147483647> : vector<32xi32>
    %111 = vector.multi_reduction <minsi>, %110, %cst_70 [1] : vector<32x64xi32> to vector<32xi32>
    %112 = vector.shape_cast %111 : vector<32xi32> to vector<32x1xi32>
    %113 = arith.addf %104, %106 : vector<32x1xf32>
    %114 = vector.broadcast %112 : vector<32x1xi32> to vector<32x64xi32>
    %115 = arith.cmpi eq, %97, %114 : vector<32x64xi32>
    %cst_71 = arith.constant 0xFF800000 : f32
    %116 = vector.broadcast %cst_71 : f32 to vector<32x64xf32>
    %117 = arith.select %115, %116, %100 : vector<32x64xi1>, vector<32x64xf32>
    %cst_72 = arith.constant dense<0xFF800000> : vector<32xf32>
    %118 = vector.multi_reduction <maximumf>, %117, %cst_72 [1] : vector<32x64xf32> to vector<32xf32>
    %119 = vector.shape_cast %118 : vector<32xf32> to vector<32x1xf32>
    %120 = vector.broadcast %119 : vector<32x1xf32> to vector<32x64xf32>
    %121 = arith.cmpf oeq, %117, %120 : vector<32x64xf32>
    %c64_i32_73 = arith.constant 64 : i32
    %122 = vector.broadcast %c64_i32_73 : i32 to vector<32x64xi32>
    %123 = arith.select %121, %97, %122 : vector<32x64xi1>, vector<32x64xi32>
    %cst_74 = arith.constant dense<2147483647> : vector<32xi32>
    %124 = vector.multi_reduction <minsi>, %123, %cst_74 [1] : vector<32x64xi32> to vector<32xi32>
    %125 = vector.shape_cast %124 : vector<32xi32> to vector<32x1xi32>
    %126 = arith.addf %113, %119 : vector<32x1xf32>
    %127 = vector.broadcast %125 : vector<32x1xi32> to vector<32x64xi32>
    %128 = arith.cmpi eq, %97, %127 : vector<32x64xi32>
    %cst_75 = arith.constant 0xFF800000 : f32
    %129 = vector.broadcast %cst_75 : f32 to vector<32x64xf32>
    %130 = arith.select %128, %129, %117 : vector<32x64xi1>, vector<32x64xf32>
    %cst_76 = arith.constant dense<0xFF800000> : vector<32xf32>
    %131 = vector.multi_reduction <maximumf>, %130, %cst_76 [1] : vector<32x64xf32> to vector<32xf32>
    %132 = vector.shape_cast %131 : vector<32xf32> to vector<32x1xf32>
    %133 = arith.addf %126, %132 : vector<32x1xf32>
    %cst_77 = arith.constant 0.333333343 : f32
    %134 = vector.broadcast %cst_77 : f32 to vector<32x1xf32>
    %135 = arith.mulf %133, %134 : vector<32x1xf32>
    %c0_78 = arith.constant 0 : index
    %c0_79 = arith.constant 0 : index
    %136 = vector.load %arg10[%c0_78, %c0_79] : memref<32x1xf32, #tpu.memory_space<vmem>>, vector<32x1xf32>
    tpu.vector_store %arg10[%c0_78, %c0_79], %135 {strides = array<i32>} : memref<32x1xf32, #tpu.memory_space<vmem>>, vector<32x1xf32>,
    %c0_80 = arith.constant 0 : index
    %c0_81 = arith.constant 0 : index
    %c0_82 = arith.constant 0 : index
    %137 = vector.load %arg2[%c0_80, %c0_81, %c0_82] : memref<32x32x64xbf16, #tpu.memory_space<vmem>>, vector<32x32x64xbf16>
    %138 = arith.extf %137 : vector<32x32x64xbf16> to vector<32x32x64xf32>
    %cst_83 = arith.constant dense<0.000000e+00> : vector<32x32xf32>
    %139 = vector.multi_reduction <add>, %138, %cst_83 [2] : vector<32x32x64xf32> to vector<32x32xf32>
    %cst_84 = arith.constant 1.562500e-02 : f32
    %140 = vector.broadcast %cst_84 : f32 to vector<32x32xf32>
    %141 = arith.mulf %139, %140 : vector<32x32xf32>
    %142 = arith.truncf %141 : vector<32x32xf32> to vector<32x32xbf16>
    %c0_85 = arith.constant 0 : index
    %c0_86 = arith.constant 0 : index
    %143 = vector.load %arg5[%c0_85, %c0_86] : memref<32x512xbf16, #tpu.memory_space<vmem>>, vector<32x512xbf16>
    %cst_87 = arith.constant dense<0.000000e+00> : vector<32x512xf32>
    %144 = tpu.matmul %142, %143, %cst_87 {dimension_numbers = #tpu.dot_dimension_numbers<[1], [0], [0], [1], [0, 0, 1, 1], [], []>} : vector<32x32xbf16>, vector<32x512xbf16>, vector<32x512xf32> -> vector<32x512xf32>
    %c0_88 = arith.constant 0 : index
    %c0_89 = arith.constant 0 : index
    %145 = vector.load %arg6[%c0_88, %c0_89] : memref<1x512xf32, #tpu.memory_space<vmem>>, vector<1x512xf32>
    %146 = vector.broadcast %145 : vector<1x512xf32> to vector<32x512xf32>
    %147 = arith.addf %144, %146 : vector<32x512xf32>
    %cst_90 = arith.constant 0.000000e+00 : f32
    %148 = vector.broadcast %cst_90 : f32 to vector<32x512xf32>
    %149 = arith.maximumf %147, %148 : vector<32x512xf32>
    %150 = arith.truncf %149 : vector<32x512xf32> to vector<32x512xbf16>
    %c0_91 = arith.constant 0 : index
    %c0_92 = arith.constant 0 : index
    %151 = vector.load %arg7[%c0_91, %c0_92] : memref<512x128xbf16, #tpu.memory_space<vmem>>, vector<512x128xbf16>
    %cst_93 = arith.constant dense<0.000000e+00> : vector<32x128xf32>
    %152 = tpu.matmul %150, %151, %cst_93 {dimension_numbers = #tpu.dot_dimension_numbers<[1], [0], [0], [1], [0, 0, 1, 1], [], []>} : vector<32x512xbf16>, vector<512x128xbf16>, vector<32x128xf32> -> vector<32x128xf32>
    %c0_94 = arith.constant 0 : index
    %c0_95 = arith.constant 0 : index
    %153 = vector.load %arg8[%c0_94, %c0_95] : memref<1x128xf32, #tpu.memory_space<vmem>>, vector<1x128xf32>
    %154 = vector.broadcast %153 : vector<1x128xf32> to vector<32x128xf32>
    %155 = arith.addf %152, %154 : vector<32x128xf32>
    %156 = arith.mulf %155, %155 : vector<32x128xf32>
    %cst_96 = arith.constant dense<0.000000e+00> : vector<32xf32>
    %157 = vector.multi_reduction <add>, %156, %cst_96 [1] : vector<32x128xf32> to vector<32xf32>
    %158 = vector.shape_cast %157 : vector<32xf32> to vector<32x1xf32>
    %cst_97 = arith.constant 1.000000e-24 : f32
    %159 = vector.broadcast %cst_97 : f32 to vector<32x1xf32>
    %160 = arith.maximumf %158, %159 : vector<32x1xf32>
    %161 = math.rsqrt %160 : vector<32x1xf32>
    %162 = vector.broadcast %161 : vector<32x1xf32> to vector<32x128xf32>
    %163 = arith.mulf %155, %162 : vector<32x128xf32>
    %c0_98 = arith.constant 0 : index
    %c0_99 = arith.constant 0 : index
    %164 = vector.load %arg11[%c0_98, %c0_99] : memref<32x128xf32, #tpu.memory_space<vmem>>, vector<32x128xf32>
    tpu.vector_store %arg11[%c0_98, %c0_99], %163 {strides = array<i32>} : memref<32x128xf32, #tpu.memory_space<vmem>>, vector<32x128xf32>,
    return
  }
  func.func @transform_0(%arg0: i32) -> (i32, i32, i32) {
    %c0_i32 = arith.constant 0 : i32
    %c0_i32_0 = arith.constant 0 : i32
    %c0_i32_1 = arith.constant 0 : i32
    return %c0_i32, %arg0, %c0_i32_0 : i32, i32, i32
  }
  func.func @transform_1(%arg0: i32) -> (i32, i32, i32) {
    %c0_i32 = arith.constant 0 : i32
    %c0_i32_0 = arith.constant 0 : i32
    %c0_i32_1 = arith.constant 0 : i32
    return %arg0, %c0_i32, %c0_i32_0 : i32, i32, i32
  }
  func.func @transform_2(%arg0: i32) -> (i32, i32) {
    %c0_i32 = arith.constant 0 : i32
    %c0_i32_0 = arith.constant 0 : i32
    %c0_i32_1 = arith.constant 0 : i32
    return %c0_i32, %c0_i32_0 : i32, i32
  }
  func.func @transform_3(%arg0: i32) -> i32 {
    %c0_i32 = arith.constant 0 : i32
    %c0_i32_0 = arith.constant 0 : i32
    return %c0_i32 : i32
  }
  func.func @transform_4(%arg0: i32) -> (i32, i32) {
    %c0_i32 = arith.constant 0 : i32
    %c0_i32_0 = arith.constant 0 : i32
    %c0_i32_1 = arith.constant 0 : i32
    return %c0_i32, %c0_i32_0 : i32, i32
  }
  func.func @transform_5(%arg0: i32) -> (i32, i32) {
    %c0_i32 = arith.constant 0 : i32
    %c0_i32_0 = arith.constant 0 : i32
    %c0_i32_1 = arith.constant 0 : i32
    return %c0_i32, %c0_i32_0 : i32, i32
  }
  func.func @transform_6(%arg0: i32) -> (i32, i32) {
    %c0_i32 = arith.constant 0 : i32
    %c0_i32_0 = arith.constant 0 : i32
    %c0_i32_1 = arith.constant 0 : i32
    return %c0_i32, %c0_i32_0 : i32, i32
  }
  func.func @transform_7(%arg0: i32) -> (i32, i32) {
    %c0_i32 = arith.constant 0 : i32
    %c0_i32_0 = arith.constant 0 : i32
    %c0_i32_1 = arith.constant 0 : i32
    return %c0_i32, %c0_i32_0 : i32, i32
  }
  func.func @transform_8(%arg0: i32) -> (i32, i32, i32) {
    %c0_i32 = arith.constant 0 : i32
    %c0_i32_0 = arith.constant 0 : i32
    %c0_i32_1 = arith.constant 0 : i32
    return %arg0, %c0_i32, %c0_i32_0 : i32, i32, i32
  }
  func.func @transform_9(%arg0: i32) -> (i32, i32) {
    %c0_i32 = arith.constant 0 : i32
    %c0_i32_0 = arith.constant 0 : i32
    return %arg0, %c0_i32 : i32, i32
  }
  func.func @transform_10(%arg0: i32) -> (i32, i32) {
    %c0_i32 = arith.constant 0 : i32
    %c0_i32_0 = arith.constant 0 : i32
    return %arg0, %c0_i32 : i32, i32
  }
}

</mosaic_0001>

<llo_original>
// kernel: forward.1
$region0: #{forward.1}
  #allocation0 [shape = 'u32[]', space=smem, size = 0x4, offset = 0x4, fixed_abs, tag = 'smem constant byte address 0x4 - core index']
  #allocation1 [shape = 'u32[72,128]{1,0:T(1,128)}', space=vmem, size = 0x9000, scoped, tag = 'internal scratch']
  #allocation2 [shape = 'f32[1]{0:T(128)S(6)}', space=smem, size = 0x200, scoped, tag = 'scoped memory for forward.1']
  %s0 = inlined_call_operand.vmem [shape: f32[16,64,64], index: 0, kind: input, shape index: {}]
  %s1 = inlined_call_operand.vmem [shape: bf16[64,32,64], index: 1, kind: input, shape index: {}]
  %s2 = inlined_call_operand.vmem [shape: f32[1,16], index: 2, kind: input, shape index: {}]
  %s3 = inlined_call_operand.<no memory space> [shape: f32[1], index: 3, kind: input, shape index: {}]
  %s4 = inlined_call_operand.vmem [shape: bf16[32,512], index: 4, kind: input, shape index: {}]
  %s5 = inlined_call_operand.vmem [shape: f32[1,512], index: 5, kind: input, shape index: {}]
  %s6 = inlined_call_operand.vmem [shape: bf16[512,128], index: 6, kind: input, shape index: {}]
  %s7 = inlined_call_operand.vmem [shape: f32[1,128], index: 7, kind: input, shape index: {}]
  %s8 = inlined_call_operand.vmem [shape: f32[64,1,64], index: 8, kind: output, shape index: {0}]
  %s9 = inlined_call_operand.vmem [shape: f32[64,1], index: 9, kind: output, shape index: {1}]
  %s10 = inlined_call_operand.hbm [shape: f32[64,128], index: 10, kind: output, shape index: {2}]
  %11 = xla_tuple %s8, %s9, %s10
  %s12 = sld [smem:[#allocation0]]
  $region123: #{forward.1} parent=0
    _
  %s14 = ssub.s32 1, %s12
  %s15 = scalar_select 0, %s14, %s12
  %16 = sst [smem:[#allocation2]] %s3
  $region1: #{forward.1} parent=0
    #allocation3 [shape = 'u8[524288]{0}', space=vmem, size = 0x80000, scoped, tag = 'input window, operand 0']
    #allocation4 [shape = 'u8[512]{0}', space=smem, size = 0x200, scoped, tag = 'input window, operand 2, single buffered']
    #allocation5 [shape = 's32[2]{0}', space=sflag, size = 0x8, scoped, tag = 'scoped memory for forward.1']
    #allocation6 [shape = 's32[2]{0}', space=sflag, size = 0x8, scoped, tag = 'scoped memory for forward.1']
    #allocation7 [shape = 'u8[32768]{0}', space=vmem, size = 0x8000, scoped, tag = 'output window, operand 2']
    %17 = vsyncpa [#allocation6], 0
    %18 = vsyncpa [#allocation5], 0
    %s19 = scalar_lea.sflag [#allocation5], 1
    %20 = vsyncpa %s19, 0
    loop: start=0, step=1, limit=4
    $region2: #{forward.1} parent=1 // loop_pre_header
      _
    $region3: #{forward.1} parent=1 // loop_header
      %s22 = sphi 0, %s26
      %p23 = scmp.ge.s32.totalorder %s22, 4
      %s32 = sphi 0, %s34
      %s35 = sphi 0, %s32
      %s36 = sphi 0, %s35
      %s52 = sphi 0, %s36
      %s58 = sphi 0, %s60
      %s61 = sphi 0, %s58
      %s62 = sphi 0, %s61
      %s78 = sphi 0, %s62
      %s82 = sphi 0, %s82
      %s84 = sphi 0, %s82
      %s85 = sphi 0, %s84
      %s99 = sphi 0, %s85
      %s103 = sphi 0, %s103
      %s105 = sphi 0, %s103
      %s106 = sphi 0, %s105
      %s120 = sphi 0, %s106
      %s124 = sphi 0, %s124
      %s126 = sphi 0, %s124
      %s127 = sphi 0, %s126
      %s141 = sphi 0, %s127
      %s145 = sphi 0, %s145
      %s147 = sphi 0, %s145
      %s148 = sphi 0, %s147
      %s162 = sphi 0, %s148
      %s166 = sphi 0, %s166
      %s168 = sphi 0, %s166
      %s169 = sphi 0, %s168
      %s183 = sphi 0, %s169
      %s187 = sphi 0, %s187
      %s189 = sphi 0, %s187
      %s190 = sphi 0, %s189
      %s204 = sphi 0, %s190
      %s210 = sphi 0, %s212
      %s213 = sphi 0, %s210
      %s214 = sphi 0, %s213
      %s230 = sphi 0, %s214
      %s236 = sphi 0, %s238
      %s239 = sphi 0, %s236
      %s240 = sphi 0, %s239
      %s256 = sphi 0, %s240
      %s262 = sphi 0, %s264
      %s265 = sphi 0, %s262
      %s266 = sphi 0, %s265
      %s282 = sphi 0, %s266
    $region4: #{forward.1} parent=1 // loop_header_branch
      %25 = sbr.rel (%p23) target = $region8
    $region5: #{forward.1} parent=1 // loop_body
      %s27 = ssub.s32 %s22, 1
      %s28 = ssub.s32 %s22, 2
      %s29 = sadd.s32 %s22, 1
      %s30 = ssub.s32 %s22, %s29
      %p31 = scmp.eq.s32.totalorder %s30, 0
      %s33 = sadd.s32 %s32, 1
      %s34 = scalar_select %p31, %s32, %s33
      %p37 = pneg %p31
      %p38 = scmp.eq.s32.totalorder %s22, 1
      %p39 = por %p37, %p38
      %p40 = scmp.ne.s32.totalorder %s32, %s35
      %p41 = scmp.eq.s32.totalorder %s22, 0
      %p42 = por %p40, %p41
      %p43 = scmp.ne.s32.totalorder %s32, %s35
      %p44 = scmp.eq.s32.totalorder %s27, 1
      %p45 = por %p43, %p44
      %p46 = scmp.ne.s32.totalorder %s35, %s36
      %p47 = scmp.eq.s32.totalorder %s27, 0
      %p48 = por %p46, %p47
      %p49 = scmp.ne.s32.totalorder %s35, %s36
      %p50 = scmp.eq.s32.totalorder %s28, 1
      %p51 = por %p49, %p50
      %p53 = scmp.ne.s32.totalorder %s36, %s52
      %p54 = scmp.eq.s32.totalorder %s28, 0
      %p55 = por %p53, %p54
      %s56 = ssub.s32 %s22, %s29
      %p57 = scmp.eq.s32.totalorder %s56, 0
      %s59 = sadd.s32 %s58, 1
      %s60 = scalar_select %p57, %s58, %s59
      %p63 = pneg %p57
      %p64 = scmp.eq.s32.totalorder %s22, 1
      %p65 = por %p63, %p64
      %p66 = scmp.ne.s32.totalorder %s58, %s61
      %p67 = scmp.eq.s32.totalorder %s22, 0
      %p68 = por %p66, %p67
      %p69 = scmp.ne.s32.totalorder %s58, %s61
      %p70 = scmp.eq.s32.totalorder %s27, 1
      %p71 = por %p69, %p70
      %p72 = scmp.ne.s32.totalorder %s61, %s62
      %p73 = scmp.eq.s32.totalorder %s27, 0
      %p74 = por %p72, %p73
      %p75 = scmp.ne.s32.totalorder %s61, %s62
      %p76 = scmp.eq.s32.totalorder %s28, 1
      %p77 = por %p75, %p76
      %p79 = scmp.ne.s32.totalorder %s62, %s78
      %p80 = scmp.eq.s32.totalorder %s28, 0
      %p81 = por %p79, %p80
      %s83 = sadd.s32 %s82, 1
      %p86 = scmp.eq.s32.totalorder %s22, 1
      %p87 = scmp.ne.s32.totalorder %s82, %s84
      %p88 = scmp.eq.s32.totalorder %s22, 0
      %p89 = por %p87, %p88
      %p90 = scmp.ne.s32.totalorder %s82, %s84
      %p91 = scmp.eq.s32.totalorder %s27, 1
      %p92 = por %p90, %p91
      %p93 = scmp.ne.s32.totalorder %s84, %s85
      %p94 = scmp.eq.s32.totalorder %s27, 0
      %p95 = por %p93, %p94
      %p96 = scmp.ne.s32.totalorder %s84, %s85
      %p97 = scmp.eq.s32.totalorder %s28, 1
      %p98 = por %p96, %p97
      %p100 = scmp.ne.s32.totalorder %s85, %s99
      %p101 = scmp.eq.s32.totalorder %s28, 0
      %p102 = por %p100, %p101
      %s104 = sadd.s32 %s103, 1
      %p107 = scmp.eq.s32.totalorder %s22, 1
      %p108 = scmp.ne.s32.totalorder %s103, %s105
      %p109 = scmp.eq.s32.totalorder %s22, 0
      %p110 = por %p108, %p109
      %p111 = scmp.ne.s32.totalorder %s103, %s105
      %p112 = scmp.eq.s32.totalorder %s27, 1
      %p113 = por %p111, %p112
      %p114 = scmp.ne.s32.totalorder %s105, %s106
      %p115 = scmp.eq.s32.totalorder %s27, 0
      %p116 = por %p114, %p115
      %p117 = scmp.ne.s32.totalorder %s105, %s106
      %p118 = scmp.eq.s32.totalorder %s28, 1
      %p119 = por %p117, %p118
      %p121 = scmp.ne.s32.totalorder %s106, %s120
      %p122 = scmp.eq.s32.totalorder %s28, 0
      %p123 = por %p121, %p122
      %s125 = sadd.s32 %s124, 1
      %p128 = scmp.eq.s32.totalorder %s22, 1
      %p129 = scmp.ne.s32.totalorder %s124, %s126
      %p130 = scmp.eq.s32.totalorder %s22, 0
      %p131 = por %p129, %p130
      %p132 = scmp.ne.s32.totalorder %s124, %s126
      %p133 = scmp.eq.s32.totalorder %s27, 1
      %p134 = por %p132, %p133
      %p135 = scmp.ne.s32.totalorder %s126, %s127
      %p136 = scmp.eq.s32.totalorder %s27, 0
      %p137 = por %p135, %p136
      %p138 = scmp.ne.s32.totalorder %s126, %s127
      %p139 = scmp.eq.s32.totalorder %s28, 1
      %p140 = por %p138, %p139
      %p142 = scmp.ne.s32.totalorder %s127, %s141
      %p143 = scmp.eq.s32.totalorder %s28, 0
      %p144 = por %p142, %p143
      %s146 = sadd.s32 %s145, 1
      %p149 = scmp.eq.s32.totalorder %s22, 1
      %p150 = scmp.ne.s32.totalorder %s145, %s147
      %p151 = scmp.eq.s32.totalorder %s22, 0
      %p152 = por %p150, %p151
      %p153 = scmp.ne.s32.totalorder %s145, %s147
      %p154 = scmp.eq.s32.totalorder %s27, 1
      %p155 = por %p153, %p154
      %p156 = scmp.ne.s32.totalorder %s147, %s148
      %p157 = scmp.eq.s32.totalorder %s27, 0
      %p158 = por %p156, %p157
      %p159 = scmp.ne.s32.totalorder %s147, %s148
      %p160 = scmp.eq.s32.totalorder %s28, 1
      %p161 = por %p159, %p160
      %p163 = scmp.ne.s32.totalorder %s148, %s162
      %p164 = scmp.eq.s32.totalorder %s28, 0
      %p165 = por %p163, %p164
      %s167 = sadd.s32 %s166, 1
      %p170 = scmp.eq.s32.totalorder %s22, 1
      %p171 = scmp.ne.s32.totalorder %s166, %s168
      %p172 = scmp.eq.s32.totalorder %s22, 0
      %p173 = por %p171, %p172
      %p174 = scmp.ne.s32.totalorder %s166, %s168
      %p175 = scmp.eq.s32.totalorder %s27, 1
      %p176 = por %p174, %p175
      %p177 = scmp.ne.s32.totalorder %s168, %s169
      %p178 = scmp.eq.s32.totalorder %s27, 0
      %p179 = por %p177, %p178
      %p180 = scmp.ne.s32.totalorder %s168, %s169
      %p181 = scmp.eq.s32.totalorder %s28, 1
      %p182 = por %p180, %p181
      %p184 = scmp.ne.s32.totalorder %s169, %s183
      %p185 = scmp.eq.s32.totalorder %s28, 0
      %p186 = por %p184, %p185
      %s188 = sadd.s32 %s187, 1
      %p191 = scmp.eq.s32.totalorder %s22, 1
      %p192 = scmp.ne.s32.totalorder %s187, %s189
      %p193 = scmp.eq.s32.totalorder %s22, 0
      %p194 = por %p192, %p193
      %p195 = scmp.ne.s32.totalorder %s187, %s189
      %p196 = scmp.eq.s32.totalorder %s27, 1
      %p197 = por %p195, %p196
      %p198 = scmp.ne.s32.totalorder %s189, %s190
      %p199 = scmp.eq.s32.totalorder %s27, 0
      %p200 = por %p198, %p199
      %p201 = scmp.ne.s32.totalorder %s189, %s190
      %p202 = scmp.eq.s32.totalorder %s28, 1
      %p203 = por %p201, %p202
      %p205 = scmp.ne.s32.totalorder %s190, %s204
      %p206 = scmp.eq.s32.totalorder %s28, 0
      %p207 = por %p205, %p206
      %s208 = ssub.s32 %s22, %s29
      %p209 = scmp.eq.s32.totalorder %s208, 0
      %s211 = sadd.s32 %s210, 1
      %s212 = scalar_select %p209, %s210, %s211
      %p215 = pneg %p209
      %p216 = scmp.eq.s32.totalorder %s22, 1
      %p217 = por %p215, %p216
      %p218 = scmp.ne.s32.totalorder %s210, %s213
      %p219 = scmp.eq.s32.totalorder %s22, 0
      %p220 = por %p218, %p219
      %p221 = scmp.ne.s32.totalorder %s210, %s213
      %p222 = scmp.eq.s32.totalorder %s27, 1
      %p223 = por %p221, %p222
      %p224 = scmp.ne.s32.totalorder %s213, %s214
      %p225 = scmp.eq.s32.totalorder %s27, 0
      %p226 = por %p224, %p225
      %p227 = scmp.ne.s32.totalorder %s213, %s214
      %p228 = scmp.eq.s32.totalorder %s28, 1
      %p229 = por %p227, %p228
      %p231 = scmp.ne.s32.totalorder %s214, %s230
      %p232 = scmp.eq.s32.totalorder %s28, 0
      %p233 = por %p231, %p232
      %s234 = ssub.s32 %s22, %s29
      %p235 = scmp.eq.s32.totalorder %s234, 0
      %s237 = sadd.s32 %s236, 1
      %s238 = scalar_select %p235, %s236, %s237
      %p241 = pneg %p235
      %p242 = scmp.eq.s32.totalorder %s22, 1
      %p243 = por %p241, %p242
      %p244 = scmp.ne.s32.totalorder %s236, %s239
      %p245 = scmp.eq.s32.totalorder %s22, 0
      %p246 = por %p244, %p245
      %p247 = scmp.ne.s32.totalorder %s236, %s239
      %p248 = scmp.eq.s32.totalorder %s27, 1
      %p249 = por %p247, %p248
      %p250 = scmp.ne.s32.totalorder %s239, %s240
      %p251 = scmp.eq.s32.totalorder %s27, 0
      %p252 = por %p250, %p251
      %p253 = scmp.ne.s32.totalorder %s239, %s240
      %p254 = scmp.eq.s32.totalorder %s28, 1
      %p255 = por %p253, %p254
      %p257 = scmp.ne.s32.totalorder %s240, %s256
      %p258 = scmp.eq.s32.totalorder %s28, 0
      %p259 = por %p257, %p258
      %s260 = ssub.s32 %s22, %s29
      %p261 = scmp.eq.s32.totalorder %s260, 0
      %s263 = sadd.s32 %s262, 1
      %s264 = scalar_select %p261, %s262, %s263
      %p267 = pneg %p261
      %p268 = scmp.eq.s32.totalorder %s22, 1
      %p269 = por %p267, %p268
      %p270 = scmp.ne.s32.totalorder %s262, %s265
      %p271 = scmp.eq.s32.totalorder %s22, 0
      %p272 = por %p270, %p271
      %p273 = scmp.ne.s32.totalorder %s262, %s265
      %p274 = scmp.eq.s32.totalorder %s27, 1
      %p275 = por %p273, %p274
      %p276 = scmp.ne.s32.totalorder %s265, %s266
      %p277 = scmp.eq.s32.totalorder %s27, 0
      %p278 = por %p276, %p277
      %p279 = scmp.ne.s32.totalorder %s265, %s266
      %p280 = scmp.eq.s32.totalorder %s28, 1
      %p281 = por %p279, %p280
      %p283 = scmp.ne.s32.totalorder %s266, %s282
      %p284 = scmp.eq.s32.totalorder %s28, 0
      %p285 = por %p283, %p284
      %p286 = scmp.le.s32.totalorder 1, %s22
      %p287 = scmp.lt.s32.totalorder %s22, 3
      %p288 = pnand %p286, %p287
      %p289 = pneg %p288
      // Predicated region
      $region9: #{forward.1} parent=5 // pred_check
        _
      $region10: #{forward.1} parent=5 // pred_check_branch
        %291 = sbr.rel (%p288) target = $region12
      $region11: #{forward.1} parent=5 // pred_region
        %s292 = ssub.s32 %s22, 1
        // Predicated region
        $region13: #{forward.1} parent=11 // pred_check
          %p293 = pneg %p95
        $region14: #{forward.1} parent=11 // pred_check_branch
          %295 = sbr.rel (%p293) target = $region16
        $region15: #{forward.1} parent=11 // pred_region
          %297 = vsyncadd [#allocation6], 0
          %s299 = sshll.u32 %s2, 4
          %s300 = int_to_ptr.vmem [resolvable:$true] %s299
          %302 = dma.vmem_to_smem %s300, 16, [#allocation4], [#allocation6]
        $region16: #{forward.1} parent=11 // pred_fallthru
          _
        // Predicated region
        $region17: #{forward.1} parent=11 // pred_check
          %p303 = pneg %p116
        $region18: #{forward.1} parent=11 // pred_check_branch
          %305 = sbr.rel (%p303) target = $region20
        $region19: #{forward.1} parent=11 // pred_region
          _
        $region20: #{forward.1} parent=11 // pred_fallthru
          _
        // Predicated region
        $region21: #{forward.1} parent=11 // pred_check
          %p306 = pneg %p137
        $region22: #{forward.1} parent=11 // pred_check_branch
          %308 = sbr.rel (%p306) target = $region24
        $region23: #{forward.1} parent=11 // pred_region
          _
        $region24: #{forward.1} parent=11 // pred_fallthru
          _
        // Predicated region
        $region25: #{forward.1} parent=11 // pred_check
          %p309 = pneg %p158
        $region26: #{forward.1} parent=11 // pred_check_branch
          %311 = sbr.rel (%p309) target = $region28
        $region27: #{forward.1} parent=11 // pred_region
          _
        $region28: #{forward.1} parent=11 // pred_fallthru
          _
        // Predicated region
        $region29: #{forward.1} parent=11 // pred_check
          %p312 = pneg %p179
        $region30: #{forward.1} parent=11 // pred_check_branch
          %314 = sbr.rel (%p312) target = $region32
        $region31: #{forward.1} parent=11 // pred_region
          _
        $region32: #{forward.1} parent=11 // pred_fallthru
          _
        // Predicated region
        $region33: #{forward.1} parent=11 // pred_check
          %p315 = pneg %p200
        $region34: #{forward.1} parent=11 // pred_check_branch
          %317 = sbr.rel (%p315) target = $region36
        $region35: #{forward.1} parent=11 // pred_region
          _
        $region36: #{forward.1} parent=11 // pred_fallthru
          _
      $region12: #{forward.1} parent=5 // pred_fallthru
        _
      %p318 = scmp.lt.s32.totalorder %s22, 2
      // Predicated region
      $region37: #{forward.1} parent=5 // pred_check
        %p319 = pneg %p318
      $region38: #{forward.1} parent=5 // pred_check_branch
        %321 = sbr.rel (%p319) target = $region40
      $region39: #{forward.1} parent=5 // pred_region
        // Predicated region
        $region41: #{forward.1} parent=39 // pred_check
          %p322 = pneg %p42
        $region42: #{forward.1} parent=39 // pred_check_branch
          %324 = sbr.rel (%p322) target = $region44
        $region43: #{forward.1} parent=39 // pred_region
          %s325 = sand.u32 %s32, 1
          %s326 = sand.u32 %s32, 1
          %s327 = smul.addr %s326, 512
          %s328 = scalar_lea.vmem [#allocation3], %s327
          %s329 = smul.u32 4, %s22
          %s330 = smul.addr %s329, 8
          %s331 = scalar_lea.vmem %s0, %s330
          // Predicated region
          $region45: #{forward.1} parent=43 // pred_check
            _
          $region46: #{forward.1} parent=43 // pred_check_branch
            %333 = sbr.rel (0) target = $region48
          $region47: #{forward.1} parent=43 // pred_region
            // Predicated region
            $region49: #{forward.1} parent=47 // pred_check
              _
            $region50: #{forward.1} parent=47 // pred_check_branch
              %335 = sbr.rel (0) target = $region52
            $region51: #{forward.1} parent=47 // pred_region
              // Predicated region
              $region64: #{forward.1} parent=51 // pred_check
                _
              $region65: #{forward.1} parent=51 // pred_check_branch
                %477 = sbr.rel (0) target = $region67
              $region66: #{forward.1} parent=51 // pred_region
                loop: start=0, step=1, limit=1
                $region68: #{forward.1} parent=66 // loop_pre_header
                  _
                $region69: #{forward.1} parent=66 // loop_header
                  %s479 = sphi 0, %s483
                  %p480 = scmp.ge.s32.totalorder %s479, 1
                  %s484 = sphi %s331, %s331
                  %s485 = sphi %s328, %s328
                $region70: #{forward.1} parent=66 // loop_header_branch
                  %482 = sbr.rel (%p480) target = $region74
                $region71: #{forward.1} parent=66 // loop_body
                  %v486 = vld [vmem:[%s484] sm:$0xff]
                  %487 = vst [vmem:[%s485] sm:$0xff] %v486
                  %v488 = vld [vmem:[%s484 + $0x8] sm:$0xff]
                  %489 = vst [vmem:[%s485 + $0x8] sm:$0xff] %v488
                  %v490 = vld [vmem:[%s484 + $0x10] sm:$0xff]
                  %491 = vst [vmem:[%s485 + $0x10] sm:$0xff] %v490
                  %v492 = vld [vmem:[%s484 + $0x18] sm:$0xff]
                  %493 = vst [vmem:[%s485 + $0x18] sm:$0xff] %v492
                  %v494 = vld [vmem:[%s484 + $0x40] sm:$0xff]
                  %495 = vst [vmem:[%s485 + $0x20] sm:$0xff] %v494
                  %v496 = vld [vmem:[%s484 + $0x48] sm:$0xff]
                  %497 = vst [vmem:[%s485 + $0x28] sm:$0xff] %v496
                  %v498 = vld [vmem:[%s484 + $0x50] sm:$0xff]
                  %499 = vst [vmem:[%s485 + $0x30] sm:$0xff] %v498
                  %v500 = vld [vmem:[%s484 + $0x58] sm:$0xff]
                  %501 = vst [vmem:[%s485 + $0x38] sm:$0xff] %v500
                  %v502 = vld [vmem:[%s484 + $0x80] sm:$0xff]
                  %503 = vst [vmem:[%s485 + $0x40] sm:$0xff] %v502
                  %v504 = vld [vmem:[%s484 + $0x88] sm:$0xff]
                  %505 = vst [vmem:[%s485 + $0x48] sm:$0xff] %v504
                  %v506 = vld [vmem:[%s484 + $0x90] sm:$0xff]
                  %507 = vst [vmem:[%s485 + $0x50] sm:$0xff] %v506
                  %v508 = vld [vmem:[%s484 + $0x98] sm:$0xff]
                  %509 = vst [vmem:[%s485 + $0x58] sm:$0xff] %v508
                  %v510 = vld [vmem:[%s484 + $0xc0] sm:$0xff]
                  %511 = vst [vmem:[%s485 + $0x60] sm:$0xff] %v510
                  %v512 = vld [vmem:[%s484 + $0xc8] sm:$0xff]
                  %513 = vst [vmem:[%s485 + $0x68] sm:$0xff] %v512
                  %v514 = vld [vmem:[%s484 + $0xd0] sm:$0xff]
                  %515 = vst [vmem:[%s485 + $0x70] sm:$0xff] %v514
                  %v516 = vld [vmem:[%s484 + $0xd8] sm:$0xff]
                  %517 = vst [vmem:[%s485 + $0x78] sm:$0xff] %v516
                  %v518 = vld [vmem:[%s484 + $0x100] sm:$0xff]
                  %519 = vst [vmem:[%s485 + $0x80] sm:$0xff] %v518
                  %v520 = vld [vmem:[%s484 + $0x108] sm:$0xff]
                  %521 = vst [vmem:[%s485 + $0x88] sm:$0xff] %v520
                  %v522 = vld [vmem:[%s484 + $0x110] sm:$0xff]
                  %523 = vst [vmem:[%s485 + $0x90] sm:$0xff] %v522
                  %v524 = vld [vmem:[%s484 + $0x118] sm:$0xff]
                  %525 = vst [vmem:[%s485 + $0x98] sm:$0xff] %v524
                  %v526 = vld [vmem:[%s484 + $0x140] sm:$0xff]
                  %527 = vst [vmem:[%s485 + $0xa0] sm:$0xff] %v526
                  %v528 = vld [vmem:[%s484 + $0x148] sm:$0xff]
                  %529 = vst [vmem:[%s485 + $0xa8] sm:$0xff] %v528
                  %v530 = vld [vmem:[%s484 + $0x150] sm:$0xff]
                  %531 = vst [vmem:[%s485 + $0xb0] sm:$0xff] %v530
                  %v532 = vld [vmem:[%s484 + $0x158] sm:$0xff]
                  %533 = vst [vmem:[%s485 + $0xb8] sm:$0xff] %v532
                  %v534 = vld [vmem:[%s484 + $0x180] sm:$0xff]
                  %535 = vst [vmem:[%s485 + $0xc0] sm:$0xff] %v534
                  %v536 = vld [vmem:[%s484 + $0x188] sm:$0xff]
                  %537 = vst [vmem:[%s485 + $0xc8] sm:$0xff] %v536
                  %v538 = vld [vmem:[%s484 + $0x190] sm:$0xff]
                  %539 = vst [vmem:[%s485 + $0xd0] sm:$0xff] %v538
                  %v540 = vld [vmem:[%s484 + $0x198] sm:$0xff]
                  %541 = vst [vmem:[%s485 + $0xd8] sm:$0xff] %v540
                  %v542 = vld [vmem:[%s484 + $0x1c0] sm:$0xff]
                  %543 = vst [vmem:[%s485 + $0xe0] sm:$0xff] %v542
                  %v544 = vld [vmem:[%s484 + $0x1c8] sm:$0xff]
                  %545 = vst [vmem:[%s485 + $0xe8] sm:$0xff] %v544
                  %v546 = vld [vmem:[%s484 + $0x1d0] sm:$0xff]
                  %547 = vst [vmem:[%s485 + $0xf0] sm:$0xff] %v546
                  %v548 = vld [vmem:[%s484 + $0x1d8] sm:$0xff]
                  %549 = vst [vmem:[%s485 + $0xf8] sm:$0xff] %v548
                  %v550 = vld [vmem:[%s484 + $0x200] sm:$0xff]
                  %551 = vst [vmem:[%s485 + $0x100] sm:$0xff] %v550
                  %v552 = vld [vmem:[%s484 + $0x208] sm:$0xff]
                  %553 = vst [vmem:[%s485 + $0x108] sm:$0xff] %v552
                  %v554 = vld [vmem:[%s484 + $0x210] sm:$0xff]
                  %555 = vst [vmem:[%s485 + $0x110] sm:$0xff] %v554
                  %v556 = vld [vmem:[%s484 + $0x218] sm:$0xff]
                  %557 = vst [vmem:[%s485 + $0x118] sm:$0xff] %v556
                  %v558 = vld [vmem:[%s484 + $0x240] sm:$0xff]
                  %559 = vst [vmem:[%s485 + $0x120] sm:$0xff] %v558
                  %v560 = vld [vmem:[%s484 + $0x248] sm:$0xff]
                  %561 = vst [vmem:[%s485 + $0x128] sm:$0xff] %v560
                  %v562 = vld [vmem:[%s484 + $0x250] sm:$0xff]
                  %563 = vst [vmem:[%s485 + $0x130] sm:$0xff] %v562
                  %v564 = vld [vmem:[%s484 + $0x258] sm:$0xff]
                  %565 = vst [vmem:[%s485 + $0x138] sm:$0xff] %v564
                  %v566 = vld [vmem:[%s484 + $0x280] sm:$0xff]
                  %567 = vst [vmem:[%s485 + $0x140] sm:$0xff] %v566
                  %v568 = vld [vmem:[%s484 + $0x288] sm:$0xff]
                  %569 = vst [vmem:[%s485 + $0x148] sm:$0xff] %v568
                  %v570 = vld [vmem:[%s484 + $0x290] sm:$0xff]
                  %571 = vst [vmem:[%s485 + $0x150] sm:$0xff] %v570
                  %v572 = vld [vmem:[%s484 + $0x298] sm:$0xff]
                  %573 = vst [vmem:[%s485 + $0x158] sm:$0xff] %v572
                  %v574 = vld [vmem:[%s484 + $0x2c0] sm:$0xff]
                  %575 = vst [vmem:[%s485 + $0x160] sm:$0xff] %v574
                  %v576 = vld [vmem:[%s484 + $0x2c8] sm:$0xff]
                  %577 = vst [vmem:[%s485 + $0x168] sm:$0xff] %v576
                  %v578 = vld [vmem:[%s484 + $0x2d0] sm:$0xff]
                  %579 = vst [vmem:[%s485 + $0x170] sm:$0xff] %v578
                  %v580 = vld [vmem:[%s484 + $0x2d8] sm:$0xff]
                  %581 = vst [vmem:[%s485 + $0x178] sm:$0xff] %v580
                  %v582 = vld [vmem:[%s484 + $0x300] sm:$0xff]
                  %583 = vst [vmem:[%s485 + $0x180] sm:$0xff] %v582
                  %v584 = vld [vmem:[%s484 + $0x308] sm:$0xff]
                  %585 = vst [vmem:[%s485 + $0x188] sm:$0xff] %v584
                  %v586 = vld [vmem:[%s484 + $0x310] sm:$0xff]
                  %587 = vst [vmem:[%s485 + $0x190] sm:$0xff] %v586
                  %v588 = vld [vmem:[%s484 + $0x318] sm:$0xff]
                  %589 = vst [vmem:[%s485 + $0x198] sm:$0xff] %v588
                  %v590 = vld [vmem:[%s484 + $0x340] sm:$0xff]
                  %591 = vst [vmem:[%s485 + $0x1a0] sm:$0xff] %v590
                  %v592 = vld [vmem:[%s484 + $0x348] sm:$0xff]
                  %593 = vst [vmem:[%s485 + $0x1a8] sm:$0xff] %v592
                  %v594 = vld [vmem:[%s484 + $0x350] sm:$0xff]
                  %595 = vst [vmem:[%s485 + $0x1b0] sm:$0xff] %v594
                  %v596 = vld [vmem:[%s484 + $0x358] sm:$0xff]
                  %597 = vst [vmem:[%s485 + $0x1b8] sm:$0xff] %v596
                  %v598 = vld [vmem:[%s484 + $0x380] sm:$0xff]
                  %599 = vst [vmem:[%s485 + $0x1c0] sm:$0xff] %v598
                  %v600 = vld [vmem:[%s484 + $0x388] sm:$0xff]
                  %601 = vst [vmem:[%s485 + $0x1c8] sm:$0xff] %v600
                  %v602 = vld [vmem:[%s484 + $0x390] sm:$0xff]
                  %603 = vst [vmem:[%s485 + $0x1d0] sm:$0xff] %v602
                  %v604 = vld [vmem:[%s484 + $0x398] sm:$0xff]
                  %605 = vst [vmem:[%s485 + $0x1d8] sm:$0xff] %v604
                  %v606 = vld [vmem:[%s484 + $0x3c0] sm:$0xff]
                  %607 = vst [vmem:[%s485 + $0x1e0] sm:$0xff] %v606
                  %v608 = vld [vmem:[%s484 + $0x3c8] sm:$0xff]
                  %609 = vst [vmem:[%s485 + $0x1e8] sm:$0xff] %v608
                  %v610 = vld [vmem:[%s484 + $0x3d0] sm:$0xff]
                  %611 = vst [vmem:[%s485 + $0x1f0] sm:$0xff] %v610
                  %v612 = vld [vmem:[%s484 + $0x3d8] sm:$0xff]
                  %613 = vst [vmem:[%s485 + $0x1f8] sm:$0xff] %v612
                $region72: #{forward.1} parent=66 // loop_footer
                  %s483 = sadd.s32 1, %s479
                $region73: #{forward.1} parent=66 // loop_footer_branch
                  %478 = sbr.rel target = $region69
                $region74: #{forward.1} parent=66 // loop_exit
                  _
              $region67: #{forward.1} parent=51 // pred_fallthru
                _
              // Predicated region
              $region75: #{forward.1} parent=51 // pred_check
                _
              $region76: #{forward.1} parent=51 // pred_check_branch
                %615 = sbr.rel target = $region78
              $region77: #{forward.1} parent=51 // pred_region
                _
              $region78: #{forward.1} parent=51 // pred_fallthru
                _
            $region52: #{forward.1} parent=47 // pred_fallthru
              _
            // Predicated region
            $region53: #{forward.1} parent=47 // pred_check
              _
            $region54: #{forward.1} parent=47 // pred_check_branch
              %337 = sbr.rel target = $region56
            $region55: #{forward.1} parent=47 // pred_region
              %s339 = ssub.s32 256, 1
              loop: start=0, step=1, limit=1
              $region57: #{forward.1} parent=55 // loop_pre_header
                _
              $region58: #{forward.1} parent=55 // loop_header
                %s341 = sphi 0, %s345
                %p342 = scmp.ge.s32.totalorder %s341, 1
                %s346 = sphi %s331, %s331
                %s347 = sphi %s328, %s328
              $region59: #{forward.1} parent=55 // loop_header_branch
                %344 = sbr.rel (%p342) target = $region63
              $region60: #{forward.1} parent=55 // loop_body
                %v348 = vld [vmem:[%s346] sm:%s339]
                %349 = vst [vmem:[%s347] sm:%s339] %v348
                %v350 = vld [vmem:[%s346 + $0x8] sm:%s339]
                %351 = vst [vmem:[%s347 + $0x8] sm:%s339] %v350
                %v352 = vld [vmem:[%s346 + $0x10] sm:%s339]
                %353 = vst [vmem:[%s347 + $0x10] sm:%s339] %v352
                %v354 = vld [vmem:[%s346 + $0x18] sm:%s339]
                %355 = vst [vmem:[%s347 + $0x18] sm:%s339] %v354
                %v356 = vld [vmem:[%s346 + $0x40] sm:%s339]
                %357 = vst [vmem:[%s347 + $0x20] sm:%s339] %v356
                %v358 = vld [vmem:[%s346 + $0x48] sm:%s339]
                %359 = vst [vmem:[%s347 + $0x28] sm:%s339] %v358
                %v360 = vld [vmem:[%s346 + $0x50] sm:%s339]
                %361 = vst [vmem:[%s347 + $0x30] sm:%s339] %v360
                %v362 = vld [vmem:[%s346 + $0x58] sm:%s339]
                %363 = vst [vmem:[%s347 + $0x38] sm:%s339] %v362
                %v364 = vld [vmem:[%s346 + $0x80] sm:%s339]
                %365 = vst [vmem:[%s347 + $0x40] sm:%s339] %v364
                %v366 = vld [vmem:[%s346 + $0x88] sm:%s339]
                %367 = vst [vmem:[%s347 + $0x48] sm:%s339] %v366
                %v368 = vld [vmem:[%s346 + $0x90] sm:%s339]
                %369 = vst [vmem:[%s347 + $0x50] sm:%s339] %v368
                %v370 = vld [vmem:[%s346 + $0x98] sm:%s339]
                %371 = vst [vmem:[%s347 + $0x58] sm:%s339] %v370
                %v372 = vld [vmem:[%s346 + $0xc0] sm:%s339]
                %373 = vst [vmem:[%s347 + $0x60] sm:%s339] %v372
                %v374 = vld [vmem:[%s346 + $0xc8] sm:%s339]
                %375 = vst [vmem:[%s347 + $0x68] sm:%s339] %v374
                %v376 = vld [vmem:[%s346 + $0xd0] sm:%s339]
                %377 = vst [vmem:[%s347 + $0x70] sm:%s339] %v376
                %v378 = vld [vmem:[%s346 + $0xd8] sm:%s339]
                %379 = vst [vmem:[%s347 + $0x78] sm:%s339] %v378
                %v380 = vld [vmem:[%s346 + $0x100] sm:%s339]
                %381 = vst [vmem:[%s347 + $0x80] sm:%s339] %v380
                %v382 = vld [vmem:[%s346 + $0x108] sm:%s339]
                %383 = vst [vmem:[%s347 + $0x88] sm:%s339] %v382
                %v384 = vld [vmem:[%s346 + $0x110] sm:%s339]
                %385 = vst [vmem:[%s347 + $0x90] sm:%s339] %v384
                %v386 = vld [vmem:[%s346 + $0x118] sm:%s339]
                %387 = vst [vmem:[%s347 + $0x98] sm:%s339] %v386
                %v388 = vld [vmem:[%s346 + $0x140] sm:%s339]
                %389 = vst [vmem:[%s347 + $0xa0] sm:%s339] %v388
                %v390 = vld [vmem:[%s346 + $0x148] sm:%s339]
                %391 = vst [vmem:[%s347 + $0xa8] sm:%s339] %v390
                %v392 = vld [vmem:[%s346 + $0x150] sm:%s339]
                %393 = vst [vmem:[%s347 + $0xb0] sm:%s339] %v392
                %v394 = vld [vmem:[%s346 + $0x158] sm:%s339]
                %395 = vst [vmem:[%s347 + $0xb8] sm:%s339] %v394
                %v396 = vld [vmem:[%s346 + $0x180] sm:%s339]
                %397 = vst [vmem:[%s347 + $0xc0] sm:%s339] %v396
                %v398 = vld [vmem:[%s346 + $0x188] sm:%s339]
                %399 = vst [vmem:[%s347 + $0xc8] sm:%s339] %v398
                %v400 = vld [vmem:[%s346 + $0x190] sm:%s339]
                %401 = vst [vmem:[%s347 + $0xd0] sm:%s339] %v400
                %v402 = vld [vmem:[%s346 + $0x198] sm:%s339]
                %403 = vst [vmem:[%s347 + $0xd8] sm:%s339] %v402
                %v404 = vld [vmem:[%s346 + $0x1c0] sm:%s339]
                %405 = vst [vmem:[%s347 + $0xe0] sm:%s339] %v404
                %v406 = vld [vmem:[%s346 + $0x1c8] sm:%s339]
                %407 = vst [vmem:[%s347 + $0xe8] sm:%s339] %v406
                %v408 = vld [vmem:[%s346 + $0x1d0] sm:%s339]
                %409 = vst [vmem:[%s347 + $0xf0] sm:%s339] %v408
                %v410 = vld [vmem:[%s346 + $0x1d8] sm:%s339]
                %411 = vst [vmem:[%s347 + $0xf8] sm:%s339] %v410
                %v412 = vld [vmem:[%s346 + $0x200] sm:%s339]
                %413 = vst [vmem:[%s347 + $0x100] sm:%s339] %v412
                %v414 = vld [vmem:[%s346 + $0x208] sm:%s339]
                %415 = vst [vmem:[%s347 + $0x108] sm:%s339] %v414
                %v416 = vld [vmem:[%s346 + $0x210] sm:%s339]
                %417 = vst [vmem:[%s347 + $0x110] sm:%s339] %v416
                %v418 = vld [vmem:[%s346 + $0x218] sm:%s339]
                %419 = vst [vmem:[%s347 + $0x118] sm:%s339] %v418
                %v420 = vld [vmem:[%s346 + $0x240] sm:%s339]
                %421 = vst [vmem:[%s347 + $0x120] sm:%s339] %v420
                %v422 = vld [vmem:[%s346 + $0x248] sm:%s339]
                %423 = vst [vmem:[%s347 + $0x128] sm:%s339] %v422
                %v424 = vld [vmem:[%s346 + $0x250] sm:%s339]
                %425 = vst [vmem:[%s347 + $0x130] sm:%s339] %v424
                %v426 = vld [vmem:[%s346 + $0x258] sm:%s339]
                %427 = vst [vmem:[%s347 + $0x138] sm:%s339] %v426
                %v428 = vld [vmem:[%s346 + $0x280] sm:%s339]
                %429 = vst [vmem:[%s347 + $0x140] sm:%s339] %v428
                %v430 = vld [vmem:[%s346 + $0x288] sm:%s339]
                %431 = vst [vmem:[%s347 + $0x148] sm:%s339] %v430
                %v432 = vld [vmem:[%s346 + $0x290] sm:%s339]
                %433 = vst [vmem:[%s347 + $0x150] sm:%s339] %v432
                %v434 = vld [vmem:[%s346 + $0x298] sm:%s339]
                %435 = vst [vmem:[%s347 + $0x158] sm:%s339] %v434
                %v436 = vld [vmem:[%s346 + $0x2c0] sm:%s339]
                %437 = vst [vmem:[%s347 + $0x160] sm:%s339] %v436
                %v438 = vld [vmem:[%s346 + $0x2c8] sm:%s339]
                %439 = vst [vmem:[%s347 + $0x168] sm:%s339] %v438
                %v440 = vld [vmem:[%s346 + $0x2d0] sm:%s339]
                %441 = vst [vmem:[%s347 + $0x170] sm:%s339] %v440
                %v442 = vld [vmem:[%s346 + $0x2d8] sm:%s339]
                %443 = vst [vmem:[%s347 + $0x178] sm:%s339] %v442
                %v444 = vld [vmem:[%s346 + $0x300] sm:%s339]
                %445 = vst [vmem:[%s347 + $0x180] sm:%s339] %v444
                %v446 = vld [vmem:[%s346 + $0x308] sm:%s339]
                %447 = vst [vmem:[%s347 + $0x188] sm:%s339] %v446
                %v448 = vld [vmem:[%s346 + $0x310] sm:%s339]
                %449 = vst [vmem:[%s347 + $0x190] sm:%s339] %v448
                %v450 = vld [vmem:[%s346 + $0x318] sm:%s339]
                %451 = vst [vmem:[%s347 + $0x198] sm:%s339] %v450
                %v452 = vld [vmem:[%s346 + $0x340] sm:%s339]
                %453 = vst [vmem:[%s347 + $0x1a0] sm:%s339] %v452
                %v454 = vld [vmem:[%s346 + $0x348] sm:%s339]
                %455 = vst [vmem:[%s347 + $0x1a8] sm:%s339] %v454
                %v456 = vld [vmem:[%s346 + $0x350] sm:%s339]
                %457 = vst [vmem:[%s347 + $0x1b0] sm:%s339] %v456
                %v458 = vld [vmem:[%s346 + $0x358] sm:%s339]
                %459 = vst [vmem:[%s347 + $0x1b8] sm:%s339] %v458
                %v460 = vld [vmem:[%s346 + $0x380] sm:%s339]
                %461 = vst [vmem:[%s347 + $0x1c0] sm:%s339] %v460
                %v462 = vld [vmem:[%s346 + $0x388] sm:%s339]
                %463 = vst [vmem:[%s347 + $0x1c8] sm:%s339] %v462
                %v464 = vld [vmem:[%s346 + $0x390] sm:%s339]
                %465 = vst [vmem:[%s347 + $0x1d0] sm:%s339] %v464
                %v466 = vld [vmem:[%s346 + $0x398] sm:%s339]
                %467 = vst [vmem:[%s347 + $0x1d8] sm:%s339] %v466
                %v468 = vld [vmem:[%s346 + $0x3c0] sm:%s339]
                %469 = vst [vmem:[%s347 + $0x1e0] sm:%s339] %v468
                %v470 = vld [vmem:[%s346 + $0x3c8] sm:%s339]
                %471 = vst [vmem:[%s347 + $0x1e8] sm:%s339] %v470
                %v472 = vld [vmem:[%s346 + $0x3d0] sm:%s339]
                %473 = vst [vmem:[%s347 + $0x1f0] sm:%s339] %v472
                %v474 = vld [vmem:[%s346 + $0x3d8] sm:%s339]
                %475 = vst [vmem:[%s347 + $0x1f8] sm:%s339] %v474
              $region61: #{forward.1} parent=55 // loop_footer
                %s345 = sadd.s32 1, %s341
              $region62: #{forward.1} parent=55 // loop_footer_branch
                %340 = sbr.rel target = $region58
              $region63: #{forward.1} parent=55 // loop_exit
                _
            $region56: #{forward.1} parent=47 // pred_fallthru
              _
          $region48: #{forward.1} parent=43 // pred_fallthru
            _
          %616 = vnop
        $region44: #{forward.1} parent=39 // pred_fallthru
          _
        // Predicated region
        $region79: #{forward.1} parent=39 // pred_check
          %p617 = pneg %p68
        $region80: #{forward.1} parent=39 // pred_check_branch
          %619 = sbr.rel (%p617) target = $region82
        $region81: #{forward.1} parent=39 // pred_region
          %s620 = smul.u32 32, %s22
          %p621 = scmp.lt.s32.totalorder %s620, 63
          %s622 = scalar_select %p621, %s620, 63
          %s623 = smul.addr %s622, 4
          %s624 = smul.addr %s623, 4
          %s625 = scalar_lea.vmem %s1, %s624
          %s626 = smul.u32 32, %s22
        $region82: #{forward.1} parent=39 // pred_fallthru
          _
      $region40: #{forward.1} parent=5 // pred_fallthru
        _
      %p627 = scmp.le.s32.totalorder 1, %s22
      %p628 = scmp.lt.s32.totalorder %s22, 3
      %p629 = pnand %p627, %p628
      %p630 = pneg %p629
      // Predicated region
      $region83: #{forward.1} parent=5 // pred_check
        _
      $region84: #{forward.1} parent=5 // pred_check_branch
        %632 = sbr.rel (%p629) target = $region86
      $region85: #{forward.1} parent=5 // pred_region
        %s633 = ssub.s32 %s22, 1
        %s634 = sand.u32 %s35, 1
        %s635 = sand.u32 %s35, 1
        %s636 = smul.addr %s635, 512
        %s637 = scalar_lea.vmem [#allocation3], %s636
        // Predicated region
        $region87: #{forward.1} parent=85 // pred_check
          %p638 = pneg %p48
        $region88: #{forward.1} parent=85 // pred_check_branch
          %640 = sbr.rel (%p638) target = $region90
        $region89: #{forward.1} parent=85 // pred_region
          _
        $region90: #{forward.1} parent=85 // pred_fallthru
          _
        // Predicated region
        $region91: #{forward.1} parent=85 // pred_check
          %p641 = pneg %p95
        $region92: #{forward.1} parent=85 // pred_check_branch
          %643 = sbr.rel (%p641) target = $region94
        $region93: #{forward.1} parent=85 // pred_region
          %645 = dma.done [#allocation6], 16
        $region94: #{forward.1} parent=85 // pred_fallthru
          _
        %646 = sfence
        %s647 = sand.u32 %s35, 1
        %s648 = sand.u32 %s35, 1
        %s649 = smul.addr %s648, 512
        %s650 = scalar_lea.vmem [#allocation3], %s649
        %p651 = pneg %p48
        %p652 = pneg %p45
        %s653 = smul.u32 32, %s27
        %p654 = scmp.lt.s32.totalorder %s653, 63
        %s655 = scalar_select %p654, %s653, 63
        %s656 = smul.addr %s655, 4
        %s657 = smul.addr %s656, 4
        %s658 = scalar_lea.vmem %s1, %s657
        %p659 = pneg %p74
        %p660 = pneg %p71
        %p661 = pneg %p95
        %p662 = pneg %p92
        %p663 = pneg %p116
        %p664 = pneg %p113
        %p665 = pneg %p137
        %p666 = pneg %p134
        %p667 = pneg %p158
        %p668 = pneg %p155
        %p669 = pneg %p179
        %p670 = pneg %p176
        %p671 = pneg %p200
        %p672 = pneg %p197
        %p673 = pneg %p226
        %p674 = pneg %p223
        %s675 = smul.u32 32, %s27
        %p676 = scmp.lt.s32.totalorder %s675, 63
        %s677 = scalar_select %p676, %s675, 63
        %s678 = scalar_lea.vmem %s8, %s677
        %p679 = pneg %p252
        %p680 = pneg %p249
        %s681 = smul.u32 4, %s27
        %p682 = scmp.lt.s32.totalorder %s681, 7
        %s683 = scalar_select %p682, %s681, 7
        %s684 = smul.addr %s683, 8
        %s685 = scalar_lea.vmem %s9, %s684
        %p686 = pneg %p278
        %p687 = pneg %p275
        %s688 = sand.u32 %s265, 1
        %s689 = scalar_lea.sflag [#allocation5], %s688
        %s690 = sand.u32 %s265, 1
        %s691 = smul.addr %s690, 32
        %s692 = scalar_lea.vmem [#allocation7], %s691
        %s693 = smul.u32 4, %s27
        %s694 = smul.u32 32, %s27
        %p695 = scmp.lt.s32.totalorder %s694, 63
        %s696 = scalar_select %p695, %s694, 63
        %s697 = smul.addr %s696, 4
        %s698 = smul.addr %s697, 4
        %s699 = scalar_lea.vmem %s1, %s698
        %s700 = smul.u32 32, %s27
        %s701 = smul.u32 32, %s27
        %p702 = scmp.lt.s32.totalorder %s701, 63
        %s703 = scalar_select %p702, %s701, 63
        %s704 = scalar_lea.vmem %s8, %s703
        %s705 = smul.u32 32, %s27
        %s706 = smul.u32 4, %s27
        %p707 = scmp.lt.s32.totalorder %s706, 7
        %s708 = scalar_select %p707, %s706, 7
        %s709 = smul.addr %s708, 8
        %s710 = scalar_lea.vmem %s9, %s709
        %s711 = smul.u32 4, %s27
        %s712 = smul.u32 4, %s27
        %v714 = vld [vmem:[%s637] sm:$0xff]
        %v715 = vld [vmem:[%s637 + $0x8] sm:$0xff]
        %v716 = vld [vmem:[%s637 + $0x10] sm:$0xff]
        %v717 = vld [vmem:[%s637 + $0x18] sm:$0xff]
        %s718 = sld [smem:[#allocation4]]
        %v719 = vstv %s718
        %v720 = vmul.f32 %v719, %v714
        %v721 = vmul.f32 %v719, %v715
        %v722 = vmul.f32 %v719, %v716
        %v723 = vmul.f32 %v719, %v717
        %v724 = vadd.f32 %v720, 0.0
        %v725 = vadd.f32 %v721, 0.0
        %v726 = vadd.f32 %v722, 0.0
        %v727 = vadd.f32 %v723, 0.0
        %s728 = scalar_lea.vmem %s637, 32 [#allocation3]
        %v729 = vld [vmem:[%s728] sm:$0xff]
        %v730 = vld [vmem:[%s728 + $0x8] sm:$0xff]
        %v731 = vld [vmem:[%s728 + $0x10] sm:$0xff]
        %v732 = vld [vmem:[%s728 + $0x18] sm:$0xff]
        %s733 = sld [smem:[#allocation4 + $0x1]]
        %v734 = vstv %s733
        %v735 = vmul.f32 %v734, %v729
        %v736 = vmul.f32 %v734, %v730
        %v737 = vmul.f32 %v734, %v731
        %v738 = vmul.f32 %v734, %v732
        %v739 = vadd.f32 %v724, %v735
        %v740 = vadd.f32 %v725, %v736
        %v741 = vadd.f32 %v726, %v737
        %v742 = vadd.f32 %v727, %v738
        %s743 = scalar_lea.vmem %s637, 64 [#allocation3]
        %v744 = vld [vmem:[%s743] sm:$0xff]
        %v745 = vld [vmem:[%s743 + $0x8] sm:$0xff]
        %v746 = vld [vmem:[%s743 + $0x10] sm:$0xff]
        %v747 = vld [vmem:[%s743 + $0x18] sm:$0xff]
        %s748 = sld [smem:[#allocation4 + $0x2]]
        %v749 = vstv %s748
        %v750 = vmul.f32 %v749, %v744
        %v751 = vmul.f32 %v749, %v745
        %v752 = vmul.f32 %v749, %v746
        %v753 = vmul.f32 %v749, %v747
        %v754 = vadd.f32 %v739, %v750
        %v755 = vadd.f32 %v740, %v751
        %v756 = vadd.f32 %v741, %v752
        %v757 = vadd.f32 %v742, %v753
        %s758 = scalar_lea.vmem %s637, 96 [#allocation3]
        %v759 = vld [vmem:[%s758] sm:$0xff]
        %v760 = vld [vmem:[%s758 + $0x8] sm:$0xff]
        %v761 = vld [vmem:[%s758 + $0x10] sm:$0xff]
        %v762 = vld [vmem:[%s758 + $0x18] sm:$0xff]
        %s763 = sld [smem:[#allocation4 + $0x3]]
        %v764 = vstv %s763
        %v765 = vmul.f32 %v764, %v759
        %v766 = vmul.f32 %v764, %v760
        %v767 = vmul.f32 %v764, %v761
        %v768 = vmul.f32 %v764, %v762
        %v769 = vadd.f32 %v754, %v765
        %v770 = vadd.f32 %v755, %v766
        %v771 = vadd.f32 %v756, %v767
        %v772 = vadd.f32 %v757, %v768
        %s773 = scalar_lea.vmem %s637, 128 [#allocation3]
        %v774 = vld [vmem:[%s773] sm:$0xff]
        %v775 = vld [vmem:[%s773 + $0x8] sm:$0xff]
        %v776 = vld [vmem:[%s773 + $0x10] sm:$0xff]
        %v777 = vld [vmem:[%s773 + $0x18] sm:$0xff]
        %s778 = sld [smem:[#allocation4 + $0x4]]
        %v779 = vstv %s778
        %v780 = vmul.f32 %v779, %v774
        %v781 = vmul.f32 %v779, %v775
        %v782 = vmul.f32 %v779, %v776
        %v783 = vmul.f32 %v779, %v777
        %v784 = vadd.f32 %v769, %v780
        %v785 = vadd.f32 %v770, %v781
        %v786 = vadd.f32 %v771, %v782
        %v787 = vadd.f32 %v772, %v783
        %s788 = scalar_lea.vmem %s637, 160 [#allocation3]
        %v789 = vld [vmem:[%s788] sm:$0xff]
        %v790 = vld [vmem:[%s788 + $0x8] sm:$0xff]
        %v791 = vld [vmem:[%s788 + $0x10] sm:$0xff]
        %v792 = vld [vmem:[%s788 + $0x18] sm:$0xff]
        %s793 = sld [smem:[#allocation4 + $0x5]]
        %v794 = vstv %s793
        %v795 = vmul.f32 %v794, %v789
        %v796 = vmul.f32 %v794, %v790
        %v797 = vmul.f32 %v794, %v791
        %v798 = vmul.f32 %v794, %v792
        %v799 = vadd.f32 %v784, %v795
        %v800 = vadd.f32 %v785, %v796
        %v801 = vadd.f32 %v786, %v797
        %v802 = vadd.f32 %v787, %v798
        %s803 = scalar_lea.vmem %s637, 192 [#allocation3]
        %v804 = vld [vmem:[%s803] sm:$0xff]
        %v805 = vld [vmem:[%s803 + $0x8] sm:$0xff]
        %v806 = vld [vmem:[%s803 + $0x10] sm:$0xff]
        %v807 = vld [vmem:[%s803 + $0x18] sm:$0xff]
        %s808 = sld [smem:[#allocation4 + $0x6]]
        %v809 = vstv %s808
        %v810 = vmul.f32 %v809, %v804
        %v811 = vmul.f32 %v809, %v805
        %v812 = vmul.f32 %v809, %v806
        %v813 = vmul.f32 %v809, %v807
        %v814 = vadd.f32 %v799, %v810
        %v815 = vadd.f32 %v800, %v811
        %v816 = vadd.f32 %v801, %v812
        %v817 = vadd.f32 %v802, %v813
        %s818 = scalar_lea.vmem %s637, 224 [#allocation3]
        %v819 = vld [vmem:[%s818] sm:$0xff]
        %v820 = vld [vmem:[%s818 + $0x8] sm:$0xff]
        %v821 = vld [vmem:[%s818 + $0x10] sm:$0xff]
        %v822 = vld [vmem:[%s818 + $0x18] sm:$0xff]
        %s823 = sld [smem:[#allocation4 + $0x7]]
        %v824 = vstv %s823
        %v825 = vmul.f32 %v824, %v819
        %v826 = vmul.f32 %v824, %v820
        %v827 = vmul.f32 %v824, %v821
        %v828 = vmul.f32 %v824, %v822
        %v829 = vadd.f32 %v814, %v825
        %v830 = vadd.f32 %v815, %v826
        %v831 = vadd.f32 %v816, %v827
        %v832 = vadd.f32 %v817, %v828
        %s833 = scalar_lea.vmem %s637, 256 [#allocation3]
        %v834 = vld [vmem:[%s833] sm:$0xff]
        %v835 = vld [vmem:[%s833 + $0x8] sm:$0xff]
        %v836 = vld [vmem:[%s833 + $0x10] sm:$0xff]
        %v837 = vld [vmem:[%s833 + $0x18] sm:$0xff]
        %s838 = sld [smem:[#allocation4 + $0x8]]
        %v839 = vstv %s838
        %v840 = vmul.f32 %v839, %v834
        %v841 = vmul.f32 %v839, %v835
        %v842 = vmul.f32 %v839, %v836
        %v843 = vmul.f32 %v839, %v837
        %v844 = vadd.f32 %v829, %v840
        %v845 = vadd.f32 %v830, %v841
        %v846 = vadd.f32 %v831, %v842
        %v847 = vadd.f32 %v832, %v843
        %s848 = scalar_lea.vmem %s637, 288 [#allocation3]
        %v849 = vld [vmem:[%s848] sm:$0xff]
        %v850 = vld [vmem:[%s848 + $0x8] sm:$0xff]
        %v851 = vld [vmem:[%s848 + $0x10] sm:$0xff]
        %v852 = vld [vmem:[%s848 + $0x18] sm:$0xff]
        %s853 = sld [smem:[#allocation4 + $0x9]]
        %v854 = vstv %s853
        %v855 = vmul.f32 %v854, %v849
        %v856 = vmul.f32 %v854, %v850
        %v857 = vmul.f32 %v854, %v851
        %v858 = vmul.f32 %v854, %v852
        %v859 = vadd.f32 %v844, %v855
        %v860 = vadd.f32 %v845, %v856
        %v861 = vadd.f32 %v846, %v857
        %v862 = vadd.f32 %v847, %v858
        %s863 = scalar_lea.vmem %s637, 320 [#allocation3]
        %v864 = vld [vmem:[%s863] sm:$0xff]
        %v865 = vld [vmem:[%s863 + $0x8] sm:$0xff]
        %v866 = vld [vmem:[%s863 + $0x10] sm:$0xff]
        %v867 = vld [vmem:[%s863 + $0x18] sm:$0xff]
        %s868 = sld [smem:[#allocation4 + $0xa]]
        %v869 = vstv %s868
        %v870 = vmul.f32 %v869, %v864
        %v871 = vmul.f32 %v869, %v865
        %v872 = vmul.f32 %v869, %v866
        %v873 = vmul.f32 %v869, %v867
        %v874 = vadd.f32 %v859, %v870
        %v875 = vadd.f32 %v860, %v871
        %v876 = vadd.f32 %v861, %v872
        %v877 = vadd.f32 %v862, %v873
        %s878 = scalar_lea.vmem %s637, 352 [#allocation3]
        %v879 = vld [vmem:[%s878] sm:$0xff]
        %v880 = vld [vmem:[%s878 + $0x8] sm:$0xff]
        %v881 = vld [vmem:[%s878 + $0x10] sm:$0xff]
        %v882 = vld [vmem:[%s878 + $0x18] sm:$0xff]
        %s883 = sld [smem:[#allocation4 + $0xb]]
        %v884 = vstv %s883
        %v885 = vmul.f32 %v884, %v879
        %v886 = vmul.f32 %v884, %v880
        %v887 = vmul.f32 %v884, %v881
        %v888 = vmul.f32 %v884, %v882
        %v889 = vadd.f32 %v874, %v885
        %v890 = vadd.f32 %v875, %v886
        %v891 = vadd.f32 %v876, %v887
        %v892 = vadd.f32 %v877, %v888
        %s893 = scalar_lea.vmem %s637, 384 [#allocation3]
        %v894 = vld [vmem:[%s893] sm:$0xff]
        %v895 = vld [vmem:[%s893 + $0x8] sm:$0xff]
        %v896 = vld [vmem:[%s893 + $0x10] sm:$0xff]
        %v897 = vld [vmem:[%s893 + $0x18] sm:$0xff]
        %s898 = sld [smem:[#allocation4 + $0xc]]
        %v899 = vstv %s898
        %v900 = vmul.f32 %v899, %v894
        %v901 = vmul.f32 %v899, %v895
        %v902 = vmul.f32 %v899, %v896
        %v903 = vmul.f32 %v899, %v897
        %v904 = vadd.f32 %v889, %v900
        %v905 = vadd.f32 %v890, %v901
        %v906 = vadd.f32 %v891, %v902
        %v907 = vadd.f32 %v892, %v903
        %s908 = scalar_lea.vmem %s637, 416 [#allocation3]
        %v909 = vld [vmem:[%s908] sm:$0xff]
        %v910 = vld [vmem:[%s908 + $0x8] sm:$0xff]
        %v911 = vld [vmem:[%s908 + $0x10] sm:$0xff]
        %v912 = vld [vmem:[%s908 + $0x18] sm:$0xff]
        %s913 = sld [smem:[#allocation4 + $0xd]]
        %v914 = vstv %s913
        %v915 = vmul.f32 %v914, %v909
        %v916 = vmul.f32 %v914, %v910
        %v917 = vmul.f32 %v914, %v911
        %v918 = vmul.f32 %v914, %v912
        %v919 = vadd.f32 %v904, %v915
        %v920 = vadd.f32 %v905, %v916
        %v921 = vadd.f32 %v906, %v917
        %v922 = vadd.f32 %v907, %v918
        %s923 = scalar_lea.vmem %s637, 448 [#allocation3]
        %v924 = vld [vmem:[%s923] sm:$0xff]
        %v925 = vld [vmem:[%s923 + $0x8] sm:$0xff]
        %v926 = vld [vmem:[%s923 + $0x10] sm:$0xff]
        %v927 = vld [vmem:[%s923 + $0x18] sm:$0xff]
        %s928 = sld [smem:[#allocation4 + $0xe]]
        %v929 = vstv %s928
        %v930 = vmul.f32 %v929, %v924
        %v931 = vmul.f32 %v929, %v925
        %v932 = vmul.f32 %v929, %v926
        %v933 = vmul.f32 %v929, %v927
        %v934 = vadd.f32 %v919, %v930
        %v935 = vadd.f32 %v920, %v931
        %v936 = vadd.f32 %v921, %v932
        %v937 = vadd.f32 %v922, %v933
        %s938 = scalar_lea.vmem %s637, 480 [#allocation3]
        %v939 = vld [vmem:[%s938] sm:$0xff]
        %v940 = vld [vmem:[%s938 + $0x8] sm:$0xff]
        %v941 = vld [vmem:[%s938 + $0x10] sm:$0xff]
        %v942 = vld [vmem:[%s938 + $0x18] sm:$0xff]
        %s943 = sld [smem:[#allocation4 + $0xf]]
        %v944 = vstv %s943
        %v945 = vmul.f32 %v944, %v939
        %v946 = vmul.f32 %v944, %v940
        %v947 = vmul.f32 %v944, %v941
        %v948 = vmul.f32 %v944, %v942
        %v949 = vadd.f32 %v934, %v945
        %v950 = vadd.f32 %v935, %v946
        %v951 = vadd.f32 %v936, %v947
        %v952 = vadd.f32 %v937, %v948
        %v953 = vlaneseq
        %v954 = vand.u32 %v953, 127
        %s955 = sld [smem:[#allocation2]]
        %v956 = vstv %s955
        %v957 = vadd.f32 %v949, %v956
        %v958 = vadd.f32 %v950, %v956
        %v959 = vadd.f32 %v951, %v956
        %v960 = vadd.f32 %v952, %v956
        %v965 = vrot.slane %v957, 1
        %v966 = vrot.slane %v957, 2
        %v967 = vrot.slane %v957, 3
        %v968 = vrot.slane %v957, 4
        %v969 = vrot.slane %v957, 5
        %v970 = vrot.slane %v957, 6
        %v971 = vrot.slane %v957, 7
        %v972 = vrot.slane %v958, 1
        %v973 = vrot.slane %v958, 2
        %v974 = vrot.slane %v958, 3
        %v975 = vrot.slane %v958, 4
        %v976 = vrot.slane %v958, 5
        %v977 = vrot.slane %v958, 6
        %v978 = vrot.slane %v958, 7
        %v979 = vrot.slane %v959, 1
        %v980 = vrot.slane %v959, 2
        %v981 = vrot.slane %v959, 3
        %v982 = vrot.slane %v959, 4
        %v983 = vrot.slane %v959, 5
        %v984 = vrot.slane %v959, 6
        %v985 = vrot.slane %v959, 7
        %v986 = vrot.slane %v960, 1
        %v987 = vrot.slane %v960, 2
        %v988 = vrot.slane %v960, 3
        %v989 = vrot.slane %v960, 4
        %v990 = vrot.slane %v960, 5
        %v991 = vrot.slane %v960, 6
        %v992 = vrot.slane %v960, 7
        %vm1021 = vcmask 516096
        %1022 = vst.msk [vmem:[%s704] sm:$0x1] %vm1021, %v957
        %1023 = vst.msk [vmem:[%s704 + $0x1] sm:$0x1] %vm1021, %v965
        %1024 = vst.msk [vmem:[%s704 + $0x2] sm:$0x1] %vm1021, %v966
        %1025 = vst.msk [vmem:[%s704 + $0x3] sm:$0x1] %vm1021, %v967
        %1026 = vst.msk [vmem:[%s704 + $0x4] sm:$0x1] %vm1021, %v968
        %1027 = vst.msk [vmem:[%s704 + $0x5] sm:$0x1] %vm1021, %v969
        %1028 = vst.msk [vmem:[%s704 + $0x6] sm:$0x1] %vm1021, %v970
        %1029 = vst.msk [vmem:[%s704 + $0x7] sm:$0x1] %vm1021, %v971
        %1030 = vst.msk [vmem:[%s704 + $0x8] sm:$0x1] %vm1021, %v958
        %1031 = vst.msk [vmem:[%s704 + $0x9] sm:$0x1] %vm1021, %v972
        %1032 = vst.msk [vmem:[%s704 + $0xa] sm:$0x1] %vm1021, %v973
        %1033 = vst.msk [vmem:[%s704 + $0xb] sm:$0x1] %vm1021, %v974
        %1034 = vst.msk [vmem:[%s704 + $0xc] sm:$0x1] %vm1021, %v975
        %1035 = vst.msk [vmem:[%s704 + $0xd] sm:$0x1] %vm1021, %v976
        %1036 = vst.msk [vmem:[%s704 + $0xe] sm:$0x1] %vm1021, %v977
        %1037 = vst.msk [vmem:[%s704 + $0xf] sm:$0x1] %vm1021, %v978
        %1038 = vst.msk [vmem:[%s704 + $0x10] sm:$0x1] %vm1021, %v959
        %1039 = vst.msk [vmem:[%s704 + $0x11] sm:$0x1] %vm1021, %v979
        %1040 = vst.msk [vmem:[%s704 + $0x12] sm:$0x1] %vm1021, %v980
        %1041 = vst.msk [vmem:[%s704 + $0x13] sm:$0x1] %vm1021, %v981
        %1042 = vst.msk [vmem:[%s704 + $0x14] sm:$0x1] %vm1021, %v982
        %1043 = vst.msk [vmem:[%s704 + $0x15] sm:$0x1] %vm1021, %v983
        %1044 = vst.msk [vmem:[%s704 + $0x16] sm:$0x1] %vm1021, %v984
        %1045 = vst.msk [vmem:[%s704 + $0x17] sm:$0x1] %vm1021, %v985
        %1046 = vst.msk [vmem:[%s704 + $0x18] sm:$0x1] %vm1021, %v960
        %1047 = vst.msk [vmem:[%s704 + $0x19] sm:$0x1] %vm1021, %v986
        %1048 = vst.msk [vmem:[%s704 + $0x1a] sm:$0x1] %vm1021, %v987
        %1049 = vst.msk [vmem:[%s704 + $0x1b] sm:$0x1] %vm1021, %v988
        %1050 = vst.msk [vmem:[%s704 + $0x1c] sm:$0x1] %vm1021, %v989
        %1051 = vst.msk [vmem:[%s704 + $0x1d] sm:$0x1] %vm1021, %v990
        %1052 = vst.msk [vmem:[%s704 + $0x1e] sm:$0x1] %vm1021, %v991
        %1053 = vst.msk [vmem:[%s704 + $0x1f] sm:$0x1] %vm1021, %v992
        %vm1054 = vcmask 523264
        %v1055 = vsel %vm1054, %v957, -inf
        %1056 = vmax.xlane.f32.xlu0 %v1055
        %v1057 = vpop.xlane.xlu0 %1056
        %v1058 = vsel %vm1054, %v958, -inf
        %1059 = vmax.xlane.f32.xlu0 %v1058
        %v1060 = vpop.xlane.xlu0 %1059
        %v1061 = vsel %vm1054, %v959, -inf
        %1062 = vmax.xlane.f32.xlu0 %v1061
        %v1063 = vpop.xlane.xlu0 %1062
        %v1064 = vsel %vm1054, %v960, -inf
        %1065 = vmax.xlane.f32.xlu0 %v1064
        %v1066 = vpop.xlane.xlu0 %1065
        %vm1067 = vcmp.eq.f32.partialorder %v957, %v1057
        %vm1068 = vcmp.eq.f32.partialorder %v958, %v1060
        %vm1069 = vcmp.eq.f32.partialorder %v959, %v1063
        %vm1070 = vcmp.eq.f32.partialorder %v960, %v1066
        %v1071 = vsel %vm1067, %v954, 64
        %v1072 = vsel %vm1068, %v954, 64
        %v1073 = vsel %vm1069, %v954, 64
        %v1074 = vsel %vm1070, %v954, 64
        %v1075 = vsel %vm1054, %v1071, 2147483647
        %v1076 = vand.u32 %v1075, 65535
        %v1077 = vshra.s32 %v1075, 16
        %v1078 = vcvt.s32.f32 %v1076
        %v1079 = vcvt.s32.f32 %v1077
        %1080 = vmin.xlane.f32.xlu0 %v1079
        %v1081 = vpop.xlane.xlu0 %1080
        %vm1082 = vcmp.eq.f32.partialorder %v1079, %v1081
        %v1083 = vsel %vm1082, %v1078, inf
        %1084 = vmin.xlane.f32.xlu0 %v1083
        %v1085 = vpop.xlane.xlu0 %1084
        %v1086 = vcvt.f32.s32 %v1085
        %v1087 = vcvt.f32.s32 %v1081
        %v1088 = vshll.u32 %v1087, 16
        %v1089 = vadd.s32 %v1088, %v1086
        %v1090 = vsel %vm1054, %v1072, 2147483647
        %v1091 = vand.u32 %v1090, 65535
        %v1092 = vshra.s32 %v1090, 16
        %v1093 = vcvt.s32.f32 %v1091
        %v1094 = vcvt.s32.f32 %v1092
        %1095 = vmin.xlane.f32.xlu0 %v1094
        %v1096 = vpop.xlane.xlu0 %1095
        %vm1097 = vcmp.eq.f32.partialorder %v1094, %v1096
        %v1098 = vsel %vm1097, %v1093, inf
        %1099 = vmin.xlane.f32.xlu0 %v1098
        %v1100 = vpop.xlane.xlu0 %1099
        %v1101 = vcvt.f32.s32 %v1100
        %v1102 = vcvt.f32.s32 %v1096
        %v1103 = vshll.u32 %v1102, 16
        %v1104 = vadd.s32 %v1103, %v1101
        %v1105 = vsel %vm1054, %v1073, 2147483647
        %v1106 = vand.u32 %v1105, 65535
        %v1107 = vshra.s32 %v1105, 16
        %v1108 = vcvt.s32.f32 %v1106
        %v1109 = vcvt.s32.f32 %v1107
        %1110 = vmin.xlane.f32.xlu0 %v1109
        %v1111 = vpop.xlane.xlu0 %1110
        %vm1112 = vcmp.eq.f32.partialorder %v1109, %v1111
        %v1113 = vsel %vm1112, %v1108, inf
        %1114 = vmin.xlane.f32.xlu0 %v1113
        %v1115 = vpop.xlane.xlu0 %1114
        %v1116 = vcvt.f32.s32 %v1115
        %v1117 = vcvt.f32.s32 %v1111
        %v1118 = vshll.u32 %v1117, 16
        %v1119 = vadd.s32 %v1118, %v1116
        %v1120 = vsel %vm1054, %v1074, 2147483647
        %v1121 = vand.u32 %v1120, 65535
        %v1122 = vshra.s32 %v1120, 16
        %v1123 = vcvt.s32.f32 %v1121
        %v1124 = vcvt.s32.f32 %v1122
        %1125 = vmin.xlane.f32.xlu0 %v1124
        %v1126 = vpop.xlane.xlu0 %1125
        %vm1127 = vcmp.eq.f32.partialorder %v1124, %v1126
        %v1128 = vsel %vm1127, %v1123, inf
        %1129 = vmin.xlane.f32.xlu0 %v1128
        %v1130 = vpop.xlane.xlu0 %1129
        %v1131 = vcvt.f32.s32 %v1130
        %v1132 = vcvt.f32.s32 %v1126
        %v1133 = vshll.u32 %v1132, 16
        %v1134 = vadd.s32 %v1133, %v1131
        %v1135 = vadd.f32 %v1057, 0.0
        %v1136 = vadd.f32 %v1060, 0.0
        %v1137 = vadd.f32 %v1063, 0.0
        %v1138 = vadd.f32 %v1066, 0.0
        %vm1139 = vcmp.eq.s32.totalorder %v954, %v1089
        %vm1140 = vcmp.eq.s32.totalorder %v954, %v1104
        %vm1141 = vcmp.eq.s32.totalorder %v954, %v1119
        %vm1142 = vcmp.eq.s32.totalorder %v954, %v1134
        %v1143 = vsel %vm1139, -inf, %v957
        %v1144 = vsel %vm1140, -inf, %v958
        %v1145 = vsel %vm1141, -inf, %v959
        %v1146 = vsel %vm1142, -inf, %v960
        %v1147 = vsel %vm1054, %v1143, -inf
        %1148 = vmax.xlane.f32.xlu0 %v1147
        %v1149 = vpop.xlane.xlu0 %1148
        %v1150 = vsel %vm1054, %v1144, -inf
        %1151 = vmax.xlane.f32.xlu0 %v1150
        %v1152 = vpop.xlane.xlu0 %1151
        %v1153 = vsel %vm1054, %v1145, -inf
        %1154 = vmax.xlane.f32.xlu0 %v1153
        %v1155 = vpop.xlane.xlu0 %1154
        %v1156 = vsel %vm1054, %v1146, -inf
        %1157 = vmax.xlane.f32.xlu0 %v1156
        %v1158 = vpop.xlane.xlu0 %1157
        %vm1159 = vcmp.eq.f32.partialorder %v1143, %v1149
        %vm1160 = vcmp.eq.f32.partialorder %v1144, %v1152
        %vm1161 = vcmp.eq.f32.partialorder %v1145, %v1155
        %vm1162 = vcmp.eq.f32.partialorder %v1146, %v1158
        %v1163 = vsel %vm1159, %v954, 64
        %v1164 = vsel %vm1160, %v954, 64
        %v1165 = vsel %vm1161, %v954, 64
        %v1166 = vsel %vm1162, %v954, 64
        %v1167 = vsel %vm1054, %v1163, 2147483647
        %v1168 = vand.u32 %v1167, 65535
        %v1169 = vshra.s32 %v1167, 16
        %v1170 = vcvt.s32.f32 %v1168
        %v1171 = vcvt.s32.f32 %v1169
        %1172 = vmin.xlane.f32.xlu0 %v1171
        %v1173 = vpop.xlane.xlu0 %1172
        %vm1174 = vcmp.eq.f32.partialorder %v1171, %v1173
        %v1175 = vsel %vm1174, %v1170, inf
        %1176 = vmin.xlane.f32.xlu0 %v1175
        %v1177 = vpop.xlane.xlu0 %1176
        %v1178 = vcvt.f32.s32 %v1177
        %v1179 = vcvt.f32.s32 %v1173
        %v1180 = vshll.u32 %v1179, 16
        %v1181 = vadd.s32 %v1180, %v1178
        %v1182 = vsel %vm1054, %v1164, 2147483647
        %v1183 = vand.u32 %v1182, 65535
        %v1184 = vshra.s32 %v1182, 16
        %v1185 = vcvt.s32.f32 %v1183
        %v1186 = vcvt.s32.f32 %v1184
        %1187 = vmin.xlane.f32.xlu0 %v1186
        %v1188 = vpop.xlane.xlu0 %1187
        %vm1189 = vcmp.eq.f32.partialorder %v1186, %v1188
        %v1190 = vsel %vm1189, %v1185, inf
        %1191 = vmin.xlane.f32.xlu0 %v1190
        %v1192 = vpop.xlane.xlu0 %1191
        %v1193 = vcvt.f32.s32 %v1192
        %v1194 = vcvt.f32.s32 %v1188
        %v1195 = vshll.u32 %v1194, 16
        %v1196 = vadd.s32 %v1195, %v1193
        %v1197 = vsel %vm1054, %v1165, 2147483647
        %v1198 = vand.u32 %v1197, 65535
        %v1199 = vshra.s32 %v1197, 16
        %v1200 = vcvt.s32.f32 %v1198
        %v1201 = vcvt.s32.f32 %v1199
        %1202 = vmin.xlane.f32.xlu0 %v1201
        %v1203 = vpop.xlane.xlu0 %1202
        %vm1204 = vcmp.eq.f32.partialorder %v1201, %v1203
        %v1205 = vsel %vm1204, %v1200, inf
        %1206 = vmin.xlane.f32.xlu0 %v1205
        %v1207 = vpop.xlane.xlu0 %1206
        %v1208 = vcvt.f32.s32 %v1207
        %v1209 = vcvt.f32.s32 %v1203
        %v1210 = vshll.u32 %v1209, 16
        %v1211 = vadd.s32 %v1210, %v1208
        %v1212 = vsel %vm1054, %v1166, 2147483647
        %v1213 = vand.u32 %v1212, 65535
        %v1214 = vshra.s32 %v1212, 16
        %v1215 = vcvt.s32.f32 %v1213
        %v1216 = vcvt.s32.f32 %v1214
        %1217 = vmin.xlane.f32.xlu0 %v1216
        %v1218 = vpop.xlane.xlu0 %1217
        %vm1219 = vcmp.eq.f32.partialorder %v1216, %v1218
        %v1220 = vsel %vm1219, %v1215, inf
        %1221 = vmin.xlane.f32.xlu0 %v1220
        %v1222 = vpop.xlane.xlu0 %1221
        %v1223 = vcvt.f32.s32 %v1222
        %v1224 = vcvt.f32.s32 %v1218
        %v1225 = vshll.u32 %v1224, 16
        %v1226 = vadd.s32 %v1225, %v1223
        %v1227 = vadd.f32 %v1135, %v1149
        %v1228 = vadd.f32 %v1136, %v1152
        %v1229 = vadd.f32 %v1137, %v1155
        %v1230 = vadd.f32 %v1138, %v1158
        %vm1231 = vcmp.eq.s32.totalorder %v954, %v1181
        %vm1232 = vcmp.eq.s32.totalorder %v954, %v1196
        %vm1233 = vcmp.eq.s32.totalorder %v954, %v1211
        %vm1234 = vcmp.eq.s32.totalorder %v954, %v1226
        %v1235 = vsel %vm1231, -inf, %v1143
        %v1236 = vsel %vm1232, -inf, %v1144
        %v1237 = vsel %vm1233, -inf, %v1145
        %v1238 = vsel %vm1234, -inf, %v1146
        %v1239 = vsel %vm1054, %v1235, -inf
        %1240 = vmax.xlane.f32.xlu0 %v1239
        %v1241 = vpop.xlane.xlu0 %1240
        %v1242 = vsel %vm1054, %v1236, -inf
        %1243 = vmax.xlane.f32.xlu0 %v1242
        %v1244 = vpop.xlane.xlu0 %1243
        %v1245 = vsel %vm1054, %v1237, -inf
        %1246 = vmax.xlane.f32.xlu0 %v1245
        %v1247 = vpop.xlane.xlu0 %1246
        %v1248 = vsel %vm1054, %v1238, -inf
        %1249 = vmax.xlane.f32.xlu0 %v1248
        %v1250 = vpop.xlane.xlu0 %1249
        %v1251 = vadd.f32 %v1227, %v1241
        %v1252 = vadd.f32 %v1228, %v1244
        %v1253 = vadd.f32 %v1229, %v1247
        %v1254 = vadd.f32 %v1230, %v1250
        %v1255 = vmul.f32 %v1251, 0.33333334
        %v1256 = vmul.f32 %v1252, 0.33333334
        %v1257 = vmul.f32 %v1253, 0.33333334
        %v1258 = vmul.f32 %v1254, 0.33333334
        %vm1259 = vcmask 7168
        %1260 = vst.msk [vmem:[%s710] sm:$0xff] %vm1259, %v1255
        %1261 = vst.msk [vmem:[%s710 + $0x8] sm:$0xff] %vm1259, %v1256
        %1262 = vst.msk [vmem:[%s710 + $0x10] sm:$0xff] %vm1259, %v1257
        %1263 = vst.msk [vmem:[%s710 + $0x18] sm:$0xff] %vm1259, %v1258
        %v1264 = vld [vmem:[%s699] sm:$0xf]
        %v1265 = vld [vmem:[%s699 + $0x4] sm:$0xf]
        %v1266 = vld [vmem:[%s699 + $0x8] sm:$0xf]
        %v1267 = vld [vmem:[%s699 + $0xc] sm:$0xf]
        %v1268 = vld [vmem:[%s699 + $0x10] sm:$0xf]
        %v1269 = vld [vmem:[%s699 + $0x14] sm:$0xf]
        %v1270 = vld [vmem:[%s699 + $0x18] sm:$0xf]
        %v1271 = vld [vmem:[%s699 + $0x1c] sm:$0xf]
        %v1272 = vld [vmem:[%s699 + $0x20] sm:$0xf]
        %v1273 = vld [vmem:[%s699 + $0x24] sm:$0xf]
        %v1274 = vld [vmem:[%s699 + $0x28] sm:$0xf]
        %v1275 = vld [vmem:[%s699 + $0x2c] sm:$0xf]
        %v1276 = vld [vmem:[%s699 + $0x30] sm:$0xf]
        %v1277 = vld [vmem:[%s699 + $0x34] sm:$0xf]
        %v1278 = vld [vmem:[%s699 + $0x38] sm:$0xf]
        %v1279 = vld [vmem:[%s699 + $0x3c] sm:$0xf]
        %v1280 = vld [vmem:[%s699 + $0x40] sm:$0xf]
        %v1281 = vld [vmem:[%s699 + $0x44] sm:$0xf]
        %v1282 = vld [vmem:[%s699 + $0x48] sm:$0xf]
        %v1283 = vld [vmem:[%s699 + $0x4c] sm:$0xf]
        %v1284 = vld [vmem:[%s699 + $0x50] sm:$0xf]
        %v1285 = vld [vmem:[%s699 + $0x54] sm:$0xf]
        %v1286 = vld [vmem:[%s699 + $0x58] sm:$0xf]
        %v1287 = vld [vmem:[%s699 + $0x5c] sm:$0xf]
        %v1288 = vld [vmem:[%s699 + $0x60] sm:$0xf]
        %v1289 = vld [vmem:[%s699 + $0x64] sm:$0xf]
        %v1290 = vld [vmem:[%s699 + $0x68] sm:$0xf]
        %v1291 = vld [vmem:[%s699 + $0x6c] sm:$0xf]
        %v1292 = vld [vmem:[%s699 + $0x70] sm:$0xf]
        %v1293 = vld [vmem:[%s699 + $0x74] sm:$0xf]
        %v1294 = vld [vmem:[%s699 + $0x78] sm:$0xf]
        %v1295 = vld [vmem:[%s699 + $0x7c] sm:$0xf]
        %v1296 = vld [vmem:[%s699 + $0x80] sm:$0xf]
        %v1297 = vld [vmem:[%s699 + $0x84] sm:$0xf]
        %v1298 = vld [vmem:[%s699 + $0x88] sm:$0xf]
        %v1299 = vld [vmem:[%s699 + $0x8c] sm:$0xf]
        %v1300 = vld [vmem:[%s699 + $0x90] sm:$0xf]
        %v1301 = vld [vmem:[%s699 + $0x94] sm:$0xf]
        %v1302 = vld [vmem:[%s699 + $0x98] sm:$0xf]
        %v1303 = vld [vmem:[%s699 + $0x9c] sm:$0xf]
        %v1304 = vld [vmem:[%s699 + $0xa0] sm:$0xf]
        %v1305 = vld [vmem:[%s699 + $0xa4] sm:$0xf]
        %v1306 = vld [vmem:[%s699 + $0xa8] sm:$0xf]
        %v1307 = vld [vmem:[%s699 + $0xac] sm:$0xf]
        %v1308 = vld [vmem:[%s699 + $0xb0] sm:$0xf]
        %v1309 = vld [vmem:[%s699 + $0xb4] sm:$0xf]
        %v1310 = vld [vmem:[%s699 + $0xb8] sm:$0xf]
        %v1311 = vld [vmem:[%s699 + $0xbc] sm:$0xf]
        %v1312 = vld [vmem:[%s699 + $0xc0] sm:$0xf]
        %v1313 = vld [vmem:[%s699 + $0xc4] sm:$0xf]
        %v1314 = vld [vmem:[%s699 + $0xc8] sm:$0xf]
        %v1315 = vld [vmem:[%s699 + $0xcc] sm:$0xf]
        %v1316 = vld [vmem:[%s699 + $0xd0] sm:$0xf]
        %v1317 = vld [vmem:[%s699 + $0xd4] sm:$0xf]
        %v1318 = vld [vmem:[%s699 + $0xd8] sm:$0xf]
        %v1319 = vld [vmem:[%s699 + $0xdc] sm:$0xf]
        %v1320 = vld [vmem:[%s699 + $0xe0] sm:$0xf]
        %v1321 = vld [vmem:[%s699 + $0xe4] sm:$0xf]
        %v1322 = vld [vmem:[%s699 + $0xe8] sm:$0xf]
        %v1323 = vld [vmem:[%s699 + $0xec] sm:$0xf]
        %v1324 = vld [vmem:[%s699 + $0xf0] sm:$0xf]
        %v1325 = vld [vmem:[%s699 + $0xf4] sm:$0xf]
        %v1326 = vld [vmem:[%s699 + $0xf8] sm:$0xf]
        %v1327 = vld [vmem:[%s699 + $0xfc] sm:$0xf]
        %v1328 = vld [vmem:[%s699 + $0x100] sm:$0xf]
        %v1329 = vld [vmem:[%s699 + $0x104] sm:$0xf]
        %v1330 = vld [vmem:[%s699 + $0x108] sm:$0xf]
        %v1331 = vld [vmem:[%s699 + $0x10c] sm:$0xf]
        %v1332 = vld [vmem:[%s699 + $0x110] sm:$0xf]
        %v1333 = vld [vmem:[%s699 + $0x114] sm:$0xf]
        %v1334 = vld [vmem:[%s699 + $0x118] sm:$0xf]
        %v1335 = vld [vmem:[%s699 + $0x11c] sm:$0xf]
        %v1336 = vld [vmem:[%s699 + $0x120] sm:$0xf]
        %v1337 = vld [vmem:[%s699 + $0x124] sm:$0xf]
        %v1338 = vld [vmem:[%s699 + $0x128] sm:$0xf]
        %v1339 = vld [vmem:[%s699 + $0x12c] sm:$0xf]
        %v1340 = vld [vmem:[%s699 + $0x130] sm:$0xf]
        %v1341 = vld [vmem:[%s699 + $0x134] sm:$0xf]
        %v1342 = vld [vmem:[%s699 + $0x138] sm:$0xf]
        %v1343 = vld [vmem:[%s699 + $0x13c] sm:$0xf]
        %v1344 = vld [vmem:[%s699 + $0x140] sm:$0xf]
        %v1345 = vld [vmem:[%s699 + $0x144] sm:$0xf]
        %v1346 = vld [vmem:[%s699 + $0x148] sm:$0xf]
        %v1347 = vld [vmem:[%s699 + $0x14c] sm:$0xf]
        %v1348 = vld [vmem:[%s699 + $0x150] sm:$0xf]
        %v1349 = vld [vmem:[%s699 + $0x154] sm:$0xf]
        %v1350 = vld [vmem:[%s699 + $0x158] sm:$0xf]
        %v1351 = vld [vmem:[%s699 + $0x15c] sm:$0xf]
        %v1352 = vld [vmem:[%s699 + $0x160] sm:$0xf]
        %v1353 = vld [vmem:[%s699 + $0x164] sm:$0xf]
        %v1354 = vld [vmem:[%s699 + $0x168] sm:$0xf]
        %v1355 = vld [vmem:[%s699 + $0x16c] sm:$0xf]
        %v1356 = vld [vmem:[%s699 + $0x170] sm:$0xf]
        %v1357 = vld [vmem:[%s699 + $0x174] sm:$0xf]
        %v1358 = vld [vmem:[%s699 + $0x178] sm:$0xf]
        %v1359 = vld [vmem:[%s699 + $0x17c] sm:$0xf]
        %v1360 = vld [vmem:[%s699 + $0x180] sm:$0xf]
        %v1361 = vld [vmem:[%s699 + $0x184] sm:$0xf]
        %v1362 = vld [vmem:[%s699 + $0x188] sm:$0xf]
        %v1363 = vld [vmem:[%s699 + $0x18c] sm:$0xf]
        %v1364 = vld [vmem:[%s699 + $0x190] sm:$0xf]
        %v1365 = vld [vmem:[%s699 + $0x194] sm:$0xf]
        %v1366 = vld [vmem:[%s699 + $0x198] sm:$0xf]
        %v1367 = vld [vmem:[%s699 + $0x19c] sm:$0xf]
        %v1368 = vld [vmem:[%s699 + $0x1a0] sm:$0xf]
        %v1369 = vld [vmem:[%s699 + $0x1a4] sm:$0xf]
        %v1370 = vld [vmem:[%s699 + $0x1a8] sm:$0xf]
        %v1371 = vld [vmem:[%s699 + $0x1ac] sm:$0xf]
        %v1372 = vld [vmem:[%s699 + $0x1b0] sm:$0xf]
        %v1373 = vld [vmem:[%s699 + $0x1b4] sm:$0xf]
        %v1374 = vld [vmem:[%s699 + $0x1b8] sm:$0xf]
        %v1375 = vld [vmem:[%s699 + $0x1bc] sm:$0xf]
        %v1376 = vld [vmem:[%s699 + $0x1c0] sm:$0xf]
        %v1377 = vld [vmem:[%s699 + $0x1c4] sm:$0xf]
        %v1378 = vld [vmem:[%s699 + $0x1c8] sm:$0xf]
        %v1379 = vld [vmem:[%s699 + $0x1cc] sm:$0xf]
        %v1380 = vld [vmem:[%s699 + $0x1d0] sm:$0xf]
        %v1381 = vld [vmem:[%s699 + $0x1d4] sm:$0xf]
        %v1382 = vld [vmem:[%s699 + $0x1d8] sm:$0xf]
        %v1383 = vld [vmem:[%s699 + $0x1dc] sm:$0xf]
        %v1384 = vld [vmem:[%s699 + $0x1e0] sm:$0xf]
        %v1385 = vld [vmem:[%s699 + $0x1e4] sm:$0xf]
        %v1386 = vld [vmem:[%s699 + $0x1e8] sm:$0xf]
        %v1387 = vld [vmem:[%s699 + $0x1ec] sm:$0xf]
        %v1388 = vld [vmem:[%s699 + $0x1f0] sm:$0xf]
        %v1389 = vld [vmem:[%s699 + $0x1f4] sm:$0xf]
        %v1390 = vld [vmem:[%s699 + $0x1f8] sm:$0xf]
        %v1391 = vld [vmem:[%s699 + $0x1fc] sm:$0xf]
        %v1392 = vunpack.c.l.bf16 %v1264
        %v1393 = vunpack.c.l.bf16 %v1265
        %v1394 = vunpack.c.l.bf16 %v1266
        %v1395 = vunpack.c.l.bf16 %v1267
        %v1396 = vunpack.c.l.bf16 %v1268
        %v1397 = vunpack.c.l.bf16 %v1269
        %v1398 = vunpack.c.l.bf16 %v1270
        %v1399 = vunpack.c.l.bf16 %v1271
        %v1400 = vunpack.c.l.bf16 %v1272
        %v1401 = vunpack.c.l.bf16 %v1273
        %v1402 = vunpack.c.l.bf16 %v1274
        %v1403 = vunpack.c.l.bf16 %v1275
        %v1404 = vunpack.c.l.bf16 %v1276
        %v1405 = vunpack.c.l.bf16 %v1277
        %v1406 = vunpack.c.l.bf16 %v1278
        %v1407 = vunpack.c.l.bf16 %v1279
        %v1408 = vunpack.c.l.bf16 %v1280
        %v1409 = vunpack.c.l.bf16 %v1281
        %v1410 = vunpack.c.l.bf16 %v1282
        %v1411 = vunpack.c.l.bf16 %v1283
        %v1412 = vunpack.c.l.bf16 %v1284
        %v1413 = vunpack.c.l.bf16 %v1285
        %v1414 = vunpack.c.l.bf16 %v1286
        %v1415 = vunpack.c.l.bf16 %v1287
        %v1416 = vunpack.c.l.bf16 %v1288
        %v1417 = vunpack.c.l.bf16 %v1289
        %v1418 = vunpack.c.l.bf16 %v1290
        %v1419 = vunpack.c.l.bf16 %v1291
        %v1420 = vunpack.c.l.bf16 %v1292
        %v1421 = vunpack.c.l.bf16 %v1293
        %v1422 = vunpack.c.l.bf16 %v1294
        %v1423 = vunpack.c.l.bf16 %v1295
        %v1424 = vunpack.c.l.bf16 %v1296
        %v1425 = vunpack.c.l.bf16 %v1297
        %v1426 = vunpack.c.l.bf16 %v1298
        %v1427 = vunpack.c.l.bf16 %v1299
        %v1428 = vunpack.c.l.bf16 %v1300
        %v1429 = vunpack.c.l.bf16 %v1301
        %v1430 = vunpack.c.l.bf16 %v1302
        %v1431 = vunpack.c.l.bf16 %v1303
        %v1432 = vunpack.c.l.bf16 %v1304
        %v1433 = vunpack.c.l.bf16 %v1305
        %v1434 = vunpack.c.l.bf16 %v1306
        %v1435 = vunpack.c.l.bf16 %v1307
        %v1436 = vunpack.c.l.bf16 %v1308
        %v1437 = vunpack.c.l.bf16 %v1309
        %v1438 = vunpack.c.l.bf16 %v1310
        %v1439 = vunpack.c.l.bf16 %v1311
        %v1440 = vunpack.c.l.bf16 %v1312
        %v1441 = vunpack.c.l.bf16 %v1313
        %v1442 = vunpack.c.l.bf16 %v1314
        %v1443 = vunpack.c.l.bf16 %v1315
        %v1444 = vunpack.c.l.bf16 %v1316
        %v1445 = vunpack.c.l.bf16 %v1317
        %v1446 = vunpack.c.l.bf16 %v1318
        %v1447 = vunpack.c.l.bf16 %v1319
        %v1448 = vunpack.c.l.bf16 %v1320
        %v1449 = vunpack.c.l.bf16 %v1321
        %v1450 = vunpack.c.l.bf16 %v1322
        %v1451 = vunpack.c.l.bf16 %v1323
        %v1452 = vunpack.c.l.bf16 %v1324
        %v1453 = vunpack.c.l.bf16 %v1325
        %v1454 = vunpack.c.l.bf16 %v1326
        %v1455 = vunpack.c.l.bf16 %v1327
        %v1456 = vunpack.c.l.bf16 %v1328
        %v1457 = vunpack.c.l.bf16 %v1329
        %v1458 = vunpack.c.l.bf16 %v1330
        %v1459 = vunpack.c.l.bf16 %v1331
        %v1460 = vunpack.c.l.bf16 %v1332
        %v1461 = vunpack.c.l.bf16 %v1333
        %v1462 = vunpack.c.l.bf16 %v1334
        %v1463 = vunpack.c.l.bf16 %v1335
        %v1464 = vunpack.c.l.bf16 %v1336
        %v1465 = vunpack.c.l.bf16 %v1337
        %v1466 = vunpack.c.l.bf16 %v1338
        %v1467 = vunpack.c.l.bf16 %v1339
        %v1468 = vunpack.c.l.bf16 %v1340
        %v1469 = vunpack.c.l.bf16 %v1341
        %v1470 = vunpack.c.l.bf16 %v1342
        %v1471 = vunpack.c.l.bf16 %v1343
        %v1472 = vunpack.c.l.bf16 %v1344
        %v1473 = vunpack.c.l.bf16 %v1345
        %v1474 = vunpack.c.l.bf16 %v1346
        %v1475 = vunpack.c.l.bf16 %v1347
        %v1476 = vunpack.c.l.bf16 %v1348
        %v1477 = vunpack.c.l.bf16 %v1349
        %v1478 = vunpack.c.l.bf16 %v1350
        %v1479 = vunpack.c.l.bf16 %v1351
        %v1480 = vunpack.c.l.bf16 %v1352
        %v1481 = vunpack.c.l.bf16 %v1353
        %v1482 = vunpack.c.l.bf16 %v1354
        %v1483 = vunpack.c.l.bf16 %v1355
        %v1484 = vunpack.c.l.bf16 %v1356
        %v1485 = vunpack.c.l.bf16 %v1357
        %v1486 = vunpack.c.l.bf16 %v1358
        %v1487 = vunpack.c.l.bf16 %v1359
        %v1488 = vunpack.c.l.bf16 %v1360
        %v1489 = vunpack.c.l.bf16 %v1361
        %v1490 = vunpack.c.l.bf16 %v1362
        %v1491 = vunpack.c.l.bf16 %v1363
        %v1492 = vunpack.c.l.bf16 %v1364
        %v1493 = vunpack.c.l.bf16 %v1365
        %v1494 = vunpack.c.l.bf16 %v1366
        %v1495 = vunpack.c.l.bf16 %v1367
        %v1496 = vunpack.c.l.bf16 %v1368
        %v1497 = vunpack.c.l.bf16 %v1369
        %v1498 = vunpack.c.l.bf16 %v1370
        %v1499 = vunpack.c.l.bf16 %v1371
        %v1500 = vunpack.c.l.bf16 %v1372
        %v1501 = vunpack.c.l.bf16 %v1373
        %v1502 = vunpack.c.l.bf16 %v1374
        %v1503 = vunpack.c.l.bf16 %v1375
        %v1504 = vunpack.c.l.bf16 %v1376
        %v1505 = vunpack.c.l.bf16 %v1377
        %v1506 = vunpack.c.l.bf16 %v1378
        %v1507 = vunpack.c.l.bf16 %v1379
        %v1508 = vunpack.c.l.bf16 %v1380
        %v1509 = vunpack.c.l.bf16 %v1381
        %v1510 = vunpack.c.l.bf16 %v1382
        %v1511 = vunpack.c.l.bf16 %v1383
        %v1512 = vunpack.c.l.bf16 %v1384
        %v1513 = vunpack.c.l.bf16 %v1385
        %v1514 = vunpack.c.l.bf16 %v1386
        %v1515 = vunpack.c.l.bf16 %v1387
        %v1516 = vunpack.c.l.bf16 %v1388
        %v1517 = vunpack.c.l.bf16 %v1389
        %v1518 = vunpack.c.l.bf16 %v1390
        %v1519 = vunpack.c.l.bf16 %v1391
        %v1520 = vsel %vm1054, %v1392, 0.0
        %1521 = vadd.xlane.f32.xlu0 %v1520
        %v1522 = vpop.xlane.xlu0 %1521
        %v1523 = vsel %vm1054, %v1393, 0.0
        %1524 = vadd.xlane.f32.xlu0 %v1523
        %v1525 = vpop.xlane.xlu0 %1524
        %v1526 = vsel %vm1054, %v1394, 0.0
        %1527 = vadd.xlane.f32.xlu0 %v1526
        %v1528 = vpop.xlane.xlu0 %1527
        %v1529 = vsel %vm1054, %v1395, 0.0
        %1530 = vadd.xlane.f32.xlu0 %v1529
        %v1531 = vpop.xlane.xlu0 %1530
        %v1532 = vsel %vm1054, %v1396, 0.0
        %1533 = vadd.xlane.f32.xlu0 %v1532
        %v1534 = vpop.xlane.xlu0 %1533
        %v1535 = vsel %vm1054, %v1397, 0.0
        %1536 = vadd.xlane.f32.xlu0 %v1535
        %v1537 = vpop.xlane.xlu0 %1536
        %v1538 = vsel %vm1054, %v1398, 0.0
        %1539 = vadd.xlane.f32.xlu0 %v1538
        %v1540 = vpop.xlane.xlu0 %1539
        %v1541 = vsel %vm1054, %v1399, 0.0
        %1542 = vadd.xlane.f32.xlu0 %v1541
        %v1543 = vpop.xlane.xlu0 %1542
        %v1544 = vsel %vm1054, %v1400, 0.0
        %1545 = vadd.xlane.f32.xlu0 %v1544
        %v1546 = vpop.xlane.xlu0 %1545
        %v1547 = vsel %vm1054, %v1401, 0.0
        %1548 = vadd.xlane.f32.xlu0 %v1547
        %v1549 = vpop.xlane.xlu0 %1548
        %v1550 = vsel %vm1054, %v1402, 0.0
        %1551 = vadd.xlane.f32.xlu0 %v1550
        %v1552 = vpop.xlane.xlu0 %1551
        %v1553 = vsel %vm1054, %v1403, 0.0
        %1554 = vadd.xlane.f32.xlu0 %v1553
        %v1555 = vpop.xlane.xlu0 %1554
        %v1556 = vsel %vm1054, %v1404, 0.0
        %1557 = vadd.xlane.f32.xlu0 %v1556
        %v1558 = vpop.xlane.xlu0 %1557
        %v1559 = vsel %vm1054, %v1405, 0.0
        %1560 = vadd.xlane.f32.xlu0 %v1559
        %v1561 = vpop.xlane.xlu0 %1560
        %v1562 = vsel %vm1054, %v1406, 0.0
        %1563 = vadd.xlane.f32.xlu0 %v1562
        %v1564 = vpop.xlane.xlu0 %1563
        %v1565 = vsel %vm1054, %v1407, 0.0
        %1566 = vadd.xlane.f32.xlu0 %v1565
        %v1567 = vpop.xlane.xlu0 %1566
        %v1568 = vsel %vm1054, %v1408, 0.0
        %1569 = vadd.xlane.f32.xlu0 %v1568
        %v1570 = vpop.xlane.xlu0 %1569
        %v1571 = vsel %vm1054, %v1409, 0.0
        %1572 = vadd.xlane.f32.xlu0 %v1571
        %v1573 = vpop.xlane.xlu0 %1572
        %v1574 = vsel %vm1054, %v1410, 0.0
        %1575 = vadd.xlane.f32.xlu0 %v1574
        %v1576 = vpop.xlane.xlu0 %1575
        %v1577 = vsel %vm1054, %v1411, 0.0
        %1578 = vadd.xlane.f32.xlu0 %v1577
        %v1579 = vpop.xlane.xlu0 %1578
        %v1580 = vsel %vm1054, %v1412, 0.0
        %1581 = vadd.xlane.f32.xlu0 %v1580
        %v1582 = vpop.xlane.xlu0 %1581
        %v1583 = vsel %vm1054, %v1413, 0.0
        %1584 = vadd.xlane.f32.xlu0 %v1583
        %v1585 = vpop.xlane.xlu0 %1584
        %v1586 = vsel %vm1054, %v1414, 0.0
        %1587 = vadd.xlane.f32.xlu0 %v1586
        %v1588 = vpop.xlane.xlu0 %1587
        %v1589 = vsel %vm1054, %v1415, 0.0
        %1590 = vadd.xlane.f32.xlu0 %v1589
        %v1591 = vpop.xlane.xlu0 %1590
        %v1592 = vsel %vm1054, %v1416, 0.0
        %1593 = vadd.xlane.f32.xlu0 %v1592
        %v1594 = vpop.xlane.xlu0 %1593
        %v1595 = vsel %vm1054, %v1417, 0.0
        %1596 = vadd.xlane.f32.xlu0 %v1595
        %v1597 = vpop.xlane.xlu0 %1596
        %v1598 = vsel %vm1054, %v1418, 0.0
        %1599 = vadd.xlane.f32.xlu0 %v1598
        %v1600 = vpop.xlane.xlu0 %1599
        %v1601 = vsel %vm1054, %v1419, 0.0
        %1602 = vadd.xlane.f32.xlu0 %v1601
        %v1603 = vpop.xlane.xlu0 %1602
        %v1604 = vsel %vm1054, %v1420, 0.0
        %1605 = vadd.xlane.f32.xlu0 %v1604
        %v1606 = vpop.xlane.xlu0 %1605
        %v1607 = vsel %vm1054, %v1421, 0.0
        %1608 = vadd.xlane.f32.xlu0 %v1607
        %v1609 = vpop.xlane.xlu0 %1608
        %v1610 = vsel %vm1054, %v1422, 0.0
        %1611 = vadd.xlane.f32.xlu0 %v1610
        %v1612 = vpop.xlane.xlu0 %1611
        %v1613 = vsel %vm1054, %v1423, 0.0
        %1614 = vadd.xlane.f32.xlu0 %v1613
        %v1615 = vpop.xlane.xlu0 %1614
        %v1616 = vsel %vm1054, %v1424, 0.0
        %1617 = vadd.xlane.f32.xlu0 %v1616
        %v1618 = vpop.xlane.xlu0 %1617
        %v1619 = vsel %vm1054, %v1425, 0.0
        %1620 = vadd.xlane.f32.xlu0 %v1619
        %v1621 = vpop.xlane.xlu0 %1620
        %v1622 = vsel %vm1054, %v1426, 0.0
        %1623 = vadd.xlane.f32.xlu0 %v1622
        %v1624 = vpop.xlane.xlu0 %1623
        %v1625 = vsel %vm1054, %v1427, 0.0
        %1626 = vadd.xlane.f32.xlu0 %v1625
        %v1627 = vpop.xlane.xlu0 %1626
        %v1628 = vsel %vm1054, %v1428, 0.0
        %1629 = vadd.xlane.f32.xlu0 %v1628
        %v1630 = vpop.xlane.xlu0 %1629
        %v1631 = vsel %vm1054, %v1429, 0.0
        %1632 = vadd.xlane.f32.xlu0 %v1631
        %v1633 = vpop.xlane.xlu0 %1632
        %v1634 = vsel %vm1054, %v1430, 0.0
        %1635 = vadd.xlane.f32.xlu0 %v1634
        %v1636 = vpop.xlane.xlu0 %1635
        %v1637 = vsel %vm1054, %v1431, 0.0
        %1638 = vadd.xlane.f32.xlu0 %v1637
        %v1639 = vpop.xlane.xlu0 %1638
        %v1640 = vsel %vm1054, %v1432, 0.0
        %1641 = vadd.xlane.f32.xlu0 %v1640
        %v1642 = vpop.xlane.xlu0 %1641
        %v1643 = vsel %vm1054, %v1433, 0.0
        %1644 = vadd.xlane.f32.xlu0 %v1643
        %v1645 = vpop.xlane.xlu0 %1644
        %v1646 = vsel %vm1054, %v1434, 0.0
        %1647 = vadd.xlane.f32.xlu0 %v1646
        %v1648 = vpop.xlane.xlu0 %1647
        %v1649 = vsel %vm1054, %v1435, 0.0
        %1650 = vadd.xlane.f32.xlu0 %v1649
        %v1651 = vpop.xlane.xlu0 %1650
        %v1652 = vsel %vm1054, %v1436, 0.0
        %1653 = vadd.xlane.f32.xlu0 %v1652
        %v1654 = vpop.xlane.xlu0 %1653
        %v1655 = vsel %vm1054, %v1437, 0.0
        %1656 = vadd.xlane.f32.xlu0 %v1655
        %v1657 = vpop.xlane.xlu0 %1656
        %v1658 = vsel %vm1054, %v1438, 0.0
        %1659 = vadd.xlane.f32.xlu0 %v1658
        %v1660 = vpop.xlane.xlu0 %1659
        %v1661 = vsel %vm1054, %v1439, 0.0
        %1662 = vadd.xlane.f32.xlu0 %v1661
        %v1663 = vpop.xlane.xlu0 %1662
        %v1664 = vsel %vm1054, %v1440, 0.0
        %1665 = vadd.xlane.f32.xlu0 %v1664
        %v1666 = vpop.xlane.xlu0 %1665
        %v1667 = vsel %vm1054, %v1441, 0.0
        %1668 = vadd.xlane.f32.xlu0 %v1667
        %v1669 = vpop.xlane.xlu0 %1668
        %v1670 = vsel %vm1054, %v1442, 0.0
        %1671 = vadd.xlane.f32.xlu0 %v1670
        %v1672 = vpop.xlane.xlu0 %1671
        %v1673 = vsel %vm1054, %v1443, 0.0
        %1674 = vadd.xlane.f32.xlu0 %v1673
        %v1675 = vpop.xlane.xlu0 %1674
        %v1676 = vsel %vm1054, %v1444, 0.0
        %1677 = vadd.xlane.f32.xlu0 %v1676
        %v1678 = vpop.xlane.xlu0 %1677
        %v1679 = vsel %vm1054, %v1445, 0.0
        %1680 = vadd.xlane.f32.xlu0 %v1679
        %v1681 = vpop.xlane.xlu0 %1680
        %v1682 = vsel %vm1054, %v1446, 0.0
        %1683 = vadd.xlane.f32.xlu0 %v1682
        %v1684 = vpop.xlane.xlu0 %1683
        %v1685 = vsel %vm1054, %v1447, 0.0
        %1686 = vadd.xlane.f32.xlu0 %v1685
        %v1687 = vpop.xlane.xlu0 %1686
        %v1688 = vsel %vm1054, %v1448, 0.0
        %1689 = vadd.xlane.f32.xlu0 %v1688
        %v1690 = vpop.xlane.xlu0 %1689
        %v1691 = vsel %vm1054, %v1449, 0.0
        %1692 = vadd.xlane.f32.xlu0 %v1691
        %v1693 = vpop.xlane.xlu0 %1692
        %v1694 = vsel %vm1054, %v1450, 0.0
        %1695 = vadd.xlane.f32.xlu0 %v1694
        %v1696 = vpop.xlane.xlu0 %1695
        %v1697 = vsel %vm1054, %v1451, 0.0
        %1698 = vadd.xlane.f32.xlu0 %v1697
        %v1699 = vpop.xlane.xlu0 %1698
        %v1700 = vsel %vm1054, %v1452, 0.0
        %1701 = vadd.xlane.f32.xlu0 %v1700
        %v1702 = vpop.xlane.xlu0 %1701
        %v1703 = vsel %vm1054, %v1453, 0.0
        %1704 = vadd.xlane.f32.xlu0 %v1703
        %v1705 = vpop.xlane.xlu0 %1704
        %v1706 = vsel %vm1054, %v1454, 0.0
        %1707 = vadd.xlane.f32.xlu0 %v1706
        %v1708 = vpop.xlane.xlu0 %1707
        %v1709 = vsel %vm1054, %v1455, 0.0
        %1710 = vadd.xlane.f32.xlu0 %v1709
        %v1711 = vpop.xlane.xlu0 %1710
        %v1712 = vsel %vm1054, %v1456, 0.0
        %1713 = vadd.xlane.f32.xlu0 %v1712
        %v1714 = vpop.xlane.xlu0 %1713
        %v1715 = vsel %vm1054, %v1457, 0.0
        %1716 = vadd.xlane.f32.xlu0 %v1715
        %v1717 = vpop.xlane.xlu0 %1716
        %v1718 = vsel %vm1054, %v1458, 0.0
        %1719 = vadd.xlane.f32.xlu0 %v1718
        %v1720 = vpop.xlane.xlu0 %1719
        %v1721 = vsel %vm1054, %v1459, 0.0
        %1722 = vadd.xlane.f32.xlu0 %v1721
        %v1723 = vpop.xlane.xlu0 %1722
        %v1724 = vsel %vm1054, %v1460, 0.0
        %1725 = vadd.xlane.f32.xlu0 %v1724
        %v1726 = vpop.xlane.xlu0 %1725
        %v1727 = vsel %vm1054, %v1461, 0.0
        %1728 = vadd.xlane.f32.xlu0 %v1727
        %v1729 = vpop.xlane.xlu0 %1728
        %v1730 = vsel %vm1054, %v1462, 0.0
        %1731 = vadd.xlane.f32.xlu0 %v1730
        %v1732 = vpop.xlane.xlu0 %1731
        %v1733 = vsel %vm1054, %v1463, 0.0
        %1734 = vadd.xlane.f32.xlu0 %v1733
        %v1735 = vpop.xlane.xlu0 %1734
        %v1736 = vsel %vm1054, %v1464, 0.0
        %1737 = vadd.xlane.f32.xlu0 %v1736
        %v1738 = vpop.xlane.xlu0 %1737
        %v1739 = vsel %vm1054, %v1465, 0.0
        %1740 = vadd.xlane.f32.xlu0 %v1739
        %v1741 = vpop.xlane.xlu0 %1740
        %v1742 = vsel %vm1054, %v1466, 0.0
        %1743 = vadd.xlane.f32.xlu0 %v1742
        %v1744 = vpop.xlane.xlu0 %1743
        %v1745 = vsel %vm1054, %v1467, 0.0
        %1746 = vadd.xlane.f32.xlu0 %v1745
        %v1747 = vpop.xlane.xlu0 %1746
        %v1748 = vsel %vm1054, %v1468, 0.0
        %1749 = vadd.xlane.f32.xlu0 %v1748
        %v1750 = vpop.xlane.xlu0 %1749
        %v1751 = vsel %vm1054, %v1469, 0.0
        %1752 = vadd.xlane.f32.xlu0 %v1751
        %v1753 = vpop.xlane.xlu0 %1752
        %v1754 = vsel %vm1054, %v1470, 0.0
        %1755 = vadd.xlane.f32.xlu0 %v1754
        %v1756 = vpop.xlane.xlu0 %1755
        %v1757 = vsel %vm1054, %v1471, 0.0
        %1758 = vadd.xlane.f32.xlu0 %v1757
        %v1759 = vpop.xlane.xlu0 %1758
        %v1760 = vsel %vm1054, %v1472, 0.0
        %1761 = vadd.xlane.f32.xlu0 %v1760
        %v1762 = vpop.xlane.xlu0 %1761
        %v1763 = vsel %vm1054, %v1473, 0.0
        %1764 = vadd.xlane.f32.xlu0 %v1763
        %v1765 = vpop.xlane.xlu0 %1764
        %v1766 = vsel %vm1054, %v1474, 0.0
        %1767 = vadd.xlane.f32.xlu0 %v1766
        %v1768 = vpop.xlane.xlu0 %1767
        %v1769 = vsel %vm1054, %v1475, 0.0
        %1770 = vadd.xlane.f32.xlu0 %v1769
        %v1771 = vpop.xlane.xlu0 %1770
        %v1772 = vsel %vm1054, %v1476, 0.0
        %1773 = vadd.xlane.f32.xlu0 %v1772
        %v1774 = vpop.xlane.xlu0 %1773
        %v1775 = vsel %vm1054, %v1477, 0.0
        %1776 = vadd.xlane.f32.xlu0 %v1775
        %v1777 = vpop.xlane.xlu0 %1776
        %v1778 = vsel %vm1054, %v1478, 0.0
        %1779 = vadd.xlane.f32.xlu0 %v1778
        %v1780 = vpop.xlane.xlu0 %1779
        %v1781 = vsel %vm1054, %v1479, 0.0
        %1782 = vadd.xlane.f32.xlu0 %v1781
        %v1783 = vpop.xlane.xlu0 %1782
        %v1784 = vsel %vm1054, %v1480, 0.0
        %1785 = vadd.xlane.f32.xlu0 %v1784
        %v1786 = vpop.xlane.xlu0 %1785
        %v1787 = vsel %vm1054, %v1481, 0.0
        %1788 = vadd.xlane.f32.xlu0 %v1787
        %v1789 = vpop.xlane.xlu0 %1788
        %v1790 = vsel %vm1054, %v1482, 0.0
        %1791 = vadd.xlane.f32.xlu0 %v1790
        %v1792 = vpop.xlane.xlu0 %1791
        %v1793 = vsel %vm1054, %v1483, 0.0
        %1794 = vadd.xlane.f32.xlu0 %v1793
        %v1795 = vpop.xlane.xlu0 %1794
        %v1796 = vsel %vm1054, %v1484, 0.0
        %1797 = vadd.xlane.f32.xlu0 %v1796
        %v1798 = vpop.xlane.xlu0 %1797
        %v1799 = vsel %vm1054, %v1485, 0.0
        %1800 = vadd.xlane.f32.xlu0 %v1799
        %v1801 = vpop.xlane.xlu0 %1800
        %v1802 = vsel %vm1054, %v1486, 0.0
        %1803 = vadd.xlane.f32.xlu0 %v1802
        %v1804 = vpop.xlane.xlu0 %1803
        %v1805 = vsel %vm1054, %v1487, 0.0
        %1806 = vadd.xlane.f32.xlu0 %v1805
        %v1807 = vpop.xlane.xlu0 %1806
        %v1808 = vsel %vm1054, %v1488, 0.0
        %1809 = vadd.xlane.f32.xlu0 %v1808
        %v1810 = vpop.xlane.xlu0 %1809
        %v1811 = vsel %vm1054, %v1489, 0.0
        %1812 = vadd.xlane.f32.xlu0 %v1811
        %v1813 = vpop.xlane.xlu0 %1812
        %v1814 = vsel %vm1054, %v1490, 0.0
        %1815 = vadd.xlane.f32.xlu0 %v1814
        %v1816 = vpop.xlane.xlu0 %1815
        %v1817 = vsel %vm1054, %v1491, 0.0
        %1818 = vadd.xlane.f32.xlu0 %v1817
        %v1819 = vpop.xlane.xlu0 %1818
        %v1820 = vsel %vm1054, %v1492, 0.0
        %1821 = vadd.xlane.f32.xlu0 %v1820
        %v1822 = vpop.xlane.xlu0 %1821
        %v1823 = vsel %vm1054, %v1493, 0.0
        %1824 = vadd.xlane.f32.xlu0 %v1823
        %v1825 = vpop.xlane.xlu0 %1824
        %v1826 = vsel %vm1054, %v1494, 0.0
        %1827 = vadd.xlane.f32.xlu0 %v1826
        %v1828 = vpop.xlane.xlu0 %1827
        %v1829 = vsel %vm1054, %v1495, 0.0
        %1830 = vadd.xlane.f32.xlu0 %v1829
        %v1831 = vpop.xlane.xlu0 %1830
        %v1832 = vsel %vm1054, %v1496, 0.0
        %1833 = vadd.xlane.f32.xlu0 %v1832
        %v1834 = vpop.xlane.xlu0 %1833
        %v1835 = vsel %vm1054, %v1497, 0.0
        %1836 = vadd.xlane.f32.xlu0 %v1835
        %v1837 = vpop.xlane.xlu0 %1836
        %v1838 = vsel %vm1054, %v1498, 0.0
        %1839 = vadd.xlane.f32.xlu0 %v1838
        %v1840 = vpop.xlane.xlu0 %1839
        %v1841 = vsel %vm1054, %v1499, 0.0
        %1842 = vadd.xlane.f32.xlu0 %v1841
        %v1843 = vpop.xlane.xlu0 %1842
        %v1844 = vsel %vm1054, %v1500, 0.0
        %1845 = vadd.xlane.f32.xlu0 %v1844
        %v1846 = vpop.xlane.xlu0 %1845
        %v1847 = vsel %vm1054, %v1501, 0.0
        %1848 = vadd.xlane.f32.xlu0 %v1847
        %v1849 = vpop.xlane.xlu0 %1848
        %v1850 = vsel %vm1054, %v1502, 0.0
        %1851 = vadd.xlane.f32.xlu0 %v1850
        %v1852 = vpop.xlane.xlu0 %1851
        %v1853 = vsel %vm1054, %v1503, 0.0
        %1854 = vadd.xlane.f32.xlu0 %v1853
        %v1855 = vpop.xlane.xlu0 %1854
        %v1856 = vsel %vm1054, %v1504, 0.0
        %1857 = vadd.xlane.f32.xlu0 %v1856
        %v1858 = vpop.xlane.xlu0 %1857
        %v1859 = vsel %vm1054, %v1505, 0.0
        %1860 = vadd.xlane.f32.xlu0 %v1859
        %v1861 = vpop.xlane.xlu0 %1860
        %v1862 = vsel %vm1054, %v1506, 0.0
        %1863 = vadd.xlane.f32.xlu0 %v1862
        %v1864 = vpop.xlane.xlu0 %1863
        %v1865 = vsel %vm1054, %v1507, 0.0
        %1866 = vadd.xlane.f32.xlu0 %v1865
        %v1867 = vpop.xlane.xlu0 %1866
        %v1868 = vsel %vm1054, %v1508, 0.0
        %1869 = vadd.xlane.f32.xlu0 %v1868
        %v1870 = vpop.xlane.xlu0 %1869
        %v1871 = vsel %vm1054, %v1509, 0.0
        %1872 = vadd.xlane.f32.xlu0 %v1871
        %v1873 = vpop.xlane.xlu0 %1872
        %v1874 = vsel %vm1054, %v1510, 0.0
        %1875 = vadd.xlane.f32.xlu0 %v1874
        %v1876 = vpop.xlane.xlu0 %1875
        %v1877 = vsel %vm1054, %v1511, 0.0
        %1878 = vadd.xlane.f32.xlu0 %v1877
        %v1879 = vpop.xlane.xlu0 %1878
        %v1880 = vsel %vm1054, %v1512, 0.0
        %1881 = vadd.xlane.f32.xlu0 %v1880
        %v1882 = vpop.xlane.xlu0 %1881
        %v1883 = vsel %vm1054, %v1513, 0.0
        %1884 = vadd.xlane.f32.xlu0 %v1883
        %v1885 = vpop.xlane.xlu0 %1884
        %v1886 = vsel %vm1054, %v1514, 0.0
        %1887 = vadd.xlane.f32.xlu0 %v1886
        %v1888 = vpop.xlane.xlu0 %1887
        %v1889 = vsel %vm1054, %v1515, 0.0
        %1890 = vadd.xlane.f32.xlu0 %v1889
        %v1891 = vpop.xlane.xlu0 %1890
        %v1892 = vsel %vm1054, %v1516, 0.0
        %1893 = vadd.xlane.f32.xlu0 %v1892
        %v1894 = vpop.xlane.xlu0 %1893
        %v1895 = vsel %vm1054, %v1517, 0.0
        %1896 = vadd.xlane.f32.xlu0 %v1895
        %v1897 = vpop.xlane.xlu0 %1896
        %v1898 = vsel %vm1054, %v1518, 0.0
        %1899 = vadd.xlane.f32.xlu0 %v1898
        %v1900 = vpop.xlane.xlu0 %1899
        %v1901 = vsel %vm1054, %v1519, 0.0
        %1902 = vadd.xlane.f32.xlu0 %v1901
        %v1903 = vpop.xlane.xlu0 %1902
        %v1904 = vmul.f32 %v1522, 0.015625
        %v1905 = vmul.f32 %v1525, 0.015625
        %v1906 = vmul.f32 %v1528, 0.015625
        %v1907 = vmul.f32 %v1531, 0.015625
        %v1908 = vmul.f32 %v1534, 0.015625
        %v1909 = vmul.f32 %v1537, 0.015625
        %v1910 = vmul.f32 %v1540, 0.015625
        %v1911 = vmul.f32 %v1543, 0.015625
        %v1912 = vmul.f32 %v1546, 0.015625
        %v1913 = vmul.f32 %v1549, 0.015625
        %v1914 = vmul.f32 %v1552, 0.015625
        %v1915 = vmul.f32 %v1555, 0.015625
        %v1916 = vmul.f32 %v1558, 0.015625
        %v1917 = vmul.f32 %v1561, 0.015625
        %v1918 = vmul.f32 %v1564, 0.015625
        %v1919 = vmul.f32 %v1567, 0.015625
        %v1920 = vmul.f32 %v1570, 0.015625
        %v1921 = vmul.f32 %v1573, 0.015625
        %v1922 = vmul.f32 %v1576, 0.015625
        %v1923 = vmul.f32 %v1579, 0.015625
        %v1924 = vmul.f32 %v1582, 0.015625
        %v1925 = vmul.f32 %v1585, 0.015625
        %v1926 = vmul.f32 %v1588, 0.015625
        %v1927 = vmul.f32 %v1591, 0.015625
        %v1928 = vmul.f32 %v1594, 0.015625
        %v1929 = vmul.f32 %v1597, 0.015625
        %v1930 = vmul.f32 %v1600, 0.015625
        %v1931 = vmul.f32 %v1603, 0.015625
        %v1932 = vmul.f32 %v1606, 0.015625
        %v1933 = vmul.f32 %v1609, 0.015625
        %v1934 = vmul.f32 %v1612, 0.015625
        %v1935 = vmul.f32 %v1615, 0.015625
        %v1936 = vmul.f32 %v1618, 0.015625
        %v1937 = vmul.f32 %v1621, 0.015625
        %v1938 = vmul.f32 %v1624, 0.015625
        %v1939 = vmul.f32 %v1627, 0.015625
        %v1940 = vmul.f32 %v1630, 0.015625
        %v1941 = vmul.f32 %v1633, 0.015625
        %v1942 = vmul.f32 %v1636, 0.015625
        %v1943 = vmul.f32 %v1639, 0.015625
        %v1944 = vmul.f32 %v1642, 0.015625
        %v1945 = vmul.f32 %v1645, 0.015625
        %v1946 = vmul.f32 %v1648, 0.015625
        %v1947 = vmul.f32 %v1651, 0.015625
        %v1948 = vmul.f32 %v1654, 0.015625
        %v1949 = vmul.f32 %v1657, 0.015625
        %v1950 = vmul.f32 %v1660, 0.015625
        %v1951 = vmul.f32 %v1663, 0.015625
        %v1952 = vmul.f32 %v1666, 0.015625
        %v1953 = vmul.f32 %v1669, 0.015625
        %v1954 = vmul.f32 %v1672, 0.015625
        %v1955 = vmul.f32 %v1675, 0.015625
        %v1956 = vmul.f32 %v1678, 0.015625
        %v1957 = vmul.f32 %v1681, 0.015625
        %v1958 = vmul.f32 %v1684, 0.015625
        %v1959 = vmul.f32 %v1687, 0.015625
        %v1960 = vmul.f32 %v1690, 0.015625
        %v1961 = vmul.f32 %v1693, 0.015625
        %v1962 = vmul.f32 %v1696, 0.015625
        %v1963 = vmul.f32 %v1699, 0.015625
        %v1964 = vmul.f32 %v1702, 0.015625
        %v1965 = vmul.f32 %v1705, 0.015625
        %v1966 = vmul.f32 %v1708, 0.015625
        %v1967 = vmul.f32 %v1711, 0.015625
        %v1968 = vmul.f32 %v1714, 0.015625
        %v1969 = vmul.f32 %v1717, 0.015625
        %v1970 = vmul.f32 %v1720, 0.015625
        %v1971 = vmul.f32 %v1723, 0.015625
        %v1972 = vmul.f32 %v1726, 0.015625
        %v1973 = vmul.f32 %v1729, 0.015625
        %v1974 = vmul.f32 %v1732, 0.015625
        %v1975 = vmul.f32 %v1735, 0.015625
        %v1976 = vmul.f32 %v1738, 0.015625
        %v1977 = vmul.f32 %v1741, 0.015625
        %v1978 = vmul.f32 %v1744, 0.015625
        %v1979 = vmul.f32 %v1747, 0.015625
        %v1980 = vmul.f32 %v1750, 0.015625
        %v1981 = vmul.f32 %v1753, 0.015625
        %v1982 = vmul.f32 %v1756, 0.015625
        %v1983 = vmul.f32 %v1759, 0.015625
        %v1984 = vmul.f32 %v1762, 0.015625
        %v1985 = vmul.f32 %v1765, 0.015625
        %v1986 = vmul.f32 %v1768, 0.015625
        %v1987 = vmul.f32 %v1771, 0.015625
        %v1988 = vmul.f32 %v1774, 0.015625
        %v1989 = vmul.f32 %v1777, 0.015625
        %v1990 = vmul.f32 %v1780, 0.015625
        %v1991 = vmul.f32 %v1783, 0.015625
        %v1992 = vmul.f32 %v1786, 0.015625
        %v1993 = vmul.f32 %v1789, 0.015625
        %v1994 = vmul.f32 %v1792, 0.015625
        %v1995 = vmul.f32 %v1795, 0.015625
        %v1996 = vmul.f32 %v1798, 0.015625
        %v1997 = vmul.f32 %v1801, 0.015625
        %v1998 = vmul.f32 %v1804, 0.015625
        %v1999 = vmul.f32 %v1807, 0.015625
        %v2000 = vmul.f32 %v1810, 0.015625
        %v2001 = vmul.f32 %v1813, 0.015625
        %v2002 = vmul.f32 %v1816, 0.015625
        %v2003 = vmul.f32 %v1819, 0.015625
        %v2004 = vmul.f32 %v1822, 0.015625
        %v2005 = vmul.f32 %v1825, 0.015625
        %v2006 = vmul.f32 %v1828, 0.015625
        %v2007 = vmul.f32 %v1831, 0.015625
        %v2008 = vmul.f32 %v1834, 0.015625
        %v2009 = vmul.f32 %v1837, 0.015625
        %v2010 = vmul.f32 %v1840, 0.015625
        %v2011 = vmul.f32 %v1843, 0.015625
        %v2012 = vmul.f32 %v1846, 0.015625
        %v2013 = vmul.f32 %v1849, 0.015625
        %v2014 = vmul.f32 %v1852, 0.015625
        %v2015 = vmul.f32 %v1855, 0.015625
        %v2016 = vmul.f32 %v1858, 0.015625
        %v2017 = vmul.f32 %v1861, 0.015625
        %v2018 = vmul.f32 %v1864, 0.015625
        %v2019 = vmul.f32 %v1867, 0.015625
        %v2020 = vmul.f32 %v1870, 0.015625
        %v2021 = vmul.f32 %v1873, 0.015625
        %v2022 = vmul.f32 %v1876, 0.015625
        %v2023 = vmul.f32 %v1879, 0.015625
        %v2024 = vmul.f32 %v1882, 0.015625
        %v2025 = vmul.f32 %v1885, 0.015625
        %v2026 = vmul.f32 %v1888, 0.015625
        %v2027 = vmul.f32 %v1891, 0.015625
        %v2028 = vmul.f32 %v1894, 0.015625
        %v2029 = vmul.f32 %v1897, 0.015625
        %v2030 = vmul.f32 %v1900, 0.015625
        %v2031 = vmul.f32 %v1903, 0.015625
        %v2032 = vpack.c.bf16 %v1905, %v1904
        %v2033 = vpack.c.bf16 %v1907, %v1906
        %v2034 = vpack.c.bf16 %v1909, %v1908
        %v2035 = vpack.c.bf16 %v1911, %v1910
        %v2036 = vpack.c.bf16 %v1913, %v1912
        %v2037 = vpack.c.bf16 %v1915, %v1914
        %v2038 = vpack.c.bf16 %v1917, %v1916
        %v2039 = vpack.c.bf16 %v1919, %v1918
        %v2040 = vpack.c.bf16 %v1921, %v1920
        %v2041 = vpack.c.bf16 %v1923, %v1922
        %v2042 = vpack.c.bf16 %v1925, %v1924
        %v2043 = vpack.c.bf16 %v1927, %v1926
        %v2044 = vpack.c.bf16 %v1929, %v1928
        %v2045 = vpack.c.bf16 %v1931, %v1930
        %v2046 = vpack.c.bf16 %v1933, %v1932
        %v2047 = vpack.c.bf16 %v1935, %v1934
        %v2048 = vpack.c.bf16 %v1937, %v1936
        %v2049 = vpack.c.bf16 %v1939, %v1938
        %v2050 = vpack.c.bf16 %v1941, %v1940
        %v2051 = vpack.c.bf16 %v1943, %v1942
        %v2052 = vpack.c.bf16 %v1945, %v1944
        %v2053 = vpack.c.bf16 %v1947, %v1946
        %v2054 = vpack.c.bf16 %v1949, %v1948
        %v2055 = vpack.c.bf16 %v1951, %v1950
        %v2056 = vpack.c.bf16 %v1953, %v1952
        %v2057 = vpack.c.bf16 %v1955, %v1954
        %v2058 = vpack.c.bf16 %v1957, %v1956
        %v2059 = vpack.c.bf16 %v1959, %v1958
        %v2060 = vpack.c.bf16 %v1961, %v1960
        %v2061 = vpack.c.bf16 %v1963, %v1962
        %v2062 = vpack.c.bf16 %v1965, %v1964
        %v2063 = vpack.c.bf16 %v1967, %v1966
        %v2064 = vpack.c.bf16 %v1969, %v1968
        %v2065 = vpack.c.bf16 %v1971, %v1970
        %v2066 = vpack.c.bf16 %v1973, %v1972
        %v2067 = vpack.c.bf16 %v1975, %v1974
        %v2068 = vpack.c.bf16 %v1977, %v1976
        %v2069 = vpack.c.bf16 %v1979, %v1978
        %v2070 = vpack.c.bf16 %v1981, %v1980
        %v2071 = vpack.c.bf16 %v1983, %v1982
        %v2072 = vpack.c.bf16 %v1985, %v1984
        %v2073 = vpack.c.bf16 %v1987, %v1986
        %v2074 = vpack.c.bf16 %v1989, %v1988
        %v2075 = vpack.c.bf16 %v1991, %v1990
        %v2076 = vpack.c.bf16 %v1993, %v1992
        %v2077 = vpack.c.bf16 %v1995, %v1994
        %v2078 = vpack.c.bf16 %v1997, %v1996
        %v2079 = vpack.c.bf16 %v1999, %v1998
        %v2080 = vpack.c.bf16 %v2001, %v2000
        %v2081 = vpack.c.bf16 %v2003, %v2002
        %v2082 = vpack.c.bf16 %v2005, %v2004
        %v2083 = vpack.c.bf16 %v2007, %v2006
        %v2084 = vpack.c.bf16 %v2009, %v2008
        %v2085 = vpack.c.bf16 %v2011, %v2010
        %v2086 = vpack.c.bf16 %v2013, %v2012
        %v2087 = vpack.c.bf16 %v2015, %v2014
        %v2088 = vpack.c.bf16 %v2017, %v2016
        %v2089 = vpack.c.bf16 %v2019, %v2018
        %v2090 = vpack.c.bf16 %v2021, %v2020
        %v2091 = vpack.c.bf16 %v2023, %v2022
        %v2092 = vpack.c.bf16 %v2025, %v2024
        %v2093 = vpack.c.bf16 %v2027, %v2026
        %v2094 = vpack.c.bf16 %v2029, %v2028
        %v2095 = vpack.c.bf16 %v2031, %v2030
        %v2096 = vld [vmem:[%s4] sm:$0xff]
        %v2097 = vld [vmem:[%s4 + $0x8] sm:$0xff]
        %v2098 = vld [vmem:[%s4 + $0x10] sm:$0xff]
        %v2099 = vld [vmem:[%s4 + $0x18] sm:$0xff]
        %v2100 = vld [vmem:[%s4 + $0x20] sm:$0xff]
        %v2101 = vld [vmem:[%s4 + $0x28] sm:$0xff]
        %v2102 = vld [vmem:[%s4 + $0x30] sm:$0xff]
        %v2103 = vld [vmem:[%s4 + $0x38] sm:$0xff]
        %v2104 = vld [vmem:[%s5] sm:$0xf]
        %v2106 = vperm.slane %v2104, 0
        %v2107 = vperm.slane %v2104, 1
        %v2108 = vperm.slane %v2104, 2
        %v2109 = vperm.slane %v2104, 3
        %v2178 = vunpack.c.l.b16 %v2032
        %v2179 = vunpack.c.h.b16 %v2032
        %v2180 = vunpack.c.l.b16 %v2033
        %v2181 = vunpack.c.h.b16 %v2033
        %v2182 = vunpack.c.l.b16 %v2034
        %v2183 = vunpack.c.h.b16 %v2034
        %v2184 = vunpack.c.l.b16 %v2035
        %v2185 = vunpack.c.h.b16 %v2035
        %v2186 = vunpack.c.l.b16 %v2036
        %v2187 = vunpack.c.h.b16 %v2036
        %v2188 = vunpack.c.l.b16 %v2037
        %v2189 = vunpack.c.h.b16 %v2037
        %v2190 = vunpack.c.l.b16 %v2038
        %v2191 = vunpack.c.h.b16 %v2038
        %v2192 = vunpack.c.l.b16 %v2039
        %v2193 = vunpack.c.h.b16 %v2039
        %v2194 = vunpack.c.l.b16 %v2040
        %v2195 = vunpack.c.h.b16 %v2040
        %v2196 = vunpack.c.l.b16 %v2041
        %v2197 = vunpack.c.h.b16 %v2041
        %v2198 = vunpack.c.l.b16 %v2042
        %v2199 = vunpack.c.h.b16 %v2042
        %v2200 = vunpack.c.l.b16 %v2043
        %v2201 = vunpack.c.h.b16 %v2043
        %v2202 = vunpack.c.l.b16 %v2044
        %v2203 = vunpack.c.h.b16 %v2044
        %v2204 = vunpack.c.l.b16 %v2045
        %v2205 = vunpack.c.h.b16 %v2045
        %v2206 = vunpack.c.l.b16 %v2046
        %v2207 = vunpack.c.h.b16 %v2046
        %v2208 = vunpack.c.l.b16 %v2047
        %v2209 = vunpack.c.h.b16 %v2047
        %v2210 = vunpack.c.l.b16 %v2048
        %v2211 = vunpack.c.h.b16 %v2048
        %v2212 = vunpack.c.l.b16 %v2049
        %v2213 = vunpack.c.h.b16 %v2049
        %v2214 = vunpack.c.l.b16 %v2050
        %v2215 = vunpack.c.h.b16 %v2050
        %v2216 = vunpack.c.l.b16 %v2051
        %v2217 = vunpack.c.h.b16 %v2051
        %v2218 = vunpack.c.l.b16 %v2052
        %v2219 = vunpack.c.h.b16 %v2052
        %v2220 = vunpack.c.l.b16 %v2053
        %v2221 = vunpack.c.h.b16 %v2053
        %v2222 = vunpack.c.l.b16 %v2054
        %v2223 = vunpack.c.h.b16 %v2054
        %v2224 = vunpack.c.l.b16 %v2055
        %v2225 = vunpack.c.h.b16 %v2055
        %v2226 = vunpack.c.l.b16 %v2056
        %v2227 = vunpack.c.h.b16 %v2056
        %v2228 = vunpack.c.l.b16 %v2057
        %v2229 = vunpack.c.h.b16 %v2057
        %v2230 = vunpack.c.l.b16 %v2058
        %v2231 = vunpack.c.h.b16 %v2058
        %v2232 = vunpack.c.l.b16 %v2059
        %v2233 = vunpack.c.h.b16 %v2059
        %v2234 = vunpack.c.l.b16 %v2060
        %v2235 = vunpack.c.h.b16 %v2060
        %v2236 = vunpack.c.l.b16 %v2061
        %v2237 = vunpack.c.h.b16 %v2061
        %v2238 = vunpack.c.l.b16 %v2062
        %v2239 = vunpack.c.h.b16 %v2062
        %v2240 = vunpack.c.l.b16 %v2063
        %v2241 = vunpack.c.h.b16 %v2063
        %v2242 = vunpack.c.l.b16 %v2064
        %v2243 = vunpack.c.h.b16 %v2064
        %v2244 = vunpack.c.l.b16 %v2065
        %v2245 = vunpack.c.h.b16 %v2065
        %v2246 = vunpack.c.l.b16 %v2066
        %v2247 = vunpack.c.h.b16 %v2066
        %v2248 = vunpack.c.l.b16 %v2067
        %v2249 = vunpack.c.h.b16 %v2067
        %v2250 = vunpack.c.l.b16 %v2068
        %v2251 = vunpack.c.h.b16 %v2068
        %v2252 = vunpack.c.l.b16 %v2069
        %v2253 = vunpack.c.h.b16 %v2069
        %v2254 = vunpack.c.l.b16 %v2070
        %v2255 = vunpack.c.h.b16 %v2070
        %v2256 = vunpack.c.l.b16 %v2071
        %v2257 = vunpack.c.h.b16 %v2071
        %v2258 = vunpack.c.l.b16 %v2072
        %v2259 = vunpack.c.h.b16 %v2072
        %v2260 = vunpack.c.l.b16 %v2073
        %v2261 = vunpack.c.h.b16 %v2073
        %v2262 = vunpack.c.l.b16 %v2074
        %v2263 = vunpack.c.h.b16 %v2074
        %v2264 = vunpack.c.l.b16 %v2075
        %v2265 = vunpack.c.h.b16 %v2075
        %v2266 = vunpack.c.l.b16 %v2076
        %v2267 = vunpack.c.h.b16 %v2076
        %v2268 = vunpack.c.l.b16 %v2077
        %v2269 = vunpack.c.h.b16 %v2077
        %v2270 = vunpack.c.l.b16 %v2078
        %v2271 = vunpack.c.h.b16 %v2078
        %v2272 = vunpack.c.l.b16 %v2079
        %v2273 = vunpack.c.h.b16 %v2079
        %v2274 = vunpack.c.l.b16 %v2080
        %v2275 = vunpack.c.h.b16 %v2080
        %v2276 = vunpack.c.l.b16 %v2081
        %v2277 = vunpack.c.h.b16 %v2081
        %v2278 = vunpack.c.l.b16 %v2082
        %v2279 = vunpack.c.h.b16 %v2082
        %v2280 = vunpack.c.l.b16 %v2083
        %v2281 = vunpack.c.h.b16 %v2083
        %v2282 = vunpack.c.l.b16 %v2084
        %v2283 = vunpack.c.h.b16 %v2084
        %v2284 = vunpack.c.l.b16 %v2085
        %v2285 = vunpack.c.h.b16 %v2085
        %v2286 = vunpack.c.l.b16 %v2086
        %v2287 = vunpack.c.h.b16 %v2086
        %v2288 = vunpack.c.l.b16 %v2087
        %v2289 = vunpack.c.h.b16 %v2087
        %v2290 = vunpack.c.l.b16 %v2088
        %v2291 = vunpack.c.h.b16 %v2088
        %v2292 = vunpack.c.l.b16 %v2089
        %v2293 = vunpack.c.h.b16 %v2089
        %v2294 = vunpack.c.l.b16 %v2090
        %v2295 = vunpack.c.h.b16 %v2090
        %v2296 = vunpack.c.l.b16 %v2091
        %v2297 = vunpack.c.h.b16 %v2091
        %v2298 = vunpack.c.l.b16 %v2092
        %v2299 = vunpack.c.h.b16 %v2092
        %v2300 = vunpack.c.l.b16 %v2093
        %v2301 = vunpack.c.h.b16 %v2093
        %v2302 = vunpack.c.l.b16 %v2094
        %v2303 = vunpack.c.h.b16 %v2094
        %v2304 = vunpack.c.l.b16 %v2095
        %v2305 = vunpack.c.h.b16 %v2095
        %v2306 = vperm.slane %v2178, %v954
        %v2307 = vadd.s32 %v954, 4294967288
        %v2308 = vperm.slane %v2179, %v2307
        %vm2309 = vcmask 130112
        %v2310 = vsel %vm2309, %v2308, %v2306
        %v2311 = vadd.s32 %v954, 4294967280
        %v2312 = vperm.slane %v2180, %v2311
        %vm2313 = vcmask 195712
        %v2314 = vsel %vm2313, %v2312, %v2310
        %v2315 = vadd.s32 %v954, 4294967272
        %v2316 = vperm.slane %v2181, %v2315
        %vm2317 = vcmask 261312
        %v2318 = vsel %vm2317, %v2316, %v2314
        %v2319 = vperm.slane %v2182, %v954
        %v2320 = vperm.slane %v2183, %v2307
        %v2321 = vsel %vm2309, %v2320, %v2319
        %v2322 = vperm.slane %v2184, %v2311
        %v2323 = vsel %vm2313, %v2322, %v2321
        %v2324 = vperm.slane %v2185, %v2315
        %v2325 = vsel %vm2317, %v2324, %v2323
        %v2326 = vperm.slane %v2186, %v954
        %v2327 = vperm.slane %v2187, %v2307
        %v2328 = vsel %vm2309, %v2327, %v2326
        %v2329 = vperm.slane %v2188, %v2311
        %v2330 = vsel %vm2313, %v2329, %v2328
        %v2331 = vperm.slane %v2189, %v2315
        %v2332 = vsel %vm2317, %v2331, %v2330
        %v2333 = vperm.slane %v2190, %v954
        %v2334 = vperm.slane %v2191, %v2307
        %v2335 = vsel %vm2309, %v2334, %v2333
        %v2336 = vperm.slane %v2192, %v2311
        %v2337 = vsel %vm2313, %v2336, %v2335
        %v2338 = vperm.slane %v2193, %v2315
        %v2339 = vsel %vm2317, %v2338, %v2337
        %v2340 = vperm.slane %v2194, %v954
        %v2341 = vperm.slane %v2195, %v2307
        %v2342 = vsel %vm2309, %v2341, %v2340
        %v2343 = vperm.slane %v2196, %v2311
        %v2344 = vsel %vm2313, %v2343, %v2342
        %v2345 = vperm.slane %v2197, %v2315
        %v2346 = vsel %vm2317, %v2345, %v2344
        %v2347 = vperm.slane %v2198, %v954
        %v2348 = vperm.slane %v2199, %v2307
        %v2349 = vsel %vm2309, %v2348, %v2347
        %v2350 = vperm.slane %v2200, %v2311
        %v2351 = vsel %vm2313, %v2350, %v2349
        %v2352 = vperm.slane %v2201, %v2315
        %v2353 = vsel %vm2317, %v2352, %v2351
        %v2354 = vperm.slane %v2202, %v954
        %v2355 = vperm.slane %v2203, %v2307
        %v2356 = vsel %vm2309, %v2355, %v2354
        %v2357 = vperm.slane %v2204, %v2311
        %v2358 = vsel %vm2313, %v2357, %v2356
        %v2359 = vperm.slane %v2205, %v2315
        %v2360 = vsel %vm2317, %v2359, %v2358
        %v2361 = vperm.slane %v2206, %v954
        %v2362 = vperm.slane %v2207, %v2307
        %v2363 = vsel %vm2309, %v2362, %v2361
        %v2364 = vperm.slane %v2208, %v2311
        %v2365 = vsel %vm2313, %v2364, %v2363
        %v2366 = vperm.slane %v2209, %v2315
        %v2367 = vsel %vm2317, %v2366, %v2365
        %v2368 = vperm.slane %v2210, %v954
        %v2369 = vperm.slane %v2211, %v2307
        %v2370 = vsel %vm2309, %v2369, %v2368
        %v2371 = vperm.slane %v2212, %v2311
        %v2372 = vsel %vm2313, %v2371, %v2370
        %v2373 = vperm.slane %v2213, %v2315
        %v2374 = vsel %vm2317, %v2373, %v2372
        %v2375 = vperm.slane %v2214, %v954
        %v2376 = vperm.slane %v2215, %v2307
        %v2377 = vsel %vm2309, %v2376, %v2375
        %v2378 = vperm.slane %v2216, %v2311
        %v2379 = vsel %vm2313, %v2378, %v2377
        %v2380 = vperm.slane %v2217, %v2315
        %v2381 = vsel %vm2317, %v2380, %v2379
        %v2382 = vperm.slane %v2218, %v954
        %v2383 = vperm.slane %v2219, %v2307
        %v2384 = vsel %vm2309, %v2383, %v2382
        %v2385 = vperm.slane %v2220, %v2311
        %v2386 = vsel %vm2313, %v2385, %v2384
        %v2387 = vperm.slane %v2221, %v2315
        %v2388 = vsel %vm2317, %v2387, %v2386
        %v2389 = vperm.slane %v2222, %v954
        %v2390 = vperm.slane %v2223, %v2307
        %v2391 = vsel %vm2309, %v2390, %v2389
        %v2392 = vperm.slane %v2224, %v2311
        %v2393 = vsel %vm2313, %v2392, %v2391
        %v2394 = vperm.slane %v2225, %v2315
        %v2395 = vsel %vm2317, %v2394, %v2393
        %v2396 = vperm.slane %v2226, %v954
        %v2397 = vperm.slane %v2227, %v2307
        %v2398 = vsel %vm2309, %v2397, %v2396
        %v2399 = vperm.slane %v2228, %v2311
        %v2400 = vsel %vm2313, %v2399, %v2398
        %v2401 = vperm.slane %v2229, %v2315
        %v2402 = vsel %vm2317, %v2401, %v2400
        %v2403 = vperm.slane %v2230, %v954
        %v2404 = vperm.slane %v2231, %v2307
        %v2405 = vsel %vm2309, %v2404, %v2403
        %v2406 = vperm.slane %v2232, %v2311
        %v2407 = vsel %vm2313, %v2406, %v2405
        %v2408 = vperm.slane %v2233, %v2315
        %v2409 = vsel %vm2317, %v2408, %v2407
        %v2410 = vperm.slane %v2234, %v954
        %v2411 = vperm.slane %v2235, %v2307
        %v2412 = vsel %vm2309, %v2411, %v2410
        %v2413 = vperm.slane %v2236, %v2311
        %v2414 = vsel %vm2313, %v2413, %v2412
        %v2415 = vperm.slane %v2237, %v2315
        %v2416 = vsel %vm2317, %v2415, %v2414
        %v2417 = vperm.slane %v2238, %v954
        %v2418 = vperm.slane %v2239, %v2307
        %v2419 = vsel %vm2309, %v2418, %v2417
        %v2420 = vperm.slane %v2240, %v2311
        %v2421 = vsel %vm2313, %v2420, %v2419
        %v2422 = vperm.slane %v2241, %v2315
        %v2423 = vsel %vm2317, %v2422, %v2421
        %v2424 = vperm.slane %v2242, %v954
        %v2425 = vperm.slane %v2243, %v2307
        %v2426 = vsel %vm2309, %v2425, %v2424
        %v2427 = vperm.slane %v2244, %v2311
        %v2428 = vsel %vm2313, %v2427, %v2426
        %v2429 = vperm.slane %v2245, %v2315
        %v2430 = vsel %vm2317, %v2429, %v2428
        %v2431 = vperm.slane %v2246, %v954
        %v2432 = vperm.slane %v2247, %v2307
        %v2433 = vsel %vm2309, %v2432, %v2431
        %v2434 = vperm.slane %v2248, %v2311
        %v2435 = vsel %vm2313, %v2434, %v2433
        %v2436 = vperm.slane %v2249, %v2315
        %v2437 = vsel %vm2317, %v2436, %v2435
        %v2438 = vperm.slane %v2250, %v954
        %v2439 = vperm.slane %v2251, %v2307
        %v2440 = vsel %vm2309, %v2439, %v2438
        %v2441 = vperm.slane %v2252, %v2311
        %v2442 = vsel %vm2313, %v2441, %v2440
        %v2443 = vperm.slane %v2253, %v2315
        %v2444 = vsel %vm2317, %v2443, %v2442
        %v2445 = vperm.slane %v2254, %v954
        %v2446 = vperm.slane %v2255, %v2307
        %v2447 = vsel %vm2309, %v2446, %v2445
        %v2448 = vperm.slane %v2256, %v2311
        %v2449 = vsel %vm2313, %v2448, %v2447
        %v2450 = vperm.slane %v2257, %v2315
        %v2451 = vsel %vm2317, %v2450, %v2449
        %v2452 = vperm.slane %v2258, %v954
        %v2453 = vperm.slane %v2259, %v2307
        %v2454 = vsel %vm2309, %v2453, %v2452
        %v2455 = vperm.slane %v2260, %v2311
        %v2456 = vsel %vm2313, %v2455, %v2454
        %v2457 = vperm.slane %v2261, %v2315
        %v2458 = vsel %vm2317, %v2457, %v2456
        %v2459 = vperm.slane %v2262, %v954
        %v2460 = vperm.slane %v2263, %v2307
        %v2461 = vsel %vm2309, %v2460, %v2459
        %v2462 = vperm.slane %v2264, %v2311
        %v2463 = vsel %vm2313, %v2462, %v2461
        %v2464 = vperm.slane %v2265, %v2315
        %v2465 = vsel %vm2317, %v2464, %v2463
        %v2466 = vperm.slane %v2266, %v954
        %v2467 = vperm.slane %v2267, %v2307
        %v2468 = vsel %vm2309, %v2467, %v2466
        %v2469 = vperm.slane %v2268, %v2311
        %v2470 = vsel %vm2313, %v2469, %v2468
        %v2471 = vperm.slane %v2269, %v2315
        %v2472 = vsel %vm2317, %v2471, %v2470
        %v2473 = vperm.slane %v2270, %v954
        %v2474 = vperm.slane %v2271, %v2307
        %v2475 = vsel %vm2309, %v2474, %v2473
        %v2476 = vperm.slane %v2272, %v2311
        %v2477 = vsel %vm2313, %v2476, %v2475
        %v2478 = vperm.slane %v2273, %v2315
        %v2479 = vsel %vm2317, %v2478, %v2477
        %v2480 = vperm.slane %v2274, %v954
        %v2481 = vperm.slane %v2275, %v2307
        %v2482 = vsel %vm2309, %v2481, %v2480
        %v2483 = vperm.slane %v2276, %v2311
        %v2484 = vsel %vm2313, %v2483, %v2482
        %v2485 = vperm.slane %v2277, %v2315
        %v2486 = vsel %vm2317, %v2485, %v2484
        %v2487 = vperm.slane %v2278, %v954
        %v2488 = vperm.slane %v2279, %v2307
        %v2489 = vsel %vm2309, %v2488, %v2487
        %v2490 = vperm.slane %v2280, %v2311
        %v2491 = vsel %vm2313, %v2490, %v2489
        %v2492 = vperm.slane %v2281, %v2315
        %v2493 = vsel %vm2317, %v2492, %v2491
        %v2494 = vperm.slane %v2282, %v954
        %v2495 = vperm.slane %v2283, %v2307
        %v2496 = vsel %vm2309, %v2495, %v2494
        %v2497 = vperm.slane %v2284, %v2311
        %v2498 = vsel %vm2313, %v2497, %v2496
        %v2499 = vperm.slane %v2285, %v2315
        %v2500 = vsel %vm2317, %v2499, %v2498
        %v2501 = vperm.slane %v2286, %v954
        %v2502 = vperm.slane %v2287, %v2307
        %v2503 = vsel %vm2309, %v2502, %v2501
        %v2504 = vperm.slane %v2288, %v2311
        %v2505 = vsel %vm2313, %v2504, %v2503
        %v2506 = vperm.slane %v2289, %v2315
        %v2507 = vsel %vm2317, %v2506, %v2505
        %v2508 = vperm.slane %v2290, %v954
        %v2509 = vperm.slane %v2291, %v2307
        %v2510 = vsel %vm2309, %v2509, %v2508
        %v2511 = vperm.slane %v2292, %v2311
        %v2512 = vsel %vm2313, %v2511, %v2510
        %v2513 = vperm.slane %v2293, %v2315
        %v2514 = vsel %vm2317, %v2513, %v2512
        %v2515 = vperm.slane %v2294, %v954
        %v2516 = vperm.slane %v2295, %v2307
        %v2517 = vsel %vm2309, %v2516, %v2515
        %v2518 = vperm.slane %v2296, %v2311
        %v2519 = vsel %vm2313, %v2518, %v2517
        %v2520 = vperm.slane %v2297, %v2315
        %v2521 = vsel %vm2317, %v2520, %v2519
        %v2522 = vperm.slane %v2298, %v954
        %v2523 = vperm.slane %v2299, %v2307
        %v2524 = vsel %vm2309, %v2523, %v2522
        %v2525 = vperm.slane %v2300, %v2311
        %v2526 = vsel %vm2313, %v2525, %v2524
        %v2527 = vperm.slane %v2301, %v2315
        %v2528 = vsel %vm2317, %v2527, %v2526
        %v2529 = vperm.slane %v2302, %v954
        %v2530 = vperm.slane %v2303, %v2307
        %v2531 = vsel %vm2309, %v2530, %v2529
        %v2532 = vperm.slane %v2304, %v2311
        %v2533 = vsel %vm2313, %v2532, %v2531
        %v2534 = vperm.slane %v2305, %v2315
        %v2535 = vsel %vm2317, %v2534, %v2533
        %vm2536 = vcmask 1041409
        %v2537 = vsel %vm2536, %v2325, %v2318
        %vm2538 = vcmask 1042434
        %v2539 = vsel %vm2538, %v2332, %v2537
        %vm2540 = vcmask 1043459
        %v2541 = vsel %vm2540, %v2339, %v2539
        %vm2542 = vcmask 1044484
        %v2543 = vsel %vm2542, %v2346, %v2541
        %vm2544 = vcmask 1045509
        %v2545 = vsel %vm2544, %v2353, %v2543
        %vm2546 = vcmask 1046534
        %v2547 = vsel %vm2546, %v2360, %v2545
        %vm2548 = vcmask 1047559
        %v2549 = vsel %vm2548, %v2367, %v2547
        %v2550 = vsel %vm2536, %v2381, %v2374
        %v2551 = vsel %vm2538, %v2388, %v2550
        %v2552 = vsel %vm2540, %v2395, %v2551
        %v2553 = vsel %vm2542, %v2402, %v2552
        %v2554 = vsel %vm2544, %v2409, %v2553
        %v2555 = vsel %vm2546, %v2416, %v2554
        %v2556 = vsel %vm2548, %v2423, %v2555
        %v2557 = vsel %vm2536, %v2437, %v2430
        %v2558 = vsel %vm2538, %v2444, %v2557
        %v2559 = vsel %vm2540, %v2451, %v2558
        %v2560 = vsel %vm2542, %v2458, %v2559
        %v2561 = vsel %vm2544, %v2465, %v2560
        %v2562 = vsel %vm2546, %v2472, %v2561
        %v2563 = vsel %vm2548, %v2479, %v2562
        %v2564 = vsel %vm2536, %v2493, %v2486
        %v2565 = vsel %vm2538, %v2500, %v2564
        %v2566 = vsel %vm2540, %v2507, %v2565
        %v2567 = vsel %vm2542, %v2514, %v2566
        %v2568 = vsel %vm2544, %v2521, %v2567
        %v2569 = vsel %vm2546, %v2528, %v2568
        %v2570 = vsel %vm2548, %v2535, %v2569
        %v2571 = vpack.c.b16 %v2556, %v2549
        %v2572 = vpack.c.b16 %v2570, %v2563
        %v2581 = vunpack.c.l.b16 %v2096
        %v2582 = vunpack.c.h.b16 %v2096
        %v2583 = vunpack.c.l.b16 %v2097
        %v2584 = vunpack.c.h.b16 %v2097
        %v2585 = vunpack.c.l.b16 %v2098
        %v2586 = vunpack.c.h.b16 %v2098
        %v2587 = vunpack.c.l.b16 %v2099
        %v2588 = vunpack.c.h.b16 %v2099
        %v2589 = vunpack.c.l.b16 %v2100
        %v2590 = vunpack.c.h.b16 %v2100
        %v2591 = vunpack.c.l.b16 %v2101
        %v2592 = vunpack.c.h.b16 %v2101
        %v2593 = vunpack.c.l.b16 %v2102
        %v2594 = vunpack.c.h.b16 %v2102
        %v2595 = vunpack.c.l.b16 %v2103
        %v2596 = vunpack.c.h.b16 %v2103
        %v2597 = vpack.c.b16 %v2585, %v2581
        %v2598 = vpack.c.b16 %v2586, %v2582
        %v2599 = vpack.c.b16 %v2587, %v2583
        %v2600 = vpack.c.b16 %v2588, %v2584
        %v2601 = vpack.c.b16 %v2593, %v2589
        %v2602 = vpack.c.b16 %v2594, %v2590
        %v2603 = vpack.c.b16 %v2595, %v2591
        %v2604 = vpack.c.b16 %v2596, %v2592
        %vm2613 = vcmask 261120
        %v2615 = vsel %vm2613, %v2571, 0
        %v2618 = vsel %vm2613, %v2572, 0
        %2620 = vmatpush.bf16.msra.mxu0 0
        %2621 = vmatpush.bf16.msra.mxu0 0
        %2622 = vmatpush.bf16.msra.mxu0 0
        %2623 = vmatpush.bf16.msra.mxu0 0
        %2624 = vmatpush.bf16.msra.mxu0 0
        %2625 = vmatpush.bf16.msra.mxu0 0
        %2626 = vmatpush.bf16.msra.mxu0 %v2601
        %2627 = vmatpush.bf16.msra.mxu0 %v2597
        %2628 = vmatmul.bf16.gmra.mxu0 %v2615
        %v2629 = vpop.f32.mrf.mxu0
        %v2630 = vadd.f32 %v2106, %v2629
        %v2631 = vpop.f32.mrf.mxu0
        %v2632 = vadd.f32 %v2106, %v2631
        %2633 = vmatmul.bf16.gmra.mxu0 %v2618
        %v2634 = vpop.f32.mrf.mxu0
        %v2635 = vadd.f32 %v2106, %v2634
        %v2636 = vpop.f32.mrf.mxu0
        %v2637 = vadd.f32 %v2106, %v2636
        %2638 = vdwg.mxu0
        %2639 = vmatpush.bf16.msra.mxu0 0
        %2640 = vmatpush.bf16.msra.mxu0 0
        %2641 = vmatpush.bf16.msra.mxu0 0
        %2642 = vmatpush.bf16.msra.mxu0 0
        %2643 = vmatpush.bf16.msra.mxu0 0
        %2644 = vmatpush.bf16.msra.mxu0 0
        %2645 = vmatpush.bf16.msra.mxu0 %v2602
        %2646 = vmatpush.bf16.msra.mxu0 %v2598
        %2647 = vmatmul.bf16.gmra.mxu0 %v2615
        %v2648 = vpop.f32.mrf.mxu0
        %v2649 = vadd.f32 %v2107, %v2648
        %v2650 = vpop.f32.mrf.mxu0
        %v2651 = vadd.f32 %v2107, %v2650
        %2652 = vmatmul.bf16.gmra.mxu0 %v2618
        %v2653 = vpop.f32.mrf.mxu0
        %v2654 = vadd.f32 %v2107, %v2653
        %v2655 = vpop.f32.mrf.mxu0
        %v2656 = vadd.f32 %v2107, %v2655
        %2657 = vdwg.mxu0
        %2658 = vmatpush.bf16.msra.mxu0 0
        %2659 = vmatpush.bf16.msra.mxu0 0
        %2660 = vmatpush.bf16.msra.mxu0 0
        %2661 = vmatpush.bf16.msra.mxu0 0
        %2662 = vmatpush.bf16.msra.mxu0 0
        %2663 = vmatpush.bf16.msra.mxu0 0
        %2664 = vmatpush.bf16.msra.mxu0 %v2603
        %2665 = vmatpush.bf16.msra.mxu0 %v2599
        %2666 = vmatmul.bf16.gmra.mxu0 %v2615
        %v2667 = vpop.f32.mrf.mxu0
        %v2668 = vadd.f32 %v2108, %v2667
        %v2669 = vpop.f32.mrf.mxu0
        %v2670 = vadd.f32 %v2108, %v2669
        %2671 = vmatmul.bf16.gmra.mxu0 %v2618
        %v2672 = vpop.f32.mrf.mxu0
        %v2673 = vadd.f32 %v2108, %v2672
        %v2674 = vpop.f32.mrf.mxu0
        %v2675 = vadd.f32 %v2108, %v2674
        %2676 = vdwg.mxu0
        %2677 = vmatpush.bf16.msra.mxu0 0
        %2678 = vmatpush.bf16.msra.mxu0 0
        %2679 = vmatpush.bf16.msra.mxu0 0
        %2680 = vmatpush.bf16.msra.mxu0 0
        %2681 = vmatpush.bf16.msra.mxu0 0
        %2682 = vmatpush.bf16.msra.mxu0 0
        %2683 = vmatpush.bf16.msra.mxu0 %v2604
        %2684 = vmatpush.bf16.msra.mxu0 %v2600
        %2685 = vmatmul.bf16.gmra.mxu0 %v2615
        %v2686 = vpop.f32.mrf.mxu0
        %v2687 = vadd.f32 %v2109, %v2686
        %v2688 = vpop.f32.mrf.mxu0
        %v2689 = vadd.f32 %v2109, %v2688
        %2690 = vmatmul.bf16.gmra.mxu0 %v2618
        %v2691 = vpop.f32.mrf.mxu0
        %v2692 = vadd.f32 %v2109, %v2691
        %v2693 = vpop.f32.mrf.mxu0
        %v2694 = vadd.f32 %v2109, %v2693
        %2695 = vdwg.mxu0
        %v2696 = vmax.f32 %v2630, 0.0
        %v2697 = vmax.f32 %v2649, 0.0
        %v2698 = vmax.f32 %v2668, 0.0
        %v2699 = vmax.f32 %v2687, 0.0
        %v2700 = vmax.f32 %v2632, 0.0
        %v2701 = vmax.f32 %v2651, 0.0
        %v2702 = vmax.f32 %v2670, 0.0
        %v2703 = vmax.f32 %v2689, 0.0
        %v2704 = vmax.f32 %v2635, 0.0
        %v2705 = vmax.f32 %v2654, 0.0
        %v2706 = vmax.f32 %v2673, 0.0
        %v2707 = vmax.f32 %v2692, 0.0
        %v2708 = vmax.f32 %v2637, 0.0
        %v2709 = vmax.f32 %v2656, 0.0
        %v2710 = vmax.f32 %v2675, 0.0
        %v2711 = vmax.f32 %v2694, 0.0
        %v2712 = vpack.c.bf16 %v2700, %v2696
        %v2713 = vpack.c.bf16 %v2701, %v2697
        %v2714 = vpack.c.bf16 %v2702, %v2698
        %v2715 = vpack.c.bf16 %v2703, %v2699
        %v2716 = vpack.c.bf16 %v2708, %v2704
        %v2717 = vpack.c.bf16 %v2709, %v2705
        %v2718 = vpack.c.bf16 %v2710, %v2706
        %v2719 = vpack.c.bf16 %v2711, %v2707
        %v2720 = vld [vmem:[%s6] sm:$0xf]
        %v2721 = vld [vmem:[%s6 + $0x4] sm:$0xf]
        %v2722 = vld [vmem:[%s6 + $0x8] sm:$0xf]
        %v2723 = vld [vmem:[%s6 + $0xc] sm:$0xf]
        %v2724 = vld [vmem:[%s6 + $0x10] sm:$0xf]
        %v2725 = vld [vmem:[%s6 + $0x14] sm:$0xf]
        %v2726 = vld [vmem:[%s6 + $0x18] sm:$0xf]
        %v2727 = vld [vmem:[%s6 + $0x1c] sm:$0xf]
        %v2728 = vld [vmem:[%s6 + $0x20] sm:$0xf]
        %v2729 = vld [vmem:[%s6 + $0x24] sm:$0xf]
        %v2730 = vld [vmem:[%s6 + $0x28] sm:$0xf]
        %v2731 = vld [vmem:[%s6 + $0x2c] sm:$0xf]
        %v2732 = vld [vmem:[%s6 + $0x30] sm:$0xf]
        %v2733 = vld [vmem:[%s6 + $0x34] sm:$0xf]
        %v2734 = vld [vmem:[%s6 + $0x38] sm:$0xf]
        %v2735 = vld [vmem:[%s6 + $0x3c] sm:$0xf]
        %v2736 = vld [vmem:[%s6 + $0x40] sm:$0xf]
        %v2737 = vld [vmem:[%s6 + $0x44] sm:$0xf]
        %v2738 = vld [vmem:[%s6 + $0x48] sm:$0xf]
        %v2739 = vld [vmem:[%s6 + $0x4c] sm:$0xf]
        %v2740 = vld [vmem:[%s6 + $0x50] sm:$0xf]
        %v2741 = vld [vmem:[%s6 + $0x54] sm:$0xf]
        %v2742 = vld [vmem:[%s6 + $0x58] sm:$0xf]
        %v2743 = vld [vmem:[%s6 + $0x5c] sm:$0xf]
        %v2744 = vld [vmem:[%s6 + $0x60] sm:$0xf]
        %v2745 = vld [vmem:[%s6 + $0x64] sm:$0xf]
        %v2746 = vld [vmem:[%s6 + $0x68] sm:$0xf]
        %v2747 = vld [vmem:[%s6 + $0x6c] sm:$0xf]
        %v2748 = vld [vmem:[%s6 + $0x70] sm:$0xf]
        %v2749 = vld [vmem:[%s6 + $0x74] sm:$0xf]
        %v2750 = vld [vmem:[%s6 + $0x78] sm:$0xf]
        %v2751 = vld [vmem:[%s6 + $0x7c] sm:$0xf]
        %v2752 = vld [vmem:[%s6 + $0x80] sm:$0xf]
        %v2753 = vld [vmem:[%s6 + $0x84] sm:$0xf]
        %v2754 = vld [vmem:[%s6 + $0x88] sm:$0xf]
        %v2755 = vld [vmem:[%s6 + $0x8c] sm:$0xf]
        %v2756 = vld [vmem:[%s6 + $0x90] sm:$0xf]
        %v2757 = vld [vmem:[%s6 + $0x94] sm:$0xf]
        %v2758 = vld [vmem:[%s6 + $0x98] sm:$0xf]
        %v2759 = vld [vmem:[%s6 + $0x9c] sm:$0xf]
        %v2760 = vld [vmem:[%s6 + $0xa0] sm:$0xf]
        %v2761 = vld [vmem:[%s6 + $0xa4] sm:$0xf]
        %v2762 = vld [vmem:[%s6 + $0xa8] sm:$0xf]
        %v2763 = vld [vmem:[%s6 + $0xac] sm:$0xf]
        %v2764 = vld [vmem:[%s6 + $0xb0] sm:$0xf]
        %v2765 = vld [vmem:[%s6 + $0xb4] sm:$0xf]
        %v2766 = vld [vmem:[%s6 + $0xb8] sm:$0xf]
        %v2767 = vld [vmem:[%s6 + $0xbc] sm:$0xf]
        %v2768 = vld [vmem:[%s6 + $0xc0] sm:$0xf]
        %v2769 = vld [vmem:[%s6 + $0xc4] sm:$0xf]
        %v2770 = vld [vmem:[%s6 + $0xc8] sm:$0xf]
        %v2771 = vld [vmem:[%s6 + $0xcc] sm:$0xf]
        %v2772 = vld [vmem:[%s6 + $0xd0] sm:$0xf]
        %v2773 = vld [vmem:[%s6 + $0xd4] sm:$0xf]
        %v2774 = vld [vmem:[%s6 + $0xd8] sm:$0xf]
        %v2775 = vld [vmem:[%s6 + $0xdc] sm:$0xf]
        %v2776 = vld [vmem:[%s6 + $0xe0] sm:$0xf]
        %v2777 = vld [vmem:[%s6 + $0xe4] sm:$0xf]
        %v2778 = vld [vmem:[%s6 + $0xe8] sm:$0xf]
        %v2779 = vld [vmem:[%s6 + $0xec] sm:$0xf]
        %v2780 = vld [vmem:[%s6 + $0xf0] sm:$0xf]
        %v2781 = vld [vmem:[%s6 + $0xf4] sm:$0xf]
        %v2782 = vld [vmem:[%s6 + $0xf8] sm:$0xf]
        %v2783 = vld [vmem:[%s6 + $0xfc] sm:$0xf]
        %v2784 = vld [vmem:[%s7] sm:$0x1]
        %v2786 = vperm.slane %v2784, 0
        %v2852 = vunpack.c.l.b16 %v2720
        %v2853 = vunpack.c.l.b16 %v2721
        %v2854 = vunpack.c.l.b16 %v2722
        %v2855 = vunpack.c.l.b16 %v2723
        %v2856 = vunpack.c.l.b16 %v2724
        %v2857 = vunpack.c.l.b16 %v2725
        %v2858 = vunpack.c.l.b16 %v2726
        %v2859 = vunpack.c.l.b16 %v2727
        %v2860 = vunpack.c.l.b16 %v2728
        %v2861 = vunpack.c.l.b16 %v2729
        %v2862 = vunpack.c.l.b16 %v2730
        %v2863 = vunpack.c.l.b16 %v2731
        %v2864 = vunpack.c.l.b16 %v2732
        %v2865 = vunpack.c.l.b16 %v2733
        %v2866 = vunpack.c.l.b16 %v2734
        %v2867 = vunpack.c.l.b16 %v2735
        %v2868 = vunpack.c.l.b16 %v2736
        %v2869 = vunpack.c.l.b16 %v2737
        %v2870 = vunpack.c.l.b16 %v2738
        %v2871 = vunpack.c.l.b16 %v2739
        %v2872 = vunpack.c.l.b16 %v2740
        %v2873 = vunpack.c.l.b16 %v2741
        %v2874 = vunpack.c.l.b16 %v2742
        %v2875 = vunpack.c.l.b16 %v2743
        %v2876 = vunpack.c.l.b16 %v2744
        %v2877 = vunpack.c.l.b16 %v2745
        %v2878 = vunpack.c.l.b16 %v2746
        %v2879 = vunpack.c.l.b16 %v2747
        %v2880 = vunpack.c.l.b16 %v2748
        %v2881 = vunpack.c.l.b16 %v2749
        %v2882 = vunpack.c.l.b16 %v2750
        %v2883 = vunpack.c.l.b16 %v2751
        %v2884 = vunpack.c.l.b16 %v2752
        %v2885 = vunpack.c.l.b16 %v2753
        %v2886 = vunpack.c.l.b16 %v2754
        %v2887 = vunpack.c.l.b16 %v2755
        %v2888 = vunpack.c.l.b16 %v2756
        %v2889 = vunpack.c.l.b16 %v2757
        %v2890 = vunpack.c.l.b16 %v2758
        %v2891 = vunpack.c.l.b16 %v2759
        %v2892 = vunpack.c.l.b16 %v2760
        %v2893 = vunpack.c.l.b16 %v2761
        %v2894 = vunpack.c.l.b16 %v2762
        %v2895 = vunpack.c.l.b16 %v2763
        %v2896 = vunpack.c.l.b16 %v2764
        %v2897 = vunpack.c.l.b16 %v2765
        %v2898 = vunpack.c.l.b16 %v2766
        %v2899 = vunpack.c.l.b16 %v2767
        %v2900 = vunpack.c.l.b16 %v2768
        %v2901 = vunpack.c.l.b16 %v2769
        %v2902 = vunpack.c.l.b16 %v2770
        %v2903 = vunpack.c.l.b16 %v2771
        %v2904 = vunpack.c.l.b16 %v2772
        %v2905 = vunpack.c.l.b16 %v2773
        %v2906 = vunpack.c.l.b16 %v2774
        %v2907 = vunpack.c.l.b16 %v2775
        %v2908 = vunpack.c.l.b16 %v2776
        %v2909 = vunpack.c.l.b16 %v2777
        %v2910 = vunpack.c.l.b16 %v2778
        %v2911 = vunpack.c.l.b16 %v2779
        %v2912 = vunpack.c.l.b16 %v2780
        %v2913 = vunpack.c.l.b16 %v2781
        %v2914 = vunpack.c.l.b16 %v2782
        %v2915 = vunpack.c.l.b16 %v2783
        %v2916 = vpack.c.b16 %v2853, %v2852
        %v2917 = vpack.c.b16 %v2855, %v2854
        %v2918 = vpack.c.b16 %v2857, %v2856
        %v2919 = vpack.c.b16 %v2859, %v2858
        %v2920 = vpack.c.b16 %v2861, %v2860
        %v2921 = vpack.c.b16 %v2863, %v2862
        %v2922 = vpack.c.b16 %v2865, %v2864
        %v2923 = vpack.c.b16 %v2867, %v2866
        %v2924 = vpack.c.b16 %v2869, %v2868
        %v2925 = vpack.c.b16 %v2871, %v2870
        %v2926 = vpack.c.b16 %v2873, %v2872
        %v2927 = vpack.c.b16 %v2875, %v2874
        %v2928 = vpack.c.b16 %v2877, %v2876
        %v2929 = vpack.c.b16 %v2879, %v2878
        %v2930 = vpack.c.b16 %v2881, %v2880
        %v2931 = vpack.c.b16 %v2883, %v2882
        %v2932 = vpack.c.b16 %v2885, %v2884
        %v2933 = vpack.c.b16 %v2887, %v2886
        %v2934 = vpack.c.b16 %v2889, %v2888
        %v2935 = vpack.c.b16 %v2891, %v2890
        %v2936 = vpack.c.b16 %v2893, %v2892
        %v2937 = vpack.c.b16 %v2895, %v2894
        %v2938 = vpack.c.b16 %v2897, %v2896
        %v2939 = vpack.c.b16 %v2899, %v2898
        %v2940 = vpack.c.b16 %v2901, %v2900
        %v2941 = vpack.c.b16 %v2903, %v2902
        %v2942 = vpack.c.b16 %v2905, %v2904
        %v2943 = vpack.c.b16 %v2907, %v2906
        %v2944 = vpack.c.b16 %v2909, %v2908
        %v2945 = vpack.c.b16 %v2911, %v2910
        %v2946 = vpack.c.b16 %v2913, %v2912
        %v2947 = vpack.c.b16 %v2915, %v2914
        %2980 = vmatpush.bf16.msra.mxu0 %v2923
        %2981 = vmatpush.bf16.msra.mxu0 %v2922
        %2982 = vmatpush.bf16.msra.mxu0 %v2921
        %2983 = vmatpush.bf16.msra.mxu0 %v2920
        %2984 = vmatpush.bf16.msra.mxu0 %v2919
        %2985 = vmatpush.bf16.msra.mxu0 %v2918
        %2986 = vmatpush.bf16.msra.mxu0 %v2917
        %2987 = vmatpush.bf16.msra.mxu0 %v2916
        %2988 = vmatmul.bf16.gmra.mxu0 %v2712
        %v2989 = vpop.f32.mrf.mxu0
        %v2990 = vadd.f32 %v2786, %v2989
        %v2991 = vpop.f32.mrf.mxu0
        %v2992 = vadd.f32 %v2786, %v2991
        %2993 = vmatmul.bf16.gmra.mxu0 %v2716
        %v2994 = vpop.f32.mrf.mxu0
        %v2995 = vadd.f32 %v2786, %v2994
        %v2996 = vpop.f32.mrf.mxu0
        %v2997 = vadd.f32 %v2786, %v2996
        %2998 = vdwg.mxu0
        %2999 = vmatpush.bf16.msra.mxu0 %v2931
        %3000 = vmatpush.bf16.msra.mxu0 %v2930
        %3001 = vmatpush.bf16.msra.mxu0 %v2929
        %3002 = vmatpush.bf16.msra.mxu0 %v2928
        %3003 = vmatpush.bf16.msra.mxu0 %v2927
        %3004 = vmatpush.bf16.msra.mxu0 %v2926
        %3005 = vmatpush.bf16.msra.mxu0 %v2925
        %3006 = vmatpush.bf16.msra.mxu0 %v2924
        %3007 = vmatmul.bf16.gmra.mxu0 %v2713
        %v3008 = vpop.f32.mrf.mxu0
        %v3009 = vadd.f32 %v2990, %v3008
        %v3010 = vpop.f32.mrf.mxu0
        %v3011 = vadd.f32 %v2992, %v3010
        %3012 = vmatmul.bf16.gmra.mxu0 %v2717
        %v3013 = vpop.f32.mrf.mxu0
        %v3014 = vadd.f32 %v2995, %v3013
        %v3015 = vpop.f32.mrf.mxu0
        %v3016 = vadd.f32 %v2997, %v3015
        %3017 = vdwg.mxu0
        %3018 = vmatpush.bf16.msra.mxu0 %v2939
        %3019 = vmatpush.bf16.msra.mxu0 %v2938
        %3020 = vmatpush.bf16.msra.mxu0 %v2937
        %3021 = vmatpush.bf16.msra.mxu0 %v2936
        %3022 = vmatpush.bf16.msra.mxu0 %v2935
        %3023 = vmatpush.bf16.msra.mxu0 %v2934
        %3024 = vmatpush.bf16.msra.mxu0 %v2933
        %3025 = vmatpush.bf16.msra.mxu0 %v2932
        %3026 = vmatmul.bf16.gmra.mxu0 %v2714
        %v3027 = vpop.f32.mrf.mxu0
        %v3028 = vadd.f32 %v3009, %v3027
        %v3029 = vpop.f32.mrf.mxu0
        %v3030 = vadd.f32 %v3011, %v3029
        %3031 = vmatmul.bf16.gmra.mxu0 %v2718
        %v3032 = vpop.f32.mrf.mxu0
        %v3033 = vadd.f32 %v3014, %v3032
        %v3034 = vpop.f32.mrf.mxu0
        %v3035 = vadd.f32 %v3016, %v3034
        %3036 = vdwg.mxu0
        %3037 = vmatpush.bf16.msra.mxu0 %v2947
        %3038 = vmatpush.bf16.msra.mxu0 %v2946
        %3039 = vmatpush.bf16.msra.mxu0 %v2945
        %3040 = vmatpush.bf16.msra.mxu0 %v2944
        %3041 = vmatpush.bf16.msra.mxu0 %v2943
        %3042 = vmatpush.bf16.msra.mxu0 %v2942
        %3043 = vmatpush.bf16.msra.mxu0 %v2941
        %3044 = vmatpush.bf16.msra.mxu0 %v2940
        %3045 = vmatmul.bf16.gmra.mxu0 %v2715
        %v3046 = vpop.f32.mrf.mxu0
        %v3047 = vadd.f32 %v3028, %v3046
        %v3048 = vpop.f32.mrf.mxu0
        %v3049 = vadd.f32 %v3030, %v3048
        %3050 = vmatmul.bf16.gmra.mxu0 %v2719
        %v3051 = vpop.f32.mrf.mxu0
        %v3052 = vadd.f32 %v3033, %v3051
        %v3053 = vpop.f32.mrf.mxu0
        %v3054 = vadd.f32 %v3035, %v3053
        %3055 = vdwg.mxu0
        %v3056 = vmul.f32 %v3047, %v3047
        %v3057 = vmul.f32 %v3049, %v3049
        %v3058 = vmul.f32 %v3052, %v3052
        %v3059 = vmul.f32 %v3054, %v3054
        %3060 = vadd.xlane.f32.xlu0 %v3056
        %v3061 = vpop.xlane.xlu0 %3060
        %3062 = vadd.xlane.f32.xlu0 %v3057
        %v3063 = vpop.xlane.xlu0 %3062
        %3064 = vadd.xlane.f32.xlu0 %v3058
        %v3065 = vpop.xlane.xlu0 %3064
        %3066 = vadd.xlane.f32.xlu0 %v3059
        %v3067 = vpop.xlane.xlu0 %3066
        %v3068 = vmax.f32 %v3061, 1e-24
        %v3069 = vmax.f32 %v3063, 1e-24
        %v3070 = vmax.f32 %v3065, 1e-24
        %v3071 = vmax.f32 %v3067, 1e-24
        %v3072 = vrsqrt.pop %v3068
        %v3073 = vmul.f32 %v3072, %v3068
        %v3074 = vmul.f32 %v3073, %v3072
        %v3075 = vmul.f32 0.5, %v3074
        %v3076 = vsub.f32 1.5, %v3075
        %v3077 = vmul.f32 %v3072, %v3076
        %vm3078 = vweird.f32 %v3068
        %vm3079 = vweird.f32 %v3072
        %vm3080 = vmor %vm3078, %vm3079
        %v3081 = vsel %vm3080, %v3072, %v3077
        %v3082 = vrsqrt.pop %v3069
        %v3083 = vmul.f32 %v3082, %v3069
        %v3084 = vmul.f32 %v3083, %v3082
        %v3085 = vmul.f32 0.5, %v3084
        %v3086 = vsub.f32 1.5, %v3085
        %v3087 = vmul.f32 %v3082, %v3086
        %vm3088 = vweird.f32 %v3069
        %vm3089 = vweird.f32 %v3082
        %vm3090 = vmor %vm3088, %vm3089
        %v3091 = vsel %vm3090, %v3082, %v3087
        %v3092 = vrsqrt.pop %v3070
        %v3093 = vmul.f32 %v3092, %v3070
        %v3094 = vmul.f32 %v3093, %v3092
        %v3095 = vmul.f32 0.5, %v3094
        %v3096 = vsub.f32 1.5, %v3095
        %v3097 = vmul.f32 %v3092, %v3096
        %vm3098 = vweird.f32 %v3070
        %vm3099 = vweird.f32 %v3092
        %vm3100 = vmor %vm3098, %vm3099
        %v3101 = vsel %vm3100, %v3092, %v3097
        %v3102 = vrsqrt.pop %v3071
        %v3103 = vmul.f32 %v3102, %v3071
        %v3104 = vmul.f32 %v3103, %v3102
        %v3105 = vmul.f32 0.5, %v3104
        %v3106 = vsub.f32 1.5, %v3105
        %v3107 = vmul.f32 %v3102, %v3106
        %vm3108 = vweird.f32 %v3071
        %vm3109 = vweird.f32 %v3102
        %vm3110 = vmor %vm3108, %vm3109
        %v3111 = vsel %vm3110, %v3102, %v3107
        %v3112 = vmul.f32 %v3047, %v3081
        %v3113 = vmul.f32 %v3049, %v3091
        %v3114 = vmul.f32 %v3052, %v3101
        %v3115 = vmul.f32 %v3054, %v3111
        %3116 = vst [vmem:[%s692] sm:$0xff] %v3112
        %3117 = vst [vmem:[%s692 + $0x8] sm:$0xff] %v3113
        %3118 = vst [vmem:[%s692 + $0x10] sm:$0xff] %v3114
        %3119 = vst [vmem:[%s692 + $0x18] sm:$0xff] %v3115
        %s3120 = smul.u32 32, %s27
        %p3121 = scmp.lt.s32.totalorder %s3120, 63
        %s3122 = scalar_select %p3121, %s3120, 63
        %s3123 = scalar_lea.vmem %s8, %s3122
        %s3124 = smul.u32 4, %s27
        %p3125 = scmp.lt.s32.totalorder %s3124, 7
        %s3126 = scalar_select %p3125, %s3124, 7
        %s3127 = smul.addr %s3126, 8
        %s3128 = scalar_lea.vmem %s9, %s3127
        %s3129 = sand.u32 %s265, 1
        %s3130 = scalar_lea.sflag [#allocation5], %s3129
        %s3131 = sand.u32 %s265, 1
        %s3132 = smul.addr %s3131, 32
        %s3133 = scalar_lea.vmem [#allocation7], %s3132
        // Predicated region
        $region95: #{forward.1} parent=85 // pred_check
          %p3134 = pneg %p223
        $region96: #{forward.1} parent=85 // pred_check_branch
          %3136 = sbr.rel (%p3134) target = $region98
        $region97: #{forward.1} parent=85 // pred_region
          %s3137 = smul.u32 32, %s27
        $region98: #{forward.1} parent=85 // pred_fallthru
          _
        // Predicated region
        $region99: #{forward.1} parent=85 // pred_check
          %p3138 = pneg %p249
        $region100: #{forward.1} parent=85 // pred_check_branch
          %3140 = sbr.rel (%p3138) target = $region102
        $region101: #{forward.1} parent=85 // pred_region
          %s3141 = smul.u32 4, %s27
        $region102: #{forward.1} parent=85 // pred_fallthru
          _
        // Predicated region
        $region103: #{forward.1} parent=85 // pred_check
          %p3142 = pneg %p275
        $region104: #{forward.1} parent=85 // pred_check_branch
          %3144 = sbr.rel (%p3142) target = $region106
        $region105: #{forward.1} parent=85 // pred_region
          %s3145 = smul.u32 4, %s27
          %3147 = vsyncadd %s3130, 0
          %s3148 = smul.addr %s3145, 8
          %s3149 = scalar_lea.hbm %s10, %s3148
          %s3150 = sshll.u32 %s3133, 4
          %s3151 = int_to_ptr.vmem [resolvable:$true] %s3150
          %s3152 = sshll.u32 %s3149, 4
          %s3153 = int_to_ptr.hbm [resolvable:$true] %s3152
          %3158 = dma.vmem_to_hbm [thread:$0]  %s3151, 512, %s3153, %s3130, 128, 128, 8
        $region106: #{forward.1} parent=85 // pred_fallthru
          _
      $region86: #{forward.1} parent=5 // pred_fallthru
        _
      %p3159 = scmp.le.s32.totalorder 2, %s22
      // Predicated region
      $region107: #{forward.1} parent=5 // pred_check
        %p3160 = pneg %p3159
      $region108: #{forward.1} parent=5 // pred_check_branch
        %3162 = sbr.rel (%p3160) target = $region110
      $region109: #{forward.1} parent=5 // pred_region
        %s3163 = ssub.s32 %s22, 2
        // Predicated region
        $region111: #{forward.1} parent=109 // pred_check
          %p3164 = pneg %p229
        $region112: #{forward.1} parent=109 // pred_check_branch
          %3166 = sbr.rel (%p3164) target = $region114
        $region113: #{forward.1} parent=109 // pred_region
          %s3167 = smul.u32 32, %s28
          %p3168 = scmp.lt.s32.totalorder %s3167, 63
          %s3169 = scalar_select %p3168, %s3167, 63
          %s3170 = scalar_lea.vmem %s8, %s3169
        $region114: #{forward.1} parent=109 // pred_fallthru
          _
        // Predicated region
        $region115: #{forward.1} parent=109 // pred_check
          %p3171 = pneg %p255
        $region116: #{forward.1} parent=109 // pred_check_branch
          %3173 = sbr.rel (%p3171) target = $region118
        $region117: #{forward.1} parent=109 // pred_region
          %s3174 = smul.u32 4, %s28
          %p3175 = scmp.lt.s32.totalorder %s3174, 7
          %s3176 = scalar_select %p3175, %s3174, 7
          %s3177 = smul.addr %s3176, 8
          %s3178 = scalar_lea.vmem %s9, %s3177
        $region118: #{forward.1} parent=109 // pred_fallthru
          _
        // Predicated region
        $region119: #{forward.1} parent=109 // pred_check
          %p3179 = pneg %p281
        $region120: #{forward.1} parent=109 // pred_check_branch
          %3181 = sbr.rel (%p3179) target = $region122
        $region121: #{forward.1} parent=109 // pred_region
          %s3182 = sand.u32 %s266, 1
          %s3183 = scalar_lea.sflag [#allocation5], %s3182
          %s3184 = sand.u32 %s266, 1
          %s3185 = smul.addr %s3184, 32
          %s3186 = scalar_lea.vmem [#allocation7], %s3185
          %3188 = dma.done %s3183, 512
        $region122: #{forward.1} parent=109 // pred_fallthru
          _
      $region110: #{forward.1} parent=5 // pred_fallthru
        _
    $region6: #{forward.1} parent=1 // loop_footer
      %s26 = sadd.s32 1, %s22
    $region7: #{forward.1} parent=1 // loop_footer_branch
      %21 = sbr.rel target = $region3
    $region8: #{forward.1} parent=1 // loop_exit
      _
    %3189 = vsyncpa [#allocation5], 1
    %s3190 = scalar_lea.sflag [#allocation5], 1
    %3191 = vsyncpa %s3190, 1
    %3192 = vsyncpa [#allocation6], 1
    %s3193 = scalar_lea.sflag [#allocation6], 1
    %3194 = vsyncpa %s3193, 1

</llo_original>
